<compile_context>
chip_gen: v7x
topology: tpu7x:2x2x1
jax: 0.10.0
libtpu: 0.0.40
codegen_flags: <defaults>
</compile_context>

<pallas_src>
import functools

import jax
import jax.numpy as jnp
from jax.experimental import pallas as pl
from jax.experimental.pallas import tpu as pltpu


def _vq_kernel(x_ref, emb_ref, e2h_ref, q_ref, counts_ref, sse_ref,
               *, use_bf16_xe):
    """One grid step processes a (TN, D) tile of the flattened input.

    Grid = (num_splits, tiles_per_split); axis 0 is megacore-parallel,
    axis 1 is the sequential accumulation axis.

    x_ref      : (TN, D)     input tile (native dtype)
    emb_ref    : (K, D)      full codebook, f32 (constant block)
    e2h_ref    : (1, K)      precomputed 0.5 * ||e_k||^2, f32 (constant block)
    q_ref      : (TN, D)     quantized output tile (input dtype)
    counts_ref : (1, 1, K)   per-split one-hot counts accumulator (resident)
    sse_ref    : (1, 1, 1)   per-split sum-of-squared-errors accumulator
    """
    step = pl.program_id(1)

    @pl.when(step == 0)
    def _():
        counts_ref[...] = jnp.zeros_like(counts_ref)
        sse_ref[...] = jnp.zeros_like(sse_ref)

    x = x_ref[...].astype(jnp.float32)        # (TN, D)
    emb = emb_ref[...]                        # (K, D)  f32
    e2h = e2h_ref[...]                        # (1, K)  f32 = 0.5*||e||^2

    tn = x.shape[0]
    k = emb.shape[0]

    # xe = x @ emb^T, contracted directly on the MXU (no emb transpose copy).
    if use_bf16_xe:
        # Large-D option: bf16 operands, f32 accumulation (higher MXU rate).
        xe = jax.lax.dot_general(
            x.astype(jnp.bfloat16), emb.astype(jnp.bfloat16),
            (((1,), (1,)), ((), ())), preferred_element_type=jnp.float32)
    else:
        xe = jax.lax.dot_general(
            x, emb, (((1,), (1,)), ((), ())),
            preferred_element_type=jnp.float32)       # (TN, K)

    # argmin_k ||x - e_k||^2 == argmin_k (0.5||e_k||^2 - x.e_k): the ||x||^2
    # term is row-constant and the -2 scale is folded into e2h (wrapper).
    dist = e2h - xe                                   # (TN, K)

    # first-minimal-index argmin (matches torch.argmin tie-breaking).
    min_d = jnp.min(dist, axis=1, keepdims=True)               # (TN, 1)
    iota_k = jax.lax.broadcasted_iota(jnp.int32, (tn, k), 1)   # (TN, K)
    cand = jnp.where(dist == min_d, iota_k, k)
    idx = jnp.min(cand, axis=1, keepdims=True)                 # (TN, 1)

    # one-hot encodings and codebook lookup on the MXU (kept f32 so quantized
    # rows are exact codebook entries).
    enc = (iota_k == idx).astype(jnp.float32)                           # (TN, K)
    quantized = jnp.dot(enc, emb, preferred_element_type=jnp.float32)   # (TN, D)
    q_ref[...] = quantized.astype(q_ref.dtype)

    # counts row via MXU (keeps the cross-sublane reduce off the XLU); revisit
    # only if a bundle dump shows the MXU as the binding slot.
    ones_row = jnp.ones((1, tn), dtype=jnp.float32)
    counts_ref[...] += jnp.dot(
        ones_row, enc, preferred_element_type=jnp.float32).reshape(1, 1, k)

    # ||x - e_idx||^2 = ||x||^2 + 2 * (0.5||e_idx||^2 - x.e_idx)
    #                 = ||x||^2 + 2 * min_d
    # -> no (TN, D) diff pass and no dependency on the enc@emb result.
    sse_ref[...] += (jnp.sum(x * x) + 2.0 * jnp.sum(min_d)).reshape(1, 1, 1)


def _vmem_bytes_estimate(tile_n, k, d, x_bytes):
    """Rough VMEM footprint of one grid step (lane-padded), in bytes."""
    f32 = 4
    k_pad = max(k, 128)
    d_pad = max(d, 128)
    io = 2 * 2 * tile_n * d_pad * x_bytes            # x + q tiles, double-buffered
    codebook = 2 * (k * d_pad + k_pad) * f32         # emb + e2h (double-buffered)
    interm = 6 * tile_n * k_pad * f32                # xe/dist/iota/cand/enc/...
    return io + codebook + interm


def _pick_tile_n(n, k, d, requested, budget_bytes, x_bytes):
    candidates = [t for t in (4096, 2048, 1024, 512, 256, 128, 64, 32, 16, 8)
                  if t <= requested]
    fitting = [t for t in candidates
               if _vmem_bytes_estimate(t, k, d, x_bytes) <= budget_bytes]
    if not fitting:
        fitting = [8]
    # Prefer a tile that divides N exactly (no padding needed).
    for t in fitting:
        if t <= n and n % t == 0:
            return t
    # Otherwise the largest tile that does not grossly over-pad tiny problems.
    for t in fitting:
        if t <= 2 * n:
            return t
    return fitting[-1]


def _vmem_budget_and_limit():
    """Generation-aware (budget for tile sizing, ceiling for vmem_limit)."""
    try:
        cap = int(pltpu.get_tpu_info().vmem_capacity_bytes)
    except Exception:  # unknown part / emulator: assume the smallest (v7x).
        cap = 64 * 1024 * 1024
    if cap >= 100 * 1024 * 1024:                     # v5e / v6e: 128 MiB
        return 88 * 1024 * 1024, 100 * 1024 * 1024
    return 40 * 1024 * 1024, 48 * 1024 * 1024        # v7x: 64 MiB


def _auto_num_splits():
    """Use the megacore-parallel split only where a second TensorCore exists."""
    try:
        kind = jax.devices()[0].device_kind.lower()
    except Exception:
        return 1
    single_tc = any(s in kind for s in
                    ("v5e", "v5 lite", "v5lite", "v6e", "v6 lite", "v6lite"))
    return 1 if single_tc else 2


@functools.partial(
    jax.jit, static_argnames=("commitment_cost", "tile_n", "xe_matmul_bf16"))
def vector_quantizer_forward(x, embedding, commitment_cost=0.25,
                             tile_n=4096, xe_matmul_bf16=None):
    """Pallas implementation of VectorQuantizer.forward (forward values only).

    x         : (..., D) activations, D == embedding_dim (any float dtype)
    embedding : (K, D) codebook
    returns   : (quantized (same shape/dtype as x), loss scalar, perplexity)
    """
    orig_shape = x.shape
    k, d = embedding.shape
    flat_x = x.reshape(-1, d)                 # keep native dtype (no f32 upcast)
    n = flat_x.shape[0]
    x_bytes = flat_x.dtype.itemsize

    use_bf16_xe = (d >= 256) if xe_matmul_bf16 is None else bool(xe_matmul_bf16)

    vmem_budget, vmem_ceiling = _vmem_budget_and_limit()
    tn = _pick_tile_n(n, k, d, tile_n, vmem_budget, x_bytes)

    # Zero-pad N up to a tile multiple; pad-row contributions are subtracted
    # exactly below (keeps the pipeline intact for non-divisible N).
    n_padded = ((n + tn - 1) // tn) * tn
    n_pad = n_padded - n
    if n_pad:
        flat_x = jnp.concatenate(
            [flat_x, jnp.zeros((n_pad, d), flat_x.dtype)], axis=0)

    n_tiles = n_padded // tn
    num_splits = _auto_num_splits()
    splits = num_splits if (n_tiles >= num_splits
                            and n_tiles % num_splits == 0) else 1
    tiles_per_split = n_tiles // splits

    # Hoisted codebook norms with the -2 scale folded in: dist = e2h - x.e
    emb_f32 = embedding.astype(jnp.float32)
    e2_half = 0.5 * jnp.sum(emb_f32 * emb_f32, axis=1).reshape(1, k)

    vmem_limit = int(min(max(2 * _vmem_bytes_estimate(tn, k, d, x_bytes),
                             32 * 1024 * 1024),
                         vmem_ceiling))

    kernel = functools.partial(_vq_kernel, use_bf16_xe=use_bf16_xe)

    quantized_flat, counts, sse = pl.pallas_call(
        kernel,
        out_shape=(
            jax.ShapeDtypeStruct((n_padded, d), flat_x.dtype),
            jax.ShapeDtypeStruct((splits, 1, k), jnp.float32),
            jax.ShapeDtypeStruct((splits, 1, 1), jnp.float32),
        ),
        grid_spec=pltpu.PrefetchScalarGridSpec(
            num_scalar_prefetch=0,
            grid=(splits, tiles_per_split),
            in_specs=[
                pl.BlockSpec((tn, d),
                             lambda c, i: (c * tiles_per_split + i, 0)),
                # Constant-index resident blocks (DMA'd once per split).
                pl.BlockSpec((k, d), lambda c, i: (0, 0)),    # full codebook
                pl.BlockSpec((1, k), lambda c, i: (0, 0)),    # 0.5*||e||^2
            ],
            out_specs=[
                pl.BlockSpec((tn, d),
                             lambda c, i: (c * tiles_per_split + i, 0)),
                pl.BlockSpec((1, 1, k), lambda c, i: (c, 0, 0)),  # counts
                pl.BlockSpec((1, 1, 1), lambda c, i: (c, 0, 0)),  # sse
            ],
        ),
        compiler_params=pltpu.CompilerParams(
            dimension_semantics=("parallel", "arbitrary"),
            vmem_limit_bytes=vmem_limit,
        ),
    )(flat_x, emb_f32, e2_half)

    counts_total = jnp.sum(counts.reshape(splits, k), axis=0)   # (K,)
    sse_total = jnp.sum(sse)

    if n_pad:
        # Padded rows are all-zero: each selects argmin(e2_half) and adds
        # exactly 2*min(e2_half) to sse and one count at that index.
        pad_idx = jnp.argmin(e2_half[0])
        counts_total = counts_total.at[pad_idx].add(-jnp.float32(n_pad))
        sse_total = sse_total - 2.0 * jnp.float32(n_pad) * jnp.min(e2_half)

    mse = sse_total / jnp.float32(n * d)
    # e_latent_loss and q_latent_loss have identical forward values
    # (detach only changes gradients): loss = (1 + commitment_cost) * mse
    loss = (1.0 + commitment_cost) * mse

    avg_probs = counts_total / jnp.float32(n)
    perplexity = jnp.exp(-jnp.sum(avg_probs * jnp.log(avg_probs + 1e-10)))

    # TODO(synk): straight-through estimator / detach gradient semantics are
    # not implemented; forward values match the PyTorch module exactly.
    quantized = quantized_flat[:n].reshape(orig_shape).astype(x.dtype)
    return quantized, loss, perplexity


if __name__ == "__main__":
    # small, deterministic setup
    num_embeddings = 16
    embedding_dim = 4
    commitment_cost = 0.25
    B, H, W = 2, 16, 16   # N = 2*16*16 = 512 flattened rows

    key = jax.random.PRNGKey(0)
    kx, ke = jax.random.split(key)

    # channels-last layout so reshape(-1, embedding_dim) is valid
    x = jax.random.normal(kx, (B, H, W, embedding_dim), dtype=jnp.float32)

    # deterministic init matching nn.Embedding.weight.uniform_(-1/K, 1/K)
    embedding = jax.random.uniform(
        ke, (num_embeddings, embedding_dim),
        minval=-1.0 / num_embeddings, maxval=1.0 / num_embeddings,
        dtype=jnp.float32)

    quantized, loss, perplexity = vector_quantizer_forward(
        x, embedding, commitment_cost=commitment_cost)
    jax.block_until_ready((quantized, loss, perplexity))

    # light sanity checks against a pure-JAX reference
    flat_x = x.reshape(-1, embedding_dim)
    dist = (jnp.sum(flat_x ** 2, 1, keepdims=True)
            + jnp.sum(embedding ** 2, 1)
            - 2.0 * flat_x @ embedding.T)
    idx = jnp.argmin(dist, axis=1)
    q_ref = embedding[idx].reshape(x.shape)
    enc_ref = jax.nn.one_hot(idx, num_embeddings, dtype=jnp.float32)
    avg_ref = jnp.mean(enc_ref, axis=0)
    ppl_ref = jnp.exp(-jnp.sum(avg_ref * jnp.log(avg_ref + 1e-10)))
    mse_ref = jnp.mean((q_ref - x) ** 2)

    assert jnp.allclose(quantized, q_ref, atol=1e-5)
    # loss tolerance is slightly relaxed: SSE is accumulated tile-by-tile from
    # ||x||^2 + 2*min_d, so reduction order differs from torch's MSE by a few ulps
    assert jnp.allclose(loss, (1.0 + commitment_cost) * mse_ref, rtol=1e-4)
    assert jnp.allclose(perplexity, ppl_ref, rtol=1e-5)

    print("KERNEL_OK")
</pallas_src>

<mosaic_0001>
module attributes {stable_mosaic.version = 11 : i64} {
  func.func @_vq_kernel(%arg0: i32, %arg1: i32, %arg2: memref<512x4xf32, #tpu.memory_space<vmem>>, %arg3: memref<16x4xf32, #tpu.memory_space<vmem>>, %arg4: memref<1x16xf32, #tpu.memory_space<vmem>>, %arg5: memref<512x4xf32, #tpu.memory_space<vmem>>, %arg6: memref<1x1x16xf32, #tpu.memory_space<vmem>>, %arg7: memref<1x1x1xf32, #tpu.memory_space<vmem>>) attributes {dimension_semantics = [#tpu.dimension_semantics<parallel>, #tpu.dimension_semantics<arbitrary>], iteration_bounds = array<i64: 1, 1>, scalar_prefetch = 0 : i64, scratch_operands = 0 : i64, tpu.core_type = #tpu.core_type<tc>, window_params = [{transform_indices = @transform_0, window_bounds = array<i64: 512, 4>}, {pipeline_mode = #tpu.pipeline_mode<synchronous>, transform_indices = @transform_1, window_bounds = array<i64: 16, 4>}, {pipeline_mode = #tpu.pipeline_mode<synchronous>, transform_indices = @transform_2, window_bounds = array<i64: 1, 16>}, {transform_indices = @transform_3, window_bounds = array<i64: 512, 4>}, {transform_indices = @transform_4, window_bounds = array<i64: 1, 1, 16>}, {transform_indices = @transform_5, window_bounds = array<i64: 1, 1, 1>}]} {
    %c0_i32 = arith.constant 0 : i32
    %0 = arith.cmpi eq, %arg1, %c0_i32 : i32
    %1 = arith.extui %0 : i1 to i32
    %c0_i32_0 = arith.constant 0 : i32
    %2 = arith.cmpi ne, %1, %c0_i32_0 : i32
    scf.if %2 {
      %cst_28 = arith.constant 0.000000e+00 : f32
      %45 = vector.broadcast %cst_28 : f32 to vector<1x1x16xf32>
      %c0_29 = arith.constant 0 : index
      %c0_30 = arith.constant 0 : index
      %c0_31 = arith.constant 0 : index
      %46 = vector.load %arg6[%c0_29, %c0_30, %c0_31] : memref<1x1x16xf32, #tpu.memory_space<vmem>>, vector<1x1x16xf32>
      tpu.vector_store %arg6[%c0_29, %c0_30, %c0_31], %45 {strides = array<i32>} : memref<1x1x16xf32, #tpu.memory_space<vmem>>, vector<1x1x16xf32>,
      %cst_32 = arith.constant 0.000000e+00 : f32
      %47 = vector.broadcast %cst_32 : f32 to vector<1x1x1xf32>
      %c0_33 = arith.constant 0 : index
      %c0_34 = arith.constant 0 : index
      %c0_35 = arith.constant 0 : index
      %48 = vector.load %arg7[%c0_33, %c0_34, %c0_35] : memref<1x1x1xf32, #tpu.memory_space<vmem>>, vector<1x1x1xf32>
      tpu.vector_store %arg7[%c0_33, %c0_34, %c0_35], %47 {strides = array<i32>} : memref<1x1x1xf32, #tpu.memory_space<vmem>>, vector<1x1x1xf32>,
    } else {
    }
    %c0 = arith.constant 0 : index
    %c0_1 = arith.constant 0 : index
    %3 = vector.load %arg2[%c0, %c0_1] : memref<512x4xf32, #tpu.memory_space<vmem>>, vector<512x4xf32>
    %c0_2 = arith.constant 0 : index
    %c0_3 = arith.constant 0 : index
    %4 = vector.load %arg3[%c0_2, %c0_3] : memref<16x4xf32, #tpu.memory_space<vmem>>, vector<16x4xf32>
    %c0_4 = arith.constant 0 : index
    %c0_5 = arith.constant 0 : index
    %5 = vector.load %arg4[%c0_4, %c0_5] : memref<1x16xf32, #tpu.memory_space<vmem>>, vector<1x16xf32>
    %cst = arith.constant dense<0.000000e+00> : vector<512x16xf32>
    %6 = tpu.matmul %3, %4, %cst {dimension_numbers = #tpu.dot_dimension_numbers<[1], [1], [0], [0], [0, 0, 1, 0], [], []>} : vector<512x4xf32>, vector<16x4xf32>, vector<512x16xf32> -> vector<512x16xf32>
    %7 = vector.broadcast %5 : vector<1x16xf32> to vector<512x16xf32>
    %8 = arith.subf %7, %6 : vector<512x16xf32>
    %cst_6 = arith.constant dense<0x7F800000> : vector<512xf32>
    %9 = vector.multi_reduction <minimumf>, %8, %cst_6 [1] : vector<512x16xf32> to vector<512xf32>
    %10 = vector.shape_cast %9 : vector<512xf32> to vector<512x1xf32>
    %11 = tpu.iota {dimensions = array<i32: 1>} : vector<512x16xi32>
    %12 = vector.broadcast %10 : vector<512x1xf32> to vector<512x16xf32>
    %13 = arith.cmpf oeq, %8, %12 : vector<512x16xf32>
    %c16_i32 = arith.constant 16 : i32
    %14 = vector.broadcast %c16_i32 : i32 to vector<512x16xi32>
    %15 = arith.select %13, %11, %14 : vector<512x16xi1>, vector<512x16xi32>
    %cst_7 = arith.constant dense<2147483647> : vector<512xi32>
    %16 = vector.multi_reduction <minsi>, %15, %cst_7 [1] : vector<512x16xi32> to vector<512xi32>
    %17 = vector.shape_cast %16 : vector<512xi32> to vector<512x1xi32>
    %18 = vector.broadcast %17 : vector<512x1xi32> to vector<512x16xi32>
    %19 = arith.cmpi eq, %11, %18 : vector<512x16xi32>
    %20 = arith.extui %19 : vector<512x16xi1> to vector<512x16xi32>
    %21 = arith.sitofp %20 : vector<512x16xi32> to vector<512x16xf32>
    %cst_8 = arith.constant dense<0.000000e+00> : vector<512x4xf32>
    %22 = tpu.matmul %21, %4, %cst_8 {dimension_numbers = #tpu.dot_dimension_numbers<[1], [0], [0], [1], [0, 0, 1, 1], [], []>} : vector<512x16xf32>, vector<16x4xf32>, vector<512x4xf32> -> vector<512x4xf32>
    %c0_9 = arith.constant 0 : index
    %c0_10 = arith.constant 0 : index
    %23 = vector.load %arg5[%c0_9, %c0_10] : memref<512x4xf32, #tpu.memory_space<vmem>>, vector<512x4xf32>
    tpu.vector_store %arg5[%c0_9, %c0_10], %22 {strides = array<i32>} : memref<512x4xf32, #tpu.memory_space<vmem>>, vector<512x4xf32>,
    %cst_11 = arith.constant 1.000000e+00 : f32
    %24 = vector.broadcast %cst_11 : f32 to vector<1x512xf32>
    %c0_12 = arith.constant 0 : index
    %c0_13 = arith.constant 0 : index
    %c0_14 = arith.constant 0 : index
    %25 = vector.load %arg6[%c0_12, %c0_13, %c0_14] : memref<1x1x16xf32, #tpu.memory_space<vmem>>, vector<1x1x16xf32>
    %cst_15 = arith.constant dense<0.000000e+00> : vector<1x16xf32>
    %26 = tpu.matmul %24, %21, %cst_15 {dimension_numbers = #tpu.dot_dimension_numbers<[1], [0], [0], [1], [0, 0, 1, 1], [], []>} : vector<1x512xf32>, vector<512x16xf32>, vector<1x16xf32> -> vector<1x16xf32>
    %27 = vector.shape_cast %26 : vector<1x16xf32> to vector<1x1x16xf32>
    %28 = arith.addf %25, %27 : vector<1x1x16xf32>
    %c0_16 = arith.constant 0 : index
    %c0_17 = arith.constant 0 : index
    %c0_18 = arith.constant 0 : index
    %29 = vector.load %arg6[%c0_16, %c0_17, %c0_18] : memref<1x1x16xf32, #tpu.memory_space<vmem>>, vector<1x1x16xf32>
    tpu.vector_store %arg6[%c0_16, %c0_17, %c0_18], %28 {strides = array<i32>} : memref<1x1x16xf32, #tpu.memory_space<vmem>>, vector<1x1x16xf32>,
    %c0_19 = arith.constant 0 : index
    %c0_20 = arith.constant 0 : index
    %c0_21 = arith.constant 0 : index
    %30 = vector.load %arg7[%c0_19, %c0_20, %c0_21] : memref<1x1x1xf32, #tpu.memory_space<vmem>>, vector<1x1x1xf32>
    %31 = arith.mulf %3, %3 : vector<512x4xf32>
    %32 = vector.shape_cast %31 : vector<512x4xf32> to vector<1x512x4xf32>
    %cst_22 = arith.constant dense<0.000000e+00> : vector<1xf32>
    %33 = vector.multi_reduction <add>, %32, %cst_22 [1, 2] : vector<1x512x4xf32> to vector<1xf32>
    %34 = vector.shape_cast %33 : vector<1xf32> to vector<1x1x1xf32>
    %35 = vector.extract %34[0, 0, 0] : f32 from vector<1x1x1xf32>
    %36 = vector.shape_cast %10 : vector<512x1xf32> to vector<1x512x1xf32>
    %cst_23 = arith.constant dense<0.000000e+00> : vector<1xf32>
    %37 = vector.multi_reduction <add>, %36, %cst_23 [1, 2] : vector<1x512x1xf32> to vector<1xf32>
    %38 = vector.shape_cast %37 : vector<1xf32> to vector<1x1x1xf32>
    %39 = vector.extract %38[0, 0, 0] : f32 from vector<1x1x1xf32>
    %cst_24 = arith.constant 2.000000e+00 : f32
    %40 = arith.mulf %cst_24, %39 : f32
    %41 = arith.addf %35, %40 : f32
    %42 = vector.broadcast %41 : f32 to vector<1x1x1xf32>
    %43 = arith.addf %30, %42 : vector<1x1x1xf32>
    %c0_25 = arith.constant 0 : index
    %c0_26 = arith.constant 0 : index
    %c0_27 = arith.constant 0 : index
    %44 = vector.load %arg7[%c0_25, %c0_26, %c0_27] : memref<1x1x1xf32, #tpu.memory_space<vmem>>, vector<1x1x1xf32>
    tpu.vector_store %arg7[%c0_25, %c0_26, %c0_27], %43 {strides = array<i32>} : memref<1x1x1xf32, #tpu.memory_space<vmem>>, vector<1x1x1xf32>,
    return
  }
  func.func @transform_0(%arg0: i32, %arg1: i32) -> (i32, i32) {
    %c1_i32 = arith.constant 1 : i32
    %0 = arith.muli %arg0, %c1_i32 : i32
    %1 = arith.addi %0, %arg1 : i32
    %c0_i32 = arith.constant 0 : i32
    %c0_i32_0 = arith.constant 0 : i32
    return %1, %c0_i32 : i32, i32
  }
  func.func @transform_1(%arg0: i32, %arg1: i32) -> (i32, i32) {
    %c0_i32 = arith.constant 0 : i32
    %c0_i32_0 = arith.constant 0 : i32
    %c0_i32_1 = arith.constant 0 : i32
    return %c0_i32, %c0_i32_0 : i32, i32
  }
  func.func @transform_2(%arg0: i32, %arg1: i32) -> (i32, i32) {
    %c0_i32 = arith.constant 0 : i32
    %c0_i32_0 = arith.constant 0 : i32
    %c0_i32_1 = arith.constant 0 : i32
    return %c0_i32, %c0_i32_0 : i32, i32
  }
  func.func @transform_3(%arg0: i32, %arg1: i32) -> (i32, i32) {
    %c1_i32 = arith.constant 1 : i32
    %0 = arith.muli %arg0, %c1_i32 : i32
    %1 = arith.addi %0, %arg1 : i32
    %c0_i32 = arith.constant 0 : i32
    %c0_i32_0 = arith.constant 0 : i32
    return %1, %c0_i32 : i32, i32
  }
  func.func @transform_4(%arg0: i32, %arg1: i32) -> (i32, i32, i32) {
    %c0_i32 = arith.constant 0 : i32
    %c0_i32_0 = arith.constant 0 : i32
    %c0_i32_1 = arith.constant 0 : i32
    return %arg0, %c0_i32, %c0_i32_0 : i32, i32, i32
  }
  func.func @transform_5(%arg0: i32, %arg1: i32) -> (i32, i32, i32) {
    %c0_i32 = arith.constant 0 : i32
    %c0_i32_0 = arith.constant 0 : i32
    %c0_i32_1 = arith.constant 0 : i32
    return %arg0, %c0_i32, %c0_i32_0 : i32, i32, i32
  }
}

</mosaic_0001>

<llo_original>
// kernel: vector_quantizer_forward.1
$region0: #{vector_quantizer_forward.1}
  #allocation0 [shape = 'u32[]', space=smem, size = 0x4, offset = 0x4, fixed_abs, tag = 'smem constant byte address 0x4 - core index']
  #allocation1 [shape = 'u32[144,128]{1,0:T(1,128)}', space=vmem, size = 0x12000, scoped, tag = 'internal scratch']
  %s0 = inlined_call_operand.vmem [shape: f32[512,4], index: 0, kind: input, shape index: {}]
  %s1 = inlined_call_operand.vmem [shape: f32[16,4], index: 1, kind: input, shape index: {}]
  %s2 = inlined_call_operand.vmem [shape: f32[1,16], index: 2, kind: input, shape index: {}]
  %s3 = inlined_call_operand.vmem [shape: f32[512,4], index: 3, kind: output, shape index: {0}]
  %s4 = inlined_call_operand.vmem [shape: f32[1,1,16], index: 4, kind: output, shape index: {1}]
  %s5 = inlined_call_operand.hbm [shape: f32[1,1,1], index: 5, kind: output, shape index: {2}]
  %6 = xla_tuple %s3, %s4, %s5
  %s7 = sld [smem:[#allocation0]]
  $region42: #{vector_quantizer_forward.1} parent=0
    _
  %s9 = ssub.s32 1, %s7
  %s10 = scalar_select 0, %s9, %s7
  $region1: #{vector_quantizer_forward.1} parent=0
    #allocation2 [shape = 'u8[512]{0}', space=vmem, size = 0x400, scoped, tag = 'output window, operand 2, single buffered']
    #allocation3 [shape = 's32[1]{0}', space=sflag, size = 0x4, scoped, tag = 'scoped memory for vector_quantizer_forward.1']
    %11 = vsyncpa [#allocation3], 0
    // Predicated region
    $region2: #{vector_quantizer_forward.1} parent=1 // pred_check
      _
    $region3: #{vector_quantizer_forward.1} parent=1 // pred_check_branch
      %13 = sbr.rel (0) target = $region5
    $region4: #{vector_quantizer_forward.1} parent=1 // pred_region
      %s14 = sadd.s32 0, 0
      %s15 = smul.u32 64, %s14
      %p16 = scmp.lt.s32.totalorder %s15, 63
      %s17 = scalar_select %p16, %s15, 63
      %s18 = smul.addr %s17, 8
      %s19 = scalar_lea.vmem %s0, %s18
      %s20 = sadd.s32 0, 0
      %s21 = smul.u32 64, %s20
    $region5: #{vector_quantizer_forward.1} parent=1 // pred_fallthru
      _
    // Predicated region
    $region6: #{vector_quantizer_forward.1} parent=1 // pred_check
      _
    $region7: #{vector_quantizer_forward.1} parent=1 // pred_check_branch
      %23 = sbr.rel (0) target = $region9
    $region8: #{vector_quantizer_forward.1} parent=1 // pred_region
      _
    $region9: #{vector_quantizer_forward.1} parent=1 // pred_fallthru
      _
    // Predicated region
    $region10: #{vector_quantizer_forward.1} parent=1 // pred_check
      _
    $region11: #{vector_quantizer_forward.1} parent=1 // pred_check_branch
      %25 = sbr.rel (0) target = $region13
    $region12: #{vector_quantizer_forward.1} parent=1 // pred_region
      _
    $region13: #{vector_quantizer_forward.1} parent=1 // pred_fallthru
      _
    %s26 = sadd.s32 0, 0
    %s27 = smul.u32 64, %s26
    %p28 = scmp.lt.s32.totalorder %s27, 63
    %s29 = scalar_select %p28, %s27, 63
    %s30 = smul.addr %s29, 8
    %s31 = scalar_lea.vmem %s0, %s30
    %s32 = sadd.s32 0, 0
    %s33 = smul.u32 64, %s32
    %p34 = scmp.lt.s32.totalorder %s33, 63
    %s35 = scalar_select %p34, %s33, 63
    %s36 = smul.addr %s35, 8
    %s37 = scalar_lea.vmem %s3, %s36
    %s38 = sadd.s32 0, 0
    %s39 = smul.u32 64, %s38
    %p40 = scmp.lt.s32.totalorder %s39, 63
    %s41 = scalar_select %p40, %s39, 63
    %s42 = smul.addr %s41, 8
    %s43 = scalar_lea.vmem %s0, %s42
    %s44 = sadd.s32 0, 0
    %s45 = smul.u32 64, %s44
    %s46 = sadd.s32 0, 0
    %s47 = smul.u32 64, %s46
    %p48 = scmp.lt.s32.totalorder %s47, 63
    %s49 = scalar_select %p48, %s47, 63
    %s50 = smul.addr %s49, 8
    %s51 = scalar_lea.vmem %s3, %s50
    %s52 = sadd.s32 0, 0
    %s53 = smul.u32 64, %s52
    %p54 = scmp.eq.s32.totalorder 0, 0
    // Predicated region
    $region14: #{vector_quantizer_forward.1} parent=1 // pred_check
      %p55 = pneg %p54
    $region15: #{vector_quantizer_forward.1} parent=1 // pred_check_branch
      %57 = sbr.rel (%p55) target = $region17
    $region16: #{vector_quantizer_forward.1} parent=1 // pred_region
      %vm58 = vcmask 122880
      %59 = vst.msk [vmem:[%s4] sm:$0x1] %vm58, 0.0
      %vm60 = vcmask 0
      %61 = vst.msk [vmem:[#allocation2] sm:$0x1] %vm60, 0.0
    $region17: #{vector_quantizer_forward.1} parent=1 // pred_fallthru
      _
    %v62 = vld [vmem:[%s43] sm:$0xff]
    %v63 = vld [vmem:[%s43 + $0x8] sm:$0xff]
    %v64 = vld [vmem:[%s43 + $0x10] sm:$0xff]
    %v65 = vld [vmem:[%s43 + $0x18] sm:$0xff]
    %v66 = vld [vmem:[%s43 + $0x20] sm:$0xff]
    %v67 = vld [vmem:[%s43 + $0x28] sm:$0xff]
    %v68 = vld [vmem:[%s43 + $0x30] sm:$0xff]
    %v69 = vld [vmem:[%s43 + $0x38] sm:$0xff]
    %v70 = vld [vmem:[%s43 + $0x40] sm:$0xff]
    %v71 = vld [vmem:[%s43 + $0x48] sm:$0xff]
    %v72 = vld [vmem:[%s43 + $0x50] sm:$0xff]
    %v73 = vld [vmem:[%s43 + $0x58] sm:$0xff]
    %v74 = vld [vmem:[%s43 + $0x60] sm:$0xff]
    %v75 = vld [vmem:[%s43 + $0x68] sm:$0xff]
    %v76 = vld [vmem:[%s43 + $0x70] sm:$0xff]
    %v77 = vld [vmem:[%s43 + $0x78] sm:$0xff]
    %v78 = vld [vmem:[%s43 + $0x80] sm:$0xff]
    %v79 = vld [vmem:[%s43 + $0x88] sm:$0xff]
    %v80 = vld [vmem:[%s43 + $0x90] sm:$0xff]
    %v81 = vld [vmem:[%s43 + $0x98] sm:$0xff]
    %v82 = vld [vmem:[%s43 + $0xa0] sm:$0xff]
    %v83 = vld [vmem:[%s43 + $0xa8] sm:$0xff]
    %v84 = vld [vmem:[%s43 + $0xb0] sm:$0xff]
    %v85 = vld [vmem:[%s43 + $0xb8] sm:$0xff]
    %v86 = vld [vmem:[%s43 + $0xc0] sm:$0xff]
    %v87 = vld [vmem:[%s43 + $0xc8] sm:$0xff]
    %v88 = vld [vmem:[%s43 + $0xd0] sm:$0xff]
    %v89 = vld [vmem:[%s43 + $0xd8] sm:$0xff]
    %v90 = vld [vmem:[%s43 + $0xe0] sm:$0xff]
    %v91 = vld [vmem:[%s43 + $0xe8] sm:$0xff]
    %v92 = vld [vmem:[%s43 + $0xf0] sm:$0xff]
    %v93 = vld [vmem:[%s43 + $0xf8] sm:$0xff]
    %v94 = vld [vmem:[%s43 + $0x100] sm:$0xff]
    %v95 = vld [vmem:[%s43 + $0x108] sm:$0xff]
    %v96 = vld [vmem:[%s43 + $0x110] sm:$0xff]
    %v97 = vld [vmem:[%s43 + $0x118] sm:$0xff]
    %v98 = vld [vmem:[%s43 + $0x120] sm:$0xff]
    %v99 = vld [vmem:[%s43 + $0x128] sm:$0xff]
    %v100 = vld [vmem:[%s43 + $0x130] sm:$0xff]
    %v101 = vld [vmem:[%s43 + $0x138] sm:$0xff]
    %v102 = vld [vmem:[%s43 + $0x140] sm:$0xff]
    %v103 = vld [vmem:[%s43 + $0x148] sm:$0xff]
    %v104 = vld [vmem:[%s43 + $0x150] sm:$0xff]
    %v105 = vld [vmem:[%s43 + $0x158] sm:$0xff]
    %v106 = vld [vmem:[%s43 + $0x160] sm:$0xff]
    %v107 = vld [vmem:[%s43 + $0x168] sm:$0xff]
    %v108 = vld [vmem:[%s43 + $0x170] sm:$0xff]
    %v109 = vld [vmem:[%s43 + $0x178] sm:$0xff]
    %v110 = vld [vmem:[%s43 + $0x180] sm:$0xff]
    %v111 = vld [vmem:[%s43 + $0x188] sm:$0xff]
    %v112 = vld [vmem:[%s43 + $0x190] sm:$0xff]
    %v113 = vld [vmem:[%s43 + $0x198] sm:$0xff]
    %v114 = vld [vmem:[%s43 + $0x1a0] sm:$0xff]
    %v115 = vld [vmem:[%s43 + $0x1a8] sm:$0xff]
    %v116 = vld [vmem:[%s43 + $0x1b0] sm:$0xff]
    %v117 = vld [vmem:[%s43 + $0x1b8] sm:$0xff]
    %v118 = vld [vmem:[%s43 + $0x1c0] sm:$0xff]
    %v119 = vld [vmem:[%s43 + $0x1c8] sm:$0xff]
    %v120 = vld [vmem:[%s43 + $0x1d0] sm:$0xff]
    %v121 = vld [vmem:[%s43 + $0x1d8] sm:$0xff]
    %v122 = vld [vmem:[%s43 + $0x1e0] sm:$0xff]
    %v123 = vld [vmem:[%s43 + $0x1e8] sm:$0xff]
    %v124 = vld [vmem:[%s43 + $0x1f0] sm:$0xff]
    %v125 = vld [vmem:[%s43 + $0x1f8] sm:$0xff]
    %v126 = vld [vmem:[%s1] sm:$0xff]
    %v127 = vld [vmem:[%s1 + $0x8] sm:$0xff]
    %v128 = vld [vmem:[%s2] sm:$0x1]
    %vm129 = vcmask 31744
    %v131 = vsel %vm129, %v62, 0
    %v134 = vsel %vm129, %v63, 0
    %v137 = vsel %vm129, %v64, 0
    %v140 = vsel %vm129, %v65, 0
    %v143 = vsel %vm129, %v66, 0
    %v146 = vsel %vm129, %v67, 0
    %v149 = vsel %vm129, %v68, 0
    %v152 = vsel %vm129, %v69, 0
    %v155 = vsel %vm129, %v70, 0
    %v158 = vsel %vm129, %v71, 0
    %v161 = vsel %vm129, %v72, 0
    %v164 = vsel %vm129, %v73, 0
    %v167 = vsel %vm129, %v74, 0
    %v170 = vsel %vm129, %v75, 0
    %v173 = vsel %vm129, %v76, 0
    %v176 = vsel %vm129, %v77, 0
    %v179 = vsel %vm129, %v78, 0
    %v182 = vsel %vm129, %v79, 0
    %v185 = vsel %vm129, %v80, 0
    %v188 = vsel %vm129, %v81, 0
    %v191 = vsel %vm129, %v82, 0
    %v194 = vsel %vm129, %v83, 0
    %v197 = vsel %vm129, %v84, 0
    %v200 = vsel %vm129, %v85, 0
    %v203 = vsel %vm129, %v86, 0
    %v206 = vsel %vm129, %v87, 0
    %v209 = vsel %vm129, %v88, 0
    %v212 = vsel %vm129, %v89, 0
    %v215 = vsel %vm129, %v90, 0
    %v218 = vsel %vm129, %v91, 0
    %v221 = vsel %vm129, %v92, 0
    %v224 = vsel %vm129, %v93, 0
    %v227 = vsel %vm129, %v94, 0
    %v230 = vsel %vm129, %v95, 0
    %v233 = vsel %vm129, %v96, 0
    %v236 = vsel %vm129, %v97, 0
    %v239 = vsel %vm129, %v98, 0
    %v242 = vsel %vm129, %v99, 0
    %v245 = vsel %vm129, %v100, 0
    %v248 = vsel %vm129, %v101, 0
    %v251 = vsel %vm129, %v102, 0
    %v254 = vsel %vm129, %v103, 0
    %v257 = vsel %vm129, %v104, 0
    %v260 = vsel %vm129, %v105, 0
    %v263 = vsel %vm129, %v106, 0
    %v266 = vsel %vm129, %v107, 0
    %v269 = vsel %vm129, %v108, 0
    %v272 = vsel %vm129, %v109, 0
    %v275 = vsel %vm129, %v110, 0
    %v278 = vsel %vm129, %v111, 0
    %v281 = vsel %vm129, %v112, 0
    %v284 = vsel %vm129, %v113, 0
    %v287 = vsel %vm129, %v114, 0
    %v290 = vsel %vm129, %v115, 0
    %v293 = vsel %vm129, %v116, 0
    %v296 = vsel %vm129, %v117, 0
    %v299 = vsel %vm129, %v118, 0
    %v302 = vsel %vm129, %v119, 0
    %v305 = vsel %vm129, %v120, 0
    %v308 = vsel %vm129, %v121, 0
    %v311 = vsel %vm129, %v122, 0
    %v314 = vsel %vm129, %v123, 0
    %v317 = vsel %vm129, %v124, 0
    %v320 = vsel %vm129, %v125, 0
    %v323 = vsel %vm129, %v126, 0
    %v326 = vsel %vm129, %v127, 0
    %328 = vmatprep.subr.mxu0 0.0
    %329 = vmatpush1.xpose.msra.mxu0 %v323
    %330 = vmatprep.subr.mxu0 0.0
    %331 = vmatpush1.xpose.msra.mxu0 %v326
    %332 = vmatprep.subr.mxu0 0.0
    %333 = vmatpush1.xpose.msra.mxu0 0.0
    %334 = vmatprep.subr.mxu0 0.0
    %335 = vmatpush1.xpose.msra.mxu0 0.0
    %336 = vmatprep.subr.mxu0 0.0
    %337 = vmatpush1.xpose.msra.mxu0 0.0
    %338 = vmatprep.subr.mxu0 0.0
    %339 = vmatpush1.xpose.msra.mxu0 0.0
    %340 = vmatprep.subr.mxu0 0.0
    %341 = vmatpush1.xpose.msra.mxu0 0.0
    %342 = vmatprep.subr.mxu0 0.0
    %343 = vmatpush1.xpose.msra.mxu0 0.0
    %344 = vmatprep.subr.mxu0 0.0
    %345 = vmatpush1.xpose.msra.mxu0 0.0
    %346 = vmatprep.subr.mxu0 0.0
    %347 = vmatpush1.xpose.msra.mxu0 0.0
    %348 = vmatprep.subr.mxu0 0.0
    %349 = vmatpush1.xpose.msra.mxu0 0.0
    %350 = vmatprep.subr.mxu0 0.0
    %351 = vmatpush1.xpose.msra.mxu0 0.0
    %352 = vmatprep.subr.mxu0 0.0
    %353 = vmatpush1.xpose.msra.mxu0 0.0
    %354 = vmatprep.subr.mxu0 0.0
    %355 = vmatpush1.xpose.msra.mxu0 0.0
    %356 = vmatprep.subr.mxu0 0.0
    %357 = vmatpush1.xpose.msra.mxu0 0.0
    %358 = vmatprep.subr.mxu0 0.0
    %359 = vmatpush1.xpose.msra.mxu0 0.0
    %360 = vmatprep.subr.mxu0 0.0
    %361 = vmatpush1.xpose.msra.mxu0 0.0
    %362 = vmatprep.subr.mxu0 0.0
    %363 = vmatpush1.xpose.msra.mxu0 0.0
    %364 = vmatprep.subr.mxu0 0.0
    %365 = vmatpush1.xpose.msra.mxu0 0.0
    %366 = vmatprep.subr.mxu0 0.0
    %367 = vmatpush1.xpose.msra.mxu0 0.0
    %368 = vmatprep.subr.mxu0 0.0
    %369 = vmatpush1.xpose.msra.mxu0 0.0
    %370 = vmatprep.subr.mxu0 0.0
    %371 = vmatpush1.xpose.msra.mxu0 0.0
    %372 = vmatprep.subr.mxu0 0.0
    %373 = vmatpush1.xpose.msra.mxu0 0.0
    %374 = vmatprep.subr.mxu0 0.0
    %375 = vmatpush1.xpose.msra.mxu0 0.0
    %376 = vmatprep.subr.mxu0 0.0
    %377 = vmatpush1.xpose.msra.mxu0 0.0
    %378 = vmatprep.subr.mxu0 0.0
    %379 = vmatpush1.xpose.msra.mxu0 0.0
    %380 = vmatprep.subr.mxu0 0.0
    %381 = vmatpush1.xpose.msra.mxu0 0.0
    %382 = vmatprep.subr.mxu0 0.0
    %383 = vmatpush1.xpose.msra.mxu0 0.0
    %384 = vmatprep.subr.mxu0 0.0
    %385 = vmatpush1.xpose.msra.mxu0 0.0
    %386 = vmatprep.subr.mxu0 0.0
    %387 = vmatpush1.xpose.msra.mxu0 0.0
    %388 = vmatprep.subr.mxu0 0.0
    %389 = vmatpush1.xpose.msra.mxu0 0.0
    %390 = vmatprep.subr.mxu0 0.0
    %391 = vmatpush1.xpose.msra.mxu0 0.0
    %392 = vmatprep.mubr.f32.mxu0 0.0
    %393 = vmatmul.mubr.f32.gmra.mrb[0].mxu0 %v131
    %v394 = vpop.f32.mrb[0].mxu0
    %v395 = vadd.f32 0.0, %v394
    %v396 = vpop.f32.mrb[0].mxu0
    %397 = vmatprep.mubr.f32.mxu0 0.0
    %398 = vmatmul.mubr.f32.gmra.mrb[0].mxu0 %v134
    %v399 = vpop.f32.mrb[0].mxu0
    %v400 = vadd.f32 0.0, %v399
    %v401 = vpop.f32.mrb[0].mxu0
    %402 = vmatprep.mubr.f32.mxu0 0.0
    %403 = vmatmul.mubr.f32.gmra.mrb[0].mxu0 %v137
    %v404 = vpop.f32.mrb[0].mxu0
    %v405 = vadd.f32 0.0, %v404
    %v406 = vpop.f32.mrb[0].mxu0
    %407 = vmatprep.mubr.f32.mxu0 0.0
    %408 = vmatmul.mubr.f32.gmra.mrb[0].mxu0 %v140
    %v409 = vpop.f32.mrb[0].mxu0
    %v410 = vadd.f32 0.0, %v409
    %v411 = vpop.f32.mrb[0].mxu0
    %412 = vmatprep.mubr.f32.mxu0 0.0
    %413 = vmatmul.mubr.f32.gmra.mrb[0].mxu0 %v143
    %v414 = vpop.f32.mrb[0].mxu0
    %v415 = vadd.f32 0.0, %v414
    %v416 = vpop.f32.mrb[0].mxu0
    %417 = vmatprep.mubr.f32.mxu0 0.0
    %418 = vmatmul.mubr.f32.gmra.mrb[0].mxu0 %v146
    %v419 = vpop.f32.mrb[0].mxu0
    %v420 = vadd.f32 0.0, %v419
    %v421 = vpop.f32.mrb[0].mxu0
    %422 = vmatprep.mubr.f32.mxu0 0.0
    %423 = vmatmul.mubr.f32.gmra.mrb[0].mxu0 %v149
    %v424 = vpop.f32.mrb[0].mxu0
    %v425 = vadd.f32 0.0, %v424
    %v426 = vpop.f32.mrb[0].mxu0
    %427 = vmatprep.mubr.f32.mxu0 0.0
    %428 = vmatmul.mubr.f32.gmra.mrb[0].mxu0 %v152
    %v429 = vpop.f32.mrb[0].mxu0
    %v430 = vadd.f32 0.0, %v429
    %v431 = vpop.f32.mrb[0].mxu0
    %432 = vmatprep.mubr.f32.mxu0 0.0
    %433 = vmatmul.mubr.f32.gmra.mrb[0].mxu0 %v155
    %v434 = vpop.f32.mrb[0].mxu0
    %v435 = vadd.f32 0.0, %v434
    %v436 = vpop.f32.mrb[0].mxu0
    %437 = vmatprep.mubr.f32.mxu0 0.0
    %438 = vmatmul.mubr.f32.gmra.mrb[0].mxu0 %v158
    %v439 = vpop.f32.mrb[0].mxu0
    %v440 = vadd.f32 0.0, %v439
    %v441 = vpop.f32.mrb[0].mxu0
    %442 = vmatprep.mubr.f32.mxu0 0.0
    %443 = vmatmul.mubr.f32.gmra.mrb[0].mxu0 %v161
    %v444 = vpop.f32.mrb[0].mxu0
    %v445 = vadd.f32 0.0, %v444
    %v446 = vpop.f32.mrb[0].mxu0
    %447 = vmatprep.mubr.f32.mxu0 0.0
    %448 = vmatmul.mubr.f32.gmra.mrb[0].mxu0 %v164
    %v449 = vpop.f32.mrb[0].mxu0
    %v450 = vadd.f32 0.0, %v449
    %v451 = vpop.f32.mrb[0].mxu0
    %452 = vmatprep.mubr.f32.mxu0 0.0
    %453 = vmatmul.mubr.f32.gmra.mrb[0].mxu0 %v167
    %v454 = vpop.f32.mrb[0].mxu0
    %v455 = vadd.f32 0.0, %v454
    %v456 = vpop.f32.mrb[0].mxu0
    %457 = vmatprep.mubr.f32.mxu0 0.0
    %458 = vmatmul.mubr.f32.gmra.mrb[0].mxu0 %v170
    %v459 = vpop.f32.mrb[0].mxu0
    %v460 = vadd.f32 0.0, %v459
    %v461 = vpop.f32.mrb[0].mxu0
    %462 = vmatprep.mubr.f32.mxu0 0.0
    %463 = vmatmul.mubr.f32.gmra.mrb[0].mxu0 %v173
    %v464 = vpop.f32.mrb[0].mxu0
    %v465 = vadd.f32 0.0, %v464
    %v466 = vpop.f32.mrb[0].mxu0
    %467 = vmatprep.mubr.f32.mxu0 0.0
    %468 = vmatmul.mubr.f32.gmra.mrb[0].mxu0 %v176
    %v469 = vpop.f32.mrb[0].mxu0
    %v470 = vadd.f32 0.0, %v469
    %v471 = vpop.f32.mrb[0].mxu0
    %472 = vmatprep.mubr.f32.mxu0 0.0
    %473 = vmatmul.mubr.f32.gmra.mrb[0].mxu0 %v179
    %v474 = vpop.f32.mrb[0].mxu0
    %v475 = vadd.f32 0.0, %v474
    %v476 = vpop.f32.mrb[0].mxu0
    %477 = vmatprep.mubr.f32.mxu0 0.0
    %478 = vmatmul.mubr.f32.gmra.mrb[0].mxu0 %v182
    %v479 = vpop.f32.mrb[0].mxu0
    %v480 = vadd.f32 0.0, %v479
    %v481 = vpop.f32.mrb[0].mxu0
    %482 = vmatprep.mubr.f32.mxu0 0.0
    %483 = vmatmul.mubr.f32.gmra.mrb[0].mxu0 %v185
    %v484 = vpop.f32.mrb[0].mxu0
    %v485 = vadd.f32 0.0, %v484
    %v486 = vpop.f32.mrb[0].mxu0
    %487 = vmatprep.mubr.f32.mxu0 0.0
    %488 = vmatmul.mubr.f32.gmra.mrb[0].mxu0 %v188
    %v489 = vpop.f32.mrb[0].mxu0
    %v490 = vadd.f32 0.0, %v489
    %v491 = vpop.f32.mrb[0].mxu0
    %492 = vmatprep.mubr.f32.mxu0 0.0
    %493 = vmatmul.mubr.f32.gmra.mrb[0].mxu0 %v191
    %v494 = vpop.f32.mrb[0].mxu0
    %v495 = vadd.f32 0.0, %v494
    %v496 = vpop.f32.mrb[0].mxu0
    %497 = vmatprep.mubr.f32.mxu0 0.0
    %498 = vmatmul.mubr.f32.gmra.mrb[0].mxu0 %v194
    %v499 = vpop.f32.mrb[0].mxu0
    %v500 = vadd.f32 0.0, %v499
    %v501 = vpop.f32.mrb[0].mxu0
    %502 = vmatprep.mubr.f32.mxu0 0.0
    %503 = vmatmul.mubr.f32.gmra.mrb[0].mxu0 %v197
    %v504 = vpop.f32.mrb[0].mxu0
    %v505 = vadd.f32 0.0, %v504
    %v506 = vpop.f32.mrb[0].mxu0
    %507 = vmatprep.mubr.f32.mxu0 0.0
    %508 = vmatmul.mubr.f32.gmra.mrb[0].mxu0 %v200
    %v509 = vpop.f32.mrb[0].mxu0
    %v510 = vadd.f32 0.0, %v509
    %v511 = vpop.f32.mrb[0].mxu0
    %512 = vmatprep.mubr.f32.mxu0 0.0
    %513 = vmatmul.mubr.f32.gmra.mrb[0].mxu0 %v203
    %v514 = vpop.f32.mrb[0].mxu0
    %v515 = vadd.f32 0.0, %v514
    %v516 = vpop.f32.mrb[0].mxu0
    %517 = vmatprep.mubr.f32.mxu0 0.0
    %518 = vmatmul.mubr.f32.gmra.mrb[0].mxu0 %v206
    %v519 = vpop.f32.mrb[0].mxu0
    %v520 = vadd.f32 0.0, %v519
    %v521 = vpop.f32.mrb[0].mxu0
    %522 = vmatprep.mubr.f32.mxu0 0.0
    %523 = vmatmul.mubr.f32.gmra.mrb[0].mxu0 %v209
    %v524 = vpop.f32.mrb[0].mxu0
    %v525 = vadd.f32 0.0, %v524
    %v526 = vpop.f32.mrb[0].mxu0
    %527 = vmatprep.mubr.f32.mxu0 0.0
    %528 = vmatmul.mubr.f32.gmra.mrb[0].mxu0 %v212
    %v529 = vpop.f32.mrb[0].mxu0
    %v530 = vadd.f32 0.0, %v529
    %v531 = vpop.f32.mrb[0].mxu0
    %532 = vmatprep.mubr.f32.mxu0 0.0
    %533 = vmatmul.mubr.f32.gmra.mrb[0].mxu0 %v215
    %v534 = vpop.f32.mrb[0].mxu0
    %v535 = vadd.f32 0.0, %v534
    %v536 = vpop.f32.mrb[0].mxu0
    %537 = vmatprep.mubr.f32.mxu0 0.0
    %538 = vmatmul.mubr.f32.gmra.mrb[0].mxu0 %v218
    %v539 = vpop.f32.mrb[0].mxu0
    %v540 = vadd.f32 0.0, %v539
    %v541 = vpop.f32.mrb[0].mxu0
    %542 = vmatprep.mubr.f32.mxu0 0.0
    %543 = vmatmul.mubr.f32.gmra.mrb[0].mxu0 %v221
    %v544 = vpop.f32.mrb[0].mxu0
    %v545 = vadd.f32 0.0, %v544
    %v546 = vpop.f32.mrb[0].mxu0
    %547 = vmatprep.mubr.f32.mxu0 0.0
    %548 = vmatmul.mubr.f32.gmra.mrb[0].mxu0 %v224
    %v549 = vpop.f32.mrb[0].mxu0
    %v550 = vadd.f32 0.0, %v549
    %v551 = vpop.f32.mrb[0].mxu0
    %552 = vmatprep.mubr.f32.mxu0 0.0
    %553 = vmatmul.mubr.f32.gmra.mrb[0].mxu0 %v227
    %v554 = vpop.f32.mrb[0].mxu0
    %v555 = vadd.f32 0.0, %v554
    %v556 = vpop.f32.mrb[0].mxu0
    %557 = vmatprep.mubr.f32.mxu0 0.0
    %558 = vmatmul.mubr.f32.gmra.mrb[0].mxu0 %v230
    %v559 = vpop.f32.mrb[0].mxu0
    %v560 = vadd.f32 0.0, %v559
    %v561 = vpop.f32.mrb[0].mxu0
    %562 = vmatprep.mubr.f32.mxu0 0.0
    %563 = vmatmul.mubr.f32.gmra.mrb[0].mxu0 %v233
    %v564 = vpop.f32.mrb[0].mxu0
    %v565 = vadd.f32 0.0, %v564
    %v566 = vpop.f32.mrb[0].mxu0
    %567 = vmatprep.mubr.f32.mxu0 0.0
    %568 = vmatmul.mubr.f32.gmra.mrb[0].mxu0 %v236
    %v569 = vpop.f32.mrb[0].mxu0
    %v570 = vadd.f32 0.0, %v569
    %v571 = vpop.f32.mrb[0].mxu0
    %572 = vmatprep.mubr.f32.mxu0 0.0
    %573 = vmatmul.mubr.f32.gmra.mrb[0].mxu0 %v239
    %v574 = vpop.f32.mrb[0].mxu0
    %v575 = vadd.f32 0.0, %v574
    %v576 = vpop.f32.mrb[0].mxu0
    %577 = vmatprep.mubr.f32.mxu0 0.0
    %578 = vmatmul.mubr.f32.gmra.mrb[0].mxu0 %v242
    %v579 = vpop.f32.mrb[0].mxu0
    %v580 = vadd.f32 0.0, %v579
    %v581 = vpop.f32.mrb[0].mxu0
    %582 = vmatprep.mubr.f32.mxu0 0.0
    %583 = vmatmul.mubr.f32.gmra.mrb[0].mxu0 %v245
    %v584 = vpop.f32.mrb[0].mxu0
    %v585 = vadd.f32 0.0, %v584
    %v586 = vpop.f32.mrb[0].mxu0
    %587 = vmatprep.mubr.f32.mxu0 0.0
    %588 = vmatmul.mubr.f32.gmra.mrb[0].mxu0 %v248
    %v589 = vpop.f32.mrb[0].mxu0
    %v590 = vadd.f32 0.0, %v589
    %v591 = vpop.f32.mrb[0].mxu0
    %592 = vmatprep.mubr.f32.mxu0 0.0
    %593 = vmatmul.mubr.f32.gmra.mrb[0].mxu0 %v251
    %v594 = vpop.f32.mrb[0].mxu0
    %v595 = vadd.f32 0.0, %v594
    %v596 = vpop.f32.mrb[0].mxu0
    %597 = vmatprep.mubr.f32.mxu0 0.0
    %598 = vmatmul.mubr.f32.gmra.mrb[0].mxu0 %v254
    %v599 = vpop.f32.mrb[0].mxu0
    %v600 = vadd.f32 0.0, %v599
    %v601 = vpop.f32.mrb[0].mxu0
    %602 = vmatprep.mubr.f32.mxu0 0.0
    %603 = vmatmul.mubr.f32.gmra.mrb[0].mxu0 %v257
    %v604 = vpop.f32.mrb[0].mxu0
    %v605 = vadd.f32 0.0, %v604
    %v606 = vpop.f32.mrb[0].mxu0
    %607 = vmatprep.mubr.f32.mxu0 0.0
    %608 = vmatmul.mubr.f32.gmra.mrb[0].mxu0 %v260
    %v609 = vpop.f32.mrb[0].mxu0
    %v610 = vadd.f32 0.0, %v609
    %v611 = vpop.f32.mrb[0].mxu0
    %612 = vmatprep.mubr.f32.mxu0 0.0
    %613 = vmatmul.mubr.f32.gmra.mrb[0].mxu0 %v263
    %v614 = vpop.f32.mrb[0].mxu0
    %v615 = vadd.f32 0.0, %v614
    %v616 = vpop.f32.mrb[0].mxu0
    %617 = vmatprep.mubr.f32.mxu0 0.0
    %618 = vmatmul.mubr.f32.gmra.mrb[0].mxu0 %v266
    %v619 = vpop.f32.mrb[0].mxu0
    %v620 = vadd.f32 0.0, %v619
    %v621 = vpop.f32.mrb[0].mxu0
    %622 = vmatprep.mubr.f32.mxu0 0.0
    %623 = vmatmul.mubr.f32.gmra.mrb[0].mxu0 %v269
    %v624 = vpop.f32.mrb[0].mxu0
    %v625 = vadd.f32 0.0, %v624
    %v626 = vpop.f32.mrb[0].mxu0
    %627 = vmatprep.mubr.f32.mxu0 0.0
    %628 = vmatmul.mubr.f32.gmra.mrb[0].mxu0 %v272
    %v629 = vpop.f32.mrb[0].mxu0
    %v630 = vadd.f32 0.0, %v629
    %v631 = vpop.f32.mrb[0].mxu0
    %632 = vmatprep.mubr.f32.mxu0 0.0
    %633 = vmatmul.mubr.f32.gmra.mrb[0].mxu0 %v275
    %v634 = vpop.f32.mrb[0].mxu0
    %v635 = vadd.f32 0.0, %v634
    %v636 = vpop.f32.mrb[0].mxu0
    %637 = vmatprep.mubr.f32.mxu0 0.0
    %638 = vmatmul.mubr.f32.gmra.mrb[0].mxu0 %v278
    %v639 = vpop.f32.mrb[0].mxu0
    %v640 = vadd.f32 0.0, %v639
    %v641 = vpop.f32.mrb[0].mxu0
    %642 = vmatprep.mubr.f32.mxu0 0.0
    %643 = vmatmul.mubr.f32.gmra.mrb[0].mxu0 %v281
    %v644 = vpop.f32.mrb[0].mxu0
    %v645 = vadd.f32 0.0, %v644
    %v646 = vpop.f32.mrb[0].mxu0
    %647 = vmatprep.mubr.f32.mxu0 0.0
    %648 = vmatmul.mubr.f32.gmra.mrb[0].mxu0 %v284
    %v649 = vpop.f32.mrb[0].mxu0
    %v650 = vadd.f32 0.0, %v649
    %v651 = vpop.f32.mrb[0].mxu0
    %652 = vmatprep.mubr.f32.mxu0 0.0
    %653 = vmatmul.mubr.f32.gmra.mrb[0].mxu0 %v287
    %v654 = vpop.f32.mrb[0].mxu0
    %v655 = vadd.f32 0.0, %v654
    %v656 = vpop.f32.mrb[0].mxu0
    %657 = vmatprep.mubr.f32.mxu0 0.0
    %658 = vmatmul.mubr.f32.gmra.mrb[0].mxu0 %v290
    %v659 = vpop.f32.mrb[0].mxu0
    %v660 = vadd.f32 0.0, %v659
    %v661 = vpop.f32.mrb[0].mxu0
    %662 = vmatprep.mubr.f32.mxu0 0.0
    %663 = vmatmul.mubr.f32.gmra.mrb[0].mxu0 %v293
    %v664 = vpop.f32.mrb[0].mxu0
    %v665 = vadd.f32 0.0, %v664
    %v666 = vpop.f32.mrb[0].mxu0
    %667 = vmatprep.mubr.f32.mxu0 0.0
    %668 = vmatmul.mubr.f32.gmra.mrb[0].mxu0 %v296
    %v669 = vpop.f32.mrb[0].mxu0
    %v670 = vadd.f32 0.0, %v669
    %v671 = vpop.f32.mrb[0].mxu0
    %672 = vmatprep.mubr.f32.mxu0 0.0
    %673 = vmatmul.mubr.f32.gmra.mrb[0].mxu0 %v299
    %v674 = vpop.f32.mrb[0].mxu0
    %v675 = vadd.f32 0.0, %v674
    %v676 = vpop.f32.mrb[0].mxu0
    %677 = vmatprep.mubr.f32.mxu0 0.0
    %678 = vmatmul.mubr.f32.gmra.mrb[0].mxu0 %v302
    %v679 = vpop.f32.mrb[0].mxu0
    %v680 = vadd.f32 0.0, %v679
    %v681 = vpop.f32.mrb[0].mxu0
    %682 = vmatprep.mubr.f32.mxu0 0.0
    %683 = vmatmul.mubr.f32.gmra.mrb[0].mxu0 %v305
    %v684 = vpop.f32.mrb[0].mxu0
    %v685 = vadd.f32 0.0, %v684
    %v686 = vpop.f32.mrb[0].mxu0
    %687 = vmatprep.mubr.f32.mxu0 0.0
    %688 = vmatmul.mubr.f32.gmra.mrb[0].mxu0 %v308
    %v689 = vpop.f32.mrb[0].mxu0
    %v690 = vadd.f32 0.0, %v689
    %v691 = vpop.f32.mrb[0].mxu0
    %692 = vmatprep.mubr.f32.mxu0 0.0
    %693 = vmatmul.mubr.f32.gmra.mrb[0].mxu0 %v311
    %v694 = vpop.f32.mrb[0].mxu0
    %v695 = vadd.f32 0.0, %v694
    %v696 = vpop.f32.mrb[0].mxu0
    %697 = vmatprep.mubr.f32.mxu0 0.0
    %698 = vmatmul.mubr.f32.gmra.mrb[0].mxu0 %v314
    %v699 = vpop.f32.mrb[0].mxu0
    %v700 = vadd.f32 0.0, %v699
    %v701 = vpop.f32.mrb[0].mxu0
    %702 = vmatprep.mubr.f32.mxu0 0.0
    %703 = vmatmul.mubr.f32.gmra.mrb[0].mxu0 %v317
    %v704 = vpop.f32.mrb[0].mxu0
    %v705 = vadd.f32 0.0, %v704
    %v706 = vpop.f32.mrb[0].mxu0
    %707 = vmatprep.mubr.f32.mxu0 0.0
    %708 = vmatmul.mubr.f32.gmra.mrb[0].mxu0 %v320
    %v709 = vpop.f32.mrb[0].mxu0
    %v710 = vadd.f32 0.0, %v709
    %v711 = vpop.f32.mrb[0].mxu0
    %712 = vdwg.mxu0
    %v714 = vlaneseq
    %v715 = vshrl.u32 %v714, 7
    %v716 = vsub.s32 0, %v715
    %v717 = vrot.slane %v128, %v716
    %v719 = vsub.f32 %v717, %v395
    %v720 = vsub.f32 %v717, %v400
    %v721 = vsub.f32 %v717, %v405
    %v722 = vsub.f32 %v717, %v410
    %v723 = vsub.f32 %v717, %v415
    %v724 = vsub.f32 %v717, %v420
    %v725 = vsub.f32 %v717, %v425
    %v726 = vsub.f32 %v717, %v430
    %v727 = vsub.f32 %v717, %v435
    %v728 = vsub.f32 %v717, %v440
    %v729 = vsub.f32 %v717, %v445
    %v730 = vsub.f32 %v717, %v450
    %v731 = vsub.f32 %v717, %v455
    %v732 = vsub.f32 %v717, %v460
    %v733 = vsub.f32 %v717, %v465
    %v734 = vsub.f32 %v717, %v470
    %v735 = vsub.f32 %v717, %v475
    %v736 = vsub.f32 %v717, %v480
    %v737 = vsub.f32 %v717, %v485
    %v738 = vsub.f32 %v717, %v490
    %v739 = vsub.f32 %v717, %v495
    %v740 = vsub.f32 %v717, %v500
    %v741 = vsub.f32 %v717, %v505
    %v742 = vsub.f32 %v717, %v510
    %v743 = vsub.f32 %v717, %v515
    %v744 = vsub.f32 %v717, %v520
    %v745 = vsub.f32 %v717, %v525
    %v746 = vsub.f32 %v717, %v530
    %v747 = vsub.f32 %v717, %v535
    %v748 = vsub.f32 %v717, %v540
    %v749 = vsub.f32 %v717, %v545
    %v750 = vsub.f32 %v717, %v550
    %v751 = vsub.f32 %v717, %v555
    %v752 = vsub.f32 %v717, %v560
    %v753 = vsub.f32 %v717, %v565
    %v754 = vsub.f32 %v717, %v570
    %v755 = vsub.f32 %v717, %v575
    %v756 = vsub.f32 %v717, %v580
    %v757 = vsub.f32 %v717, %v585
    %v758 = vsub.f32 %v717, %v590
    %v759 = vsub.f32 %v717, %v595
    %v760 = vsub.f32 %v717, %v600
    %v761 = vsub.f32 %v717, %v605
    %v762 = vsub.f32 %v717, %v610
    %v763 = vsub.f32 %v717, %v615
    %v764 = vsub.f32 %v717, %v620
    %v765 = vsub.f32 %v717, %v625
    %v766 = vsub.f32 %v717, %v630
    %v767 = vsub.f32 %v717, %v635
    %v768 = vsub.f32 %v717, %v640
    %v769 = vsub.f32 %v717, %v645
    %v770 = vsub.f32 %v717, %v650
    %v771 = vsub.f32 %v717, %v655
    %v772 = vsub.f32 %v717, %v660
    %v773 = vsub.f32 %v717, %v665
    %v774 = vsub.f32 %v717, %v670
    %v775 = vsub.f32 %v717, %v675
    %v776 = vsub.f32 %v717, %v680
    %v777 = vsub.f32 %v717, %v685
    %v778 = vsub.f32 %v717, %v690
    %v779 = vsub.f32 %v717, %v695
    %v780 = vsub.f32 %v717, %v700
    %v781 = vsub.f32 %v717, %v705
    %v782 = vsub.f32 %v717, %v710
    %vm783 = vcmask 130048
    %v784 = vsel %vm783, %v719, inf
    %785 = vmin.xlane.f32.xlu0 %v784
    %v786 = vpop.xlane.xlu0 %785
    %v787 = vsel %vm783, %v720, inf
    %788 = vmin.xlane.f32.xlu0 %v787
    %v789 = vpop.xlane.xlu0 %788
    %v790 = vsel %vm783, %v721, inf
    %791 = vmin.xlane.f32.xlu0 %v790
    %v792 = vpop.xlane.xlu0 %791
    %v793 = vsel %vm783, %v722, inf
    %794 = vmin.xlane.f32.xlu0 %v793
    %v795 = vpop.xlane.xlu0 %794
    %v796 = vsel %vm783, %v723, inf
    %797 = vmin.xlane.f32.xlu0 %v796
    %v798 = vpop.xlane.xlu0 %797
    %v799 = vsel %vm783, %v724, inf
    %800 = vmin.xlane.f32.xlu0 %v799
    %v801 = vpop.xlane.xlu0 %800
    %v802 = vsel %vm783, %v725, inf
    %803 = vmin.xlane.f32.xlu0 %v802
    %v804 = vpop.xlane.xlu0 %803
    %v805 = vsel %vm783, %v726, inf
    %806 = vmin.xlane.f32.xlu0 %v805
    %v807 = vpop.xlane.xlu0 %806
    %v808 = vsel %vm783, %v727, inf
    %809 = vmin.xlane.f32.xlu0 %v808
    %v810 = vpop.xlane.xlu0 %809
    %v811 = vsel %vm783, %v728, inf
    %812 = vmin.xlane.f32.xlu0 %v811
    %v813 = vpop.xlane.xlu0 %812
    %v814 = vsel %vm783, %v729, inf
    %815 = vmin.xlane.f32.xlu0 %v814
    %v816 = vpop.xlane.xlu0 %815
    %v817 = vsel %vm783, %v730, inf
    %818 = vmin.xlane.f32.xlu0 %v817
    %v819 = vpop.xlane.xlu0 %818
    %v820 = vsel %vm783, %v731, inf
    %821 = vmin.xlane.f32.xlu0 %v820
    %v822 = vpop.xlane.xlu0 %821
    %v823 = vsel %vm783, %v732, inf
    %824 = vmin.xlane.f32.xlu0 %v823
    %v825 = vpop.xlane.xlu0 %824
    %v826 = vsel %vm783, %v733, inf
    %827 = vmin.xlane.f32.xlu0 %v826
    %v828 = vpop.xlane.xlu0 %827
    %v829 = vsel %vm783, %v734, inf
    %830 = vmin.xlane.f32.xlu0 %v829
    %v831 = vpop.xlane.xlu0 %830
    %v832 = vsel %vm783, %v735, inf
    %833 = vmin.xlane.f32.xlu0 %v832
    %v834 = vpop.xlane.xlu0 %833
    %v835 = vsel %vm783, %v736, inf
    %836 = vmin.xlane.f32.xlu0 %v835
    %v837 = vpop.xlane.xlu0 %836
    %v838 = vsel %vm783, %v737, inf
    %839 = vmin.xlane.f32.xlu0 %v838
    %v840 = vpop.xlane.xlu0 %839
    %v841 = vsel %vm783, %v738, inf
    %842 = vmin.xlane.f32.xlu0 %v841
    %v843 = vpop.xlane.xlu0 %842
    %v844 = vsel %vm783, %v739, inf
    %845 = vmin.xlane.f32.xlu0 %v844
    %v846 = vpop.xlane.xlu0 %845
    %v847 = vsel %vm783, %v740, inf
    %848 = vmin.xlane.f32.xlu0 %v847
    %v849 = vpop.xlane.xlu0 %848
    %v850 = vsel %vm783, %v741, inf
    %851 = vmin.xlane.f32.xlu0 %v850
    %v852 = vpop.xlane.xlu0 %851
    %v853 = vsel %vm783, %v742, inf
    %854 = vmin.xlane.f32.xlu0 %v853
    %v855 = vpop.xlane.xlu0 %854
    %v856 = vsel %vm783, %v743, inf
    %857 = vmin.xlane.f32.xlu0 %v856
    %v858 = vpop.xlane.xlu0 %857
    %v859 = vsel %vm783, %v744, inf
    %860 = vmin.xlane.f32.xlu0 %v859
    %v861 = vpop.xlane.xlu0 %860
    %v862 = vsel %vm783, %v745, inf
    %863 = vmin.xlane.f32.xlu0 %v862
    %v864 = vpop.xlane.xlu0 %863
    %v865 = vsel %vm783, %v746, inf
    %866 = vmin.xlane.f32.xlu0 %v865
    %v867 = vpop.xlane.xlu0 %866
    %v868 = vsel %vm783, %v747, inf
    %869 = vmin.xlane.f32.xlu0 %v868
    %v870 = vpop.xlane.xlu0 %869
    %v871 = vsel %vm783, %v748, inf
    %872 = vmin.xlane.f32.xlu0 %v871
    %v873 = vpop.xlane.xlu0 %872
    %v874 = vsel %vm783, %v749, inf
    %875 = vmin.xlane.f32.xlu0 %v874
    %v876 = vpop.xlane.xlu0 %875
    %v877 = vsel %vm783, %v750, inf
    %878 = vmin.xlane.f32.xlu0 %v877
    %v879 = vpop.xlane.xlu0 %878
    %v880 = vsel %vm783, %v751, inf
    %881 = vmin.xlane.f32.xlu0 %v880
    %v882 = vpop.xlane.xlu0 %881
    %v883 = vsel %vm783, %v752, inf
    %884 = vmin.xlane.f32.xlu0 %v883
    %v885 = vpop.xlane.xlu0 %884
    %v886 = vsel %vm783, %v753, inf
    %887 = vmin.xlane.f32.xlu0 %v886
    %v888 = vpop.xlane.xlu0 %887
    %v889 = vsel %vm783, %v754, inf
    %890 = vmin.xlane.f32.xlu0 %v889
    %v891 = vpop.xlane.xlu0 %890
    %v892 = vsel %vm783, %v755, inf
    %893 = vmin.xlane.f32.xlu0 %v892
    %v894 = vpop.xlane.xlu0 %893
    %v895 = vsel %vm783, %v756, inf
    %896 = vmin.xlane.f32.xlu0 %v895
    %v897 = vpop.xlane.xlu0 %896
    %v898 = vsel %vm783, %v757, inf
    %899 = vmin.xlane.f32.xlu0 %v898
    %v900 = vpop.xlane.xlu0 %899
    %v901 = vsel %vm783, %v758, inf
    %902 = vmin.xlane.f32.xlu0 %v901
    %v903 = vpop.xlane.xlu0 %902
    %v904 = vsel %vm783, %v759, inf
    %905 = vmin.xlane.f32.xlu0 %v904
    %v906 = vpop.xlane.xlu0 %905
    %v907 = vsel %vm783, %v760, inf
    %908 = vmin.xlane.f32.xlu0 %v907
    %v909 = vpop.xlane.xlu0 %908
    %v910 = vsel %vm783, %v761, inf
    %911 = vmin.xlane.f32.xlu0 %v910
    %v912 = vpop.xlane.xlu0 %911
    %v913 = vsel %vm783, %v762, inf
    %914 = vmin.xlane.f32.xlu0 %v913
    %v915 = vpop.xlane.xlu0 %914
    %v916 = vsel %vm783, %v763, inf
    %917 = vmin.xlane.f32.xlu0 %v916
    %v918 = vpop.xlane.xlu0 %917
    %v919 = vsel %vm783, %v764, inf
    %920 = vmin.xlane.f32.xlu0 %v919
    %v921 = vpop.xlane.xlu0 %920
    %v922 = vsel %vm783, %v765, inf
    %923 = vmin.xlane.f32.xlu0 %v922
    %v924 = vpop.xlane.xlu0 %923
    %v925 = vsel %vm783, %v766, inf
    %926 = vmin.xlane.f32.xlu0 %v925
    %v927 = vpop.xlane.xlu0 %926
    %v928 = vsel %vm783, %v767, inf
    %929 = vmin.xlane.f32.xlu0 %v928
    %v930 = vpop.xlane.xlu0 %929
    %v931 = vsel %vm783, %v768, inf
    %932 = vmin.xlane.f32.xlu0 %v931
    %v933 = vpop.xlane.xlu0 %932
    %v934 = vsel %vm783, %v769, inf
    %935 = vmin.xlane.f32.xlu0 %v934
    %v936 = vpop.xlane.xlu0 %935
    %v937 = vsel %vm783, %v770, inf
    %938 = vmin.xlane.f32.xlu0 %v937
    %v939 = vpop.xlane.xlu0 %938
    %v940 = vsel %vm783, %v771, inf
    %941 = vmin.xlane.f32.xlu0 %v940
    %v942 = vpop.xlane.xlu0 %941
    %v943 = vsel %vm783, %v772, inf
    %944 = vmin.xlane.f32.xlu0 %v943
    %v945 = vpop.xlane.xlu0 %944
    %v946 = vsel %vm783, %v773, inf
    %947 = vmin.xlane.f32.xlu0 %v946
    %v948 = vpop.xlane.xlu0 %947
    %v949 = vsel %vm783, %v774, inf
    %950 = vmin.xlane.f32.xlu0 %v949
    %v951 = vpop.xlane.xlu0 %950
    %v952 = vsel %vm783, %v775, inf
    %953 = vmin.xlane.f32.xlu0 %v952
    %v954 = vpop.xlane.xlu0 %953
    %v955 = vsel %vm783, %v776, inf
    %956 = vmin.xlane.f32.xlu0 %v955
    %v957 = vpop.xlane.xlu0 %956
    %v958 = vsel %vm783, %v777, inf
    %959 = vmin.xlane.f32.xlu0 %v958
    %v960 = vpop.xlane.xlu0 %959
    %v961 = vsel %vm783, %v778, inf
    %962 = vmin.xlane.f32.xlu0 %v961
    %v963 = vpop.xlane.xlu0 %962
    %v964 = vsel %vm783, %v779, inf
    %965 = vmin.xlane.f32.xlu0 %v964
    %v966 = vpop.xlane.xlu0 %965
    %v967 = vsel %vm783, %v780, inf
    %968 = vmin.xlane.f32.xlu0 %v967
    %v969 = vpop.xlane.xlu0 %968
    %v970 = vsel %vm783, %v781, inf
    %971 = vmin.xlane.f32.xlu0 %v970
    %v972 = vpop.xlane.xlu0 %971
    %v973 = vsel %vm783, %v782, inf
    %974 = vmin.xlane.f32.xlu0 %v973
    %v975 = vpop.xlane.xlu0 %974
    %v976 = vlaneseq
    %v977 = vand.u32 %v976, 127
    %vm978 = vcmp.eq.f32.partialorder %v719, %v786
    %vm979 = vcmp.eq.f32.partialorder %v720, %v789
    %vm980 = vcmp.eq.f32.partialorder %v721, %v792
    %vm981 = vcmp.eq.f32.partialorder %v722, %v795
    %vm982 = vcmp.eq.f32.partialorder %v723, %v798
    %vm983 = vcmp.eq.f32.partialorder %v724, %v801
    %vm984 = vcmp.eq.f32.partialorder %v725, %v804
    %vm985 = vcmp.eq.f32.partialorder %v726, %v807
    %vm986 = vcmp.eq.f32.partialorder %v727, %v810
    %vm987 = vcmp.eq.f32.partialorder %v728, %v813
    %vm988 = vcmp.eq.f32.partialorder %v729, %v816
    %vm989 = vcmp.eq.f32.partialorder %v730, %v819
    %vm990 = vcmp.eq.f32.partialorder %v731, %v822
    %vm991 = vcmp.eq.f32.partialorder %v732, %v825
    %vm992 = vcmp.eq.f32.partialorder %v733, %v828
    %vm993 = vcmp.eq.f32.partialorder %v734, %v831
    %vm994 = vcmp.eq.f32.partialorder %v735, %v834
    %vm995 = vcmp.eq.f32.partialorder %v736, %v837
    %vm996 = vcmp.eq.f32.partialorder %v737, %v840
    %vm997 = vcmp.eq.f32.partialorder %v738, %v843
    %vm998 = vcmp.eq.f32.partialorder %v739, %v846
    %vm999 = vcmp.eq.f32.partialorder %v740, %v849
    %vm1000 = vcmp.eq.f32.partialorder %v741, %v852
    %vm1001 = vcmp.eq.f32.partialorder %v742, %v855
    %vm1002 = vcmp.eq.f32.partialorder %v743, %v858
    %vm1003 = vcmp.eq.f32.partialorder %v744, %v861
    %vm1004 = vcmp.eq.f32.partialorder %v745, %v864
    %vm1005 = vcmp.eq.f32.partialorder %v746, %v867
    %vm1006 = vcmp.eq.f32.partialorder %v747, %v870
    %vm1007 = vcmp.eq.f32.partialorder %v748, %v873
    %vm1008 = vcmp.eq.f32.partialorder %v749, %v876
    %vm1009 = vcmp.eq.f32.partialorder %v750, %v879
    %vm1010 = vcmp.eq.f32.partialorder %v751, %v882
    %vm1011 = vcmp.eq.f32.partialorder %v752, %v885
    %vm1012 = vcmp.eq.f32.partialorder %v753, %v888
    %vm1013 = vcmp.eq.f32.partialorder %v754, %v891
    %vm1014 = vcmp.eq.f32.partialorder %v755, %v894
    %vm1015 = vcmp.eq.f32.partialorder %v756, %v897
    %vm1016 = vcmp.eq.f32.partialorder %v757, %v900
    %vm1017 = vcmp.eq.f32.partialorder %v758, %v903
    %vm1018 = vcmp.eq.f32.partialorder %v759, %v906
    %vm1019 = vcmp.eq.f32.partialorder %v760, %v909
    %vm1020 = vcmp.eq.f32.partialorder %v761, %v912
    %vm1021 = vcmp.eq.f32.partialorder %v762, %v915
    %vm1022 = vcmp.eq.f32.partialorder %v763, %v918
    %vm1023 = vcmp.eq.f32.partialorder %v764, %v921
    %vm1024 = vcmp.eq.f32.partialorder %v765, %v924
    %vm1025 = vcmp.eq.f32.partialorder %v766, %v927
    %vm1026 = vcmp.eq.f32.partialorder %v767, %v930
    %vm1027 = vcmp.eq.f32.partialorder %v768, %v933
    %vm1028 = vcmp.eq.f32.partialorder %v769, %v936
    %vm1029 = vcmp.eq.f32.partialorder %v770, %v939
    %vm1030 = vcmp.eq.f32.partialorder %v771, %v942
    %vm1031 = vcmp.eq.f32.partialorder %v772, %v945
    %vm1032 = vcmp.eq.f32.partialorder %v773, %v948
    %vm1033 = vcmp.eq.f32.partialorder %v774, %v951
    %vm1034 = vcmp.eq.f32.partialorder %v775, %v954
    %vm1035 = vcmp.eq.f32.partialorder %v776, %v957
    %vm1036 = vcmp.eq.f32.partialorder %v777, %v960
    %vm1037 = vcmp.eq.f32.partialorder %v778, %v963
    %vm1038 = vcmp.eq.f32.partialorder %v779, %v966
    %vm1039 = vcmp.eq.f32.partialorder %v780, %v969
    %vm1040 = vcmp.eq.f32.partialorder %v781, %v972
    %vm1041 = vcmp.eq.f32.partialorder %v782, %v975
    %v1042 = vsel %vm978, %v977, 16
    %v1043 = vsel %vm979, %v977, 16
    %v1044 = vsel %vm980, %v977, 16
    %v1045 = vsel %vm981, %v977, 16
    %v1046 = vsel %vm982, %v977, 16
    %v1047 = vsel %vm983, %v977, 16
    %v1048 = vsel %vm984, %v977, 16
    %v1049 = vsel %vm985, %v977, 16
    %v1050 = vsel %vm986, %v977, 16
    %v1051 = vsel %vm987, %v977, 16
    %v1052 = vsel %vm988, %v977, 16
    %v1053 = vsel %vm989, %v977, 16
    %v1054 = vsel %vm990, %v977, 16
    %v1055 = vsel %vm991, %v977, 16
    %v1056 = vsel %vm992, %v977, 16
    %v1057 = vsel %vm993, %v977, 16
    %v1058 = vsel %vm994, %v977, 16
    %v1059 = vsel %vm995, %v977, 16
    %v1060 = vsel %vm996, %v977, 16
    %v1061 = vsel %vm997, %v977, 16
    %v1062 = vsel %vm998, %v977, 16
    %v1063 = vsel %vm999, %v977, 16
    %v1064 = vsel %vm1000, %v977, 16
    %v1065 = vsel %vm1001, %v977, 16
    %v1066 = vsel %vm1002, %v977, 16
    %v1067 = vsel %vm1003, %v977, 16
    %v1068 = vsel %vm1004, %v977, 16
    %v1069 = vsel %vm1005, %v977, 16
    %v1070 = vsel %vm1006, %v977, 16
    %v1071 = vsel %vm1007, %v977, 16
    %v1072 = vsel %vm1008, %v977, 16
    %v1073 = vsel %vm1009, %v977, 16
    %v1074 = vsel %vm1010, %v977, 16
    %v1075 = vsel %vm1011, %v977, 16
    %v1076 = vsel %vm1012, %v977, 16
    %v1077 = vsel %vm1013, %v977, 16
    %v1078 = vsel %vm1014, %v977, 16
    %v1079 = vsel %vm1015, %v977, 16
    %v1080 = vsel %vm1016, %v977, 16
    %v1081 = vsel %vm1017, %v977, 16
    %v1082 = vsel %vm1018, %v977, 16
    %v1083 = vsel %vm1019, %v977, 16
    %v1084 = vsel %vm1020, %v977, 16
    %v1085 = vsel %vm1021, %v977, 16
    %v1086 = vsel %vm1022, %v977, 16
    %v1087 = vsel %vm1023, %v977, 16
    %v1088 = vsel %vm1024, %v977, 16
    %v1089 = vsel %vm1025, %v977, 16
    %v1090 = vsel %vm1026, %v977, 16
    %v1091 = vsel %vm1027, %v977, 16
    %v1092 = vsel %vm1028, %v977, 16
    %v1093 = vsel %vm1029, %v977, 16
    %v1094 = vsel %vm1030, %v977, 16
    %v1095 = vsel %vm1031, %v977, 16
    %v1096 = vsel %vm1032, %v977, 16
    %v1097 = vsel %vm1033, %v977, 16
    %v1098 = vsel %vm1034, %v977, 16
    %v1099 = vsel %vm1035, %v977, 16
    %v1100 = vsel %vm1036, %v977, 16
    %v1101 = vsel %vm1037, %v977, 16
    %v1102 = vsel %vm1038, %v977, 16
    %v1103 = vsel %vm1039, %v977, 16
    %v1104 = vsel %vm1040, %v977, 16
    %v1105 = vsel %vm1041, %v977, 16
    %v1106 = vsel %vm783, %v1042, 2147483647
    %v1107 = vand.u32 %v1106, 65535
    %v1108 = vshra.s32 %v1106, 16
    %v1109 = vcvt.s32.f32 %v1107
    %v1110 = vcvt.s32.f32 %v1108
    %1111 = vmin.xlane.f32.xlu0 %v1110
    %v1112 = vpop.xlane.xlu0 %1111
    %vm1113 = vcmp.eq.f32.partialorder %v1110, %v1112
    %v1114 = vsel %vm1113, %v1109, inf
    %1115 = vmin.xlane.f32.xlu0 %v1114
    %v1116 = vpop.xlane.xlu0 %1115
    %v1117 = vcvt.f32.s32 %v1116
    %v1118 = vcvt.f32.s32 %v1112
    %v1119 = vshll.u32 %v1118, 16
    %v1120 = vadd.s32 %v1119, %v1117
    %v1121 = vsel %vm783, %v1043, 2147483647
    %v1122 = vand.u32 %v1121, 65535
    %v1123 = vshra.s32 %v1121, 16
    %v1124 = vcvt.s32.f32 %v1122
    %v1125 = vcvt.s32.f32 %v1123
    %1126 = vmin.xlane.f32.xlu0 %v1125
    %v1127 = vpop.xlane.xlu0 %1126
    %vm1128 = vcmp.eq.f32.partialorder %v1125, %v1127
    %v1129 = vsel %vm1128, %v1124, inf
    %1130 = vmin.xlane.f32.xlu0 %v1129
    %v1131 = vpop.xlane.xlu0 %1130
    %v1132 = vcvt.f32.s32 %v1131
    %v1133 = vcvt.f32.s32 %v1127
    %v1134 = vshll.u32 %v1133, 16
    %v1135 = vadd.s32 %v1134, %v1132
    %v1136 = vsel %vm783, %v1044, 2147483647
    %v1137 = vand.u32 %v1136, 65535
    %v1138 = vshra.s32 %v1136, 16
    %v1139 = vcvt.s32.f32 %v1137
    %v1140 = vcvt.s32.f32 %v1138
    %1141 = vmin.xlane.f32.xlu0 %v1140
    %v1142 = vpop.xlane.xlu0 %1141
    %vm1143 = vcmp.eq.f32.partialorder %v1140, %v1142
    %v1144 = vsel %vm1143, %v1139, inf
    %1145 = vmin.xlane.f32.xlu0 %v1144
    %v1146 = vpop.xlane.xlu0 %1145
    %v1147 = vcvt.f32.s32 %v1146
    %v1148 = vcvt.f32.s32 %v1142
    %v1149 = vshll.u32 %v1148, 16
    %v1150 = vadd.s32 %v1149, %v1147
    %v1151 = vsel %vm783, %v1045, 2147483647
    %v1152 = vand.u32 %v1151, 65535
    %v1153 = vshra.s32 %v1151, 16
    %v1154 = vcvt.s32.f32 %v1152
    %v1155 = vcvt.s32.f32 %v1153
    %1156 = vmin.xlane.f32.xlu0 %v1155
    %v1157 = vpop.xlane.xlu0 %1156
    %vm1158 = vcmp.eq.f32.partialorder %v1155, %v1157
    %v1159 = vsel %vm1158, %v1154, inf
    %1160 = vmin.xlane.f32.xlu0 %v1159
    %v1161 = vpop.xlane.xlu0 %1160
    %v1162 = vcvt.f32.s32 %v1161
    %v1163 = vcvt.f32.s32 %v1157
    %v1164 = vshll.u32 %v1163, 16
    %v1165 = vadd.s32 %v1164, %v1162
    %v1166 = vsel %vm783, %v1046, 2147483647
    %v1167 = vand.u32 %v1166, 65535
    %v1168 = vshra.s32 %v1166, 16
    %v1169 = vcvt.s32.f32 %v1167
    %v1170 = vcvt.s32.f32 %v1168
    %1171 = vmin.xlane.f32.xlu0 %v1170
    %v1172 = vpop.xlane.xlu0 %1171
    %vm1173 = vcmp.eq.f32.partialorder %v1170, %v1172
    %v1174 = vsel %vm1173, %v1169, inf
    %1175 = vmin.xlane.f32.xlu0 %v1174
    %v1176 = vpop.xlane.xlu0 %1175
    %v1177 = vcvt.f32.s32 %v1176
    %v1178 = vcvt.f32.s32 %v1172
    %v1179 = vshll.u32 %v1178, 16
    %v1180 = vadd.s32 %v1179, %v1177
    %v1181 = vsel %vm783, %v1047, 2147483647
    %v1182 = vand.u32 %v1181, 65535
    %v1183 = vshra.s32 %v1181, 16
    %v1184 = vcvt.s32.f32 %v1182
    %v1185 = vcvt.s32.f32 %v1183
    %1186 = vmin.xlane.f32.xlu0 %v1185
    %v1187 = vpop.xlane.xlu0 %1186
    %vm1188 = vcmp.eq.f32.partialorder %v1185, %v1187
    %v1189 = vsel %vm1188, %v1184, inf
    %1190 = vmin.xlane.f32.xlu0 %v1189
    %v1191 = vpop.xlane.xlu0 %1190
    %v1192 = vcvt.f32.s32 %v1191
    %v1193 = vcvt.f32.s32 %v1187
    %v1194 = vshll.u32 %v1193, 16
    %v1195 = vadd.s32 %v1194, %v1192
    %v1196 = vsel %vm783, %v1048, 2147483647
    %v1197 = vand.u32 %v1196, 65535
    %v1198 = vshra.s32 %v1196, 16
    %v1199 = vcvt.s32.f32 %v1197
    %v1200 = vcvt.s32.f32 %v1198
    %1201 = vmin.xlane.f32.xlu0 %v1200
    %v1202 = vpop.xlane.xlu0 %1201
    %vm1203 = vcmp.eq.f32.partialorder %v1200, %v1202
    %v1204 = vsel %vm1203, %v1199, inf
    %1205 = vmin.xlane.f32.xlu0 %v1204
    %v1206 = vpop.xlane.xlu0 %1205
    %v1207 = vcvt.f32.s32 %v1206
    %v1208 = vcvt.f32.s32 %v1202
    %v1209 = vshll.u32 %v1208, 16
    %v1210 = vadd.s32 %v1209, %v1207
    %v1211 = vsel %vm783, %v1049, 2147483647
    %v1212 = vand.u32 %v1211, 65535
    %v1213 = vshra.s32 %v1211, 16
    %v1214 = vcvt.s32.f32 %v1212
    %v1215 = vcvt.s32.f32 %v1213
    %1216 = vmin.xlane.f32.xlu0 %v1215
    %v1217 = vpop.xlane.xlu0 %1216
    %vm1218 = vcmp.eq.f32.partialorder %v1215, %v1217
    %v1219 = vsel %vm1218, %v1214, inf
    %1220 = vmin.xlane.f32.xlu0 %v1219
    %v1221 = vpop.xlane.xlu0 %1220
    %v1222 = vcvt.f32.s32 %v1221
    %v1223 = vcvt.f32.s32 %v1217
    %v1224 = vshll.u32 %v1223, 16
    %v1225 = vadd.s32 %v1224, %v1222
    %v1226 = vsel %vm783, %v1050, 2147483647
    %v1227 = vand.u32 %v1226, 65535
    %v1228 = vshra.s32 %v1226, 16
    %v1229 = vcvt.s32.f32 %v1227
    %v1230 = vcvt.s32.f32 %v1228
    %1231 = vmin.xlane.f32.xlu0 %v1230
    %v1232 = vpop.xlane.xlu0 %1231
    %vm1233 = vcmp.eq.f32.partialorder %v1230, %v1232
    %v1234 = vsel %vm1233, %v1229, inf
    %1235 = vmin.xlane.f32.xlu0 %v1234
    %v1236 = vpop.xlane.xlu0 %1235
    %v1237 = vcvt.f32.s32 %v1236
    %v1238 = vcvt.f32.s32 %v1232
    %v1239 = vshll.u32 %v1238, 16
    %v1240 = vadd.s32 %v1239, %v1237
    %v1241 = vsel %vm783, %v1051, 2147483647
    %v1242 = vand.u32 %v1241, 65535
    %v1243 = vshra.s32 %v1241, 16
    %v1244 = vcvt.s32.f32 %v1242
    %v1245 = vcvt.s32.f32 %v1243
    %1246 = vmin.xlane.f32.xlu0 %v1245
    %v1247 = vpop.xlane.xlu0 %1246
    %vm1248 = vcmp.eq.f32.partialorder %v1245, %v1247
    %v1249 = vsel %vm1248, %v1244, inf
    %1250 = vmin.xlane.f32.xlu0 %v1249
    %v1251 = vpop.xlane.xlu0 %1250
    %v1252 = vcvt.f32.s32 %v1251
    %v1253 = vcvt.f32.s32 %v1247
    %v1254 = vshll.u32 %v1253, 16
    %v1255 = vadd.s32 %v1254, %v1252
    %v1256 = vsel %vm783, %v1052, 2147483647
    %v1257 = vand.u32 %v1256, 65535
    %v1258 = vshra.s32 %v1256, 16
    %v1259 = vcvt.s32.f32 %v1257
    %v1260 = vcvt.s32.f32 %v1258
    %1261 = vmin.xlane.f32.xlu0 %v1260
    %v1262 = vpop.xlane.xlu0 %1261
    %vm1263 = vcmp.eq.f32.partialorder %v1260, %v1262
    %v1264 = vsel %vm1263, %v1259, inf
    %1265 = vmin.xlane.f32.xlu0 %v1264
    %v1266 = vpop.xlane.xlu0 %1265
    %v1267 = vcvt.f32.s32 %v1266
    %v1268 = vcvt.f32.s32 %v1262
    %v1269 = vshll.u32 %v1268, 16
    %v1270 = vadd.s32 %v1269, %v1267
    %v1271 = vsel %vm783, %v1053, 2147483647
    %v1272 = vand.u32 %v1271, 65535
    %v1273 = vshra.s32 %v1271, 16
    %v1274 = vcvt.s32.f32 %v1272
    %v1275 = vcvt.s32.f32 %v1273
    %1276 = vmin.xlane.f32.xlu0 %v1275
    %v1277 = vpop.xlane.xlu0 %1276
    %vm1278 = vcmp.eq.f32.partialorder %v1275, %v1277
    %v1279 = vsel %vm1278, %v1274, inf
    %1280 = vmin.xlane.f32.xlu0 %v1279
    %v1281 = vpop.xlane.xlu0 %1280
    %v1282 = vcvt.f32.s32 %v1281
    %v1283 = vcvt.f32.s32 %v1277
    %v1284 = vshll.u32 %v1283, 16
    %v1285 = vadd.s32 %v1284, %v1282
    %v1286 = vsel %vm783, %v1054, 2147483647
    %v1287 = vand.u32 %v1286, 65535
    %v1288 = vshra.s32 %v1286, 16
    %v1289 = vcvt.s32.f32 %v1287
    %v1290 = vcvt.s32.f32 %v1288
    %1291 = vmin.xlane.f32.xlu0 %v1290
    %v1292 = vpop.xlane.xlu0 %1291
    %vm1293 = vcmp.eq.f32.partialorder %v1290, %v1292
    %v1294 = vsel %vm1293, %v1289, inf
    %1295 = vmin.xlane.f32.xlu0 %v1294
    %v1296 = vpop.xlane.xlu0 %1295
    %v1297 = vcvt.f32.s32 %v1296
    %v1298 = vcvt.f32.s32 %v1292
    %v1299 = vshll.u32 %v1298, 16
    %v1300 = vadd.s32 %v1299, %v1297
    %v1301 = vsel %vm783, %v1055, 2147483647
    %v1302 = vand.u32 %v1301, 65535
    %v1303 = vshra.s32 %v1301, 16
    %v1304 = vcvt.s32.f32 %v1302
    %v1305 = vcvt.s32.f32 %v1303
    %1306 = vmin.xlane.f32.xlu0 %v1305
    %v1307 = vpop.xlane.xlu0 %1306
    %vm1308 = vcmp.eq.f32.partialorder %v1305, %v1307
    %v1309 = vsel %vm1308, %v1304, inf
    %1310 = vmin.xlane.f32.xlu0 %v1309
    %v1311 = vpop.xlane.xlu0 %1310
    %v1312 = vcvt.f32.s32 %v1311
    %v1313 = vcvt.f32.s32 %v1307
    %v1314 = vshll.u32 %v1313, 16
    %v1315 = vadd.s32 %v1314, %v1312
    %v1316 = vsel %vm783, %v1056, 2147483647
    %v1317 = vand.u32 %v1316, 65535
    %v1318 = vshra.s32 %v1316, 16
    %v1319 = vcvt.s32.f32 %v1317
    %v1320 = vcvt.s32.f32 %v1318
    %1321 = vmin.xlane.f32.xlu0 %v1320
    %v1322 = vpop.xlane.xlu0 %1321
    %vm1323 = vcmp.eq.f32.partialorder %v1320, %v1322
    %v1324 = vsel %vm1323, %v1319, inf
    %1325 = vmin.xlane.f32.xlu0 %v1324
    %v1326 = vpop.xlane.xlu0 %1325
    %v1327 = vcvt.f32.s32 %v1326
    %v1328 = vcvt.f32.s32 %v1322
    %v1329 = vshll.u32 %v1328, 16
    %v1330 = vadd.s32 %v1329, %v1327
    %v1331 = vsel %vm783, %v1057, 2147483647
    %v1332 = vand.u32 %v1331, 65535
    %v1333 = vshra.s32 %v1331, 16
    %v1334 = vcvt.s32.f32 %v1332
    %v1335 = vcvt.s32.f32 %v1333
    %1336 = vmin.xlane.f32.xlu0 %v1335
    %v1337 = vpop.xlane.xlu0 %1336
    %vm1338 = vcmp.eq.f32.partialorder %v1335, %v1337
    %v1339 = vsel %vm1338, %v1334, inf
    %1340 = vmin.xlane.f32.xlu0 %v1339
    %v1341 = vpop.xlane.xlu0 %1340
    %v1342 = vcvt.f32.s32 %v1341
    %v1343 = vcvt.f32.s32 %v1337
    %v1344 = vshll.u32 %v1343, 16
    %v1345 = vadd.s32 %v1344, %v1342
    %v1346 = vsel %vm783, %v1058, 2147483647
    %v1347 = vand.u32 %v1346, 65535
    %v1348 = vshra.s32 %v1346, 16
    %v1349 = vcvt.s32.f32 %v1347
    %v1350 = vcvt.s32.f32 %v1348
    %1351 = vmin.xlane.f32.xlu0 %v1350
    %v1352 = vpop.xlane.xlu0 %1351
    %vm1353 = vcmp.eq.f32.partialorder %v1350, %v1352
    %v1354 = vsel %vm1353, %v1349, inf
    %1355 = vmin.xlane.f32.xlu0 %v1354
    %v1356 = vpop.xlane.xlu0 %1355
    %v1357 = vcvt.f32.s32 %v1356
    %v1358 = vcvt.f32.s32 %v1352
    %v1359 = vshll.u32 %v1358, 16
    %v1360 = vadd.s32 %v1359, %v1357
    %v1361 = vsel %vm783, %v1059, 2147483647
    %v1362 = vand.u32 %v1361, 65535
    %v1363 = vshra.s32 %v1361, 16
    %v1364 = vcvt.s32.f32 %v1362
    %v1365 = vcvt.s32.f32 %v1363
    %1366 = vmin.xlane.f32.xlu0 %v1365
    %v1367 = vpop.xlane.xlu0 %1366
    %vm1368 = vcmp.eq.f32.partialorder %v1365, %v1367
    %v1369 = vsel %vm1368, %v1364, inf
    %1370 = vmin.xlane.f32.xlu0 %v1369
    %v1371 = vpop.xlane.xlu0 %1370
    %v1372 = vcvt.f32.s32 %v1371
    %v1373 = vcvt.f32.s32 %v1367
    %v1374 = vshll.u32 %v1373, 16
    %v1375 = vadd.s32 %v1374, %v1372
    %v1376 = vsel %vm783, %v1060, 2147483647
    %v1377 = vand.u32 %v1376, 65535
    %v1378 = vshra.s32 %v1376, 16
    %v1379 = vcvt.s32.f32 %v1377
    %v1380 = vcvt.s32.f32 %v1378
    %1381 = vmin.xlane.f32.xlu0 %v1380
    %v1382 = vpop.xlane.xlu0 %1381
    %vm1383 = vcmp.eq.f32.partialorder %v1380, %v1382
    %v1384 = vsel %vm1383, %v1379, inf
    %1385 = vmin.xlane.f32.xlu0 %v1384
    %v1386 = vpop.xlane.xlu0 %1385
    %v1387 = vcvt.f32.s32 %v1386
    %v1388 = vcvt.f32.s32 %v1382
    %v1389 = vshll.u32 %v1388, 16
    %v1390 = vadd.s32 %v1389, %v1387
    %v1391 = vsel %vm783, %v1061, 2147483647
    %v1392 = vand.u32 %v1391, 65535
    %v1393 = vshra.s32 %v1391, 16
    %v1394 = vcvt.s32.f32 %v1392
    %v1395 = vcvt.s32.f32 %v1393
    %1396 = vmin.xlane.f32.xlu0 %v1395
    %v1397 = vpop.xlane.xlu0 %1396
    %vm1398 = vcmp.eq.f32.partialorder %v1395, %v1397
    %v1399 = vsel %vm1398, %v1394, inf
    %1400 = vmin.xlane.f32.xlu0 %v1399
    %v1401 = vpop.xlane.xlu0 %1400
    %v1402 = vcvt.f32.s32 %v1401
    %v1403 = vcvt.f32.s32 %v1397
    %v1404 = vshll.u32 %v1403, 16
    %v1405 = vadd.s32 %v1404, %v1402
    %v1406 = vsel %vm783, %v1062, 2147483647
    %v1407 = vand.u32 %v1406, 65535
    %v1408 = vshra.s32 %v1406, 16
    %v1409 = vcvt.s32.f32 %v1407
    %v1410 = vcvt.s32.f32 %v1408
    %1411 = vmin.xlane.f32.xlu0 %v1410
    %v1412 = vpop.xlane.xlu0 %1411
    %vm1413 = vcmp.eq.f32.partialorder %v1410, %v1412
    %v1414 = vsel %vm1413, %v1409, inf
    %1415 = vmin.xlane.f32.xlu0 %v1414
    %v1416 = vpop.xlane.xlu0 %1415
    %v1417 = vcvt.f32.s32 %v1416
    %v1418 = vcvt.f32.s32 %v1412
    %v1419 = vshll.u32 %v1418, 16
    %v1420 = vadd.s32 %v1419, %v1417
    %v1421 = vsel %vm783, %v1063, 2147483647
    %v1422 = vand.u32 %v1421, 65535
    %v1423 = vshra.s32 %v1421, 16
    %v1424 = vcvt.s32.f32 %v1422
    %v1425 = vcvt.s32.f32 %v1423
    %1426 = vmin.xlane.f32.xlu0 %v1425
    %v1427 = vpop.xlane.xlu0 %1426
    %vm1428 = vcmp.eq.f32.partialorder %v1425, %v1427
    %v1429 = vsel %vm1428, %v1424, inf
    %1430 = vmin.xlane.f32.xlu0 %v1429
    %v1431 = vpop.xlane.xlu0 %1430
    %v1432 = vcvt.f32.s32 %v1431
    %v1433 = vcvt.f32.s32 %v1427
    %v1434 = vshll.u32 %v1433, 16
    %v1435 = vadd.s32 %v1434, %v1432
    %v1436 = vsel %vm783, %v1064, 2147483647
    %v1437 = vand.u32 %v1436, 65535
    %v1438 = vshra.s32 %v1436, 16
    %v1439 = vcvt.s32.f32 %v1437
    %v1440 = vcvt.s32.f32 %v1438
    %1441 = vmin.xlane.f32.xlu0 %v1440
    %v1442 = vpop.xlane.xlu0 %1441
    %vm1443 = vcmp.eq.f32.partialorder %v1440, %v1442
    %v1444 = vsel %vm1443, %v1439, inf
    %1445 = vmin.xlane.f32.xlu0 %v1444
    %v1446 = vpop.xlane.xlu0 %1445
    %v1447 = vcvt.f32.s32 %v1446
    %v1448 = vcvt.f32.s32 %v1442
    %v1449 = vshll.u32 %v1448, 16
    %v1450 = vadd.s32 %v1449, %v1447
    %v1451 = vsel %vm783, %v1065, 2147483647
    %v1452 = vand.u32 %v1451, 65535
    %v1453 = vshra.s32 %v1451, 16
    %v1454 = vcvt.s32.f32 %v1452
    %v1455 = vcvt.s32.f32 %v1453
    %1456 = vmin.xlane.f32.xlu0 %v1455
    %v1457 = vpop.xlane.xlu0 %1456
    %vm1458 = vcmp.eq.f32.partialorder %v1455, %v1457
    %v1459 = vsel %vm1458, %v1454, inf
    %1460 = vmin.xlane.f32.xlu0 %v1459
    %v1461 = vpop.xlane.xlu0 %1460
    %v1462 = vcvt.f32.s32 %v1461
    %v1463 = vcvt.f32.s32 %v1457
    %v1464 = vshll.u32 %v1463, 16
    %v1465 = vadd.s32 %v1464, %v1462
    %v1466 = vsel %vm783, %v1066, 2147483647
    %v1467 = vand.u32 %v1466, 65535
    %v1468 = vshra.s32 %v1466, 16
    %v1469 = vcvt.s32.f32 %v1467
    %v1470 = vcvt.s32.f32 %v1468
    %1471 = vmin.xlane.f32.xlu0 %v1470
    %v1472 = vpop.xlane.xlu0 %1471
    %vm1473 = vcmp.eq.f32.partialorder %v1470, %v1472
    %v1474 = vsel %vm1473, %v1469, inf
    %1475 = vmin.xlane.f32.xlu0 %v1474
    %v1476 = vpop.xlane.xlu0 %1475
    %v1477 = vcvt.f32.s32 %v1476
    %v1478 = vcvt.f32.s32 %v1472
    %v1479 = vshll.u32 %v1478, 16
    %v1480 = vadd.s32 %v1479, %v1477
    %v1481 = vsel %vm783, %v1067, 2147483647
    %v1482 = vand.u32 %v1481, 65535
    %v1483 = vshra.s32 %v1481, 16
    %v1484 = vcvt.s32.f32 %v1482
    %v1485 = vcvt.s32.f32 %v1483
    %1486 = vmin.xlane.f32.xlu0 %v1485
    %v1487 = vpop.xlane.xlu0 %1486
    %vm1488 = vcmp.eq.f32.partialorder %v1485, %v1487
    %v1489 = vsel %vm1488, %v1484, inf
    %1490 = vmin.xlane.f32.xlu0 %v1489
    %v1491 = vpop.xlane.xlu0 %1490
    %v1492 = vcvt.f32.s32 %v1491
    %v1493 = vcvt.f32.s32 %v1487
    %v1494 = vshll.u32 %v1493, 16
    %v1495 = vadd.s32 %v1494, %v1492
    %v1496 = vsel %vm783, %v1068, 2147483647
    %v1497 = vand.u32 %v1496, 65535
    %v1498 = vshra.s32 %v1496, 16
    %v1499 = vcvt.s32.f32 %v1497
    %v1500 = vcvt.s32.f32 %v1498
    %1501 = vmin.xlane.f32.xlu0 %v1500
    %v1502 = vpop.xlane.xlu0 %1501
    %vm1503 = vcmp.eq.f32.partialorder %v1500, %v1502
    %v1504 = vsel %vm1503, %v1499, inf
    %1505 = vmin.xlane.f32.xlu0 %v1504
    %v1506 = vpop.xlane.xlu0 %1505
    %v1507 = vcvt.f32.s32 %v1506
    %v1508 = vcvt.f32.s32 %v1502
    %v1509 = vshll.u32 %v1508, 16
    %v1510 = vadd.s32 %v1509, %v1507
    %v1511 = vsel %vm783, %v1069, 2147483647
    %v1512 = vand.u32 %v1511, 65535
    %v1513 = vshra.s32 %v1511, 16
    %v1514 = vcvt.s32.f32 %v1512
    %v1515 = vcvt.s32.f32 %v1513
    %1516 = vmin.xlane.f32.xlu0 %v1515
    %v1517 = vpop.xlane.xlu0 %1516
    %vm1518 = vcmp.eq.f32.partialorder %v1515, %v1517
    %v1519 = vsel %vm1518, %v1514, inf
    %1520 = vmin.xlane.f32.xlu0 %v1519
    %v1521 = vpop.xlane.xlu0 %1520
    %v1522 = vcvt.f32.s32 %v1521
    %v1523 = vcvt.f32.s32 %v1517
    %v1524 = vshll.u32 %v1523, 16
    %v1525 = vadd.s32 %v1524, %v1522
    %v1526 = vsel %vm783, %v1070, 2147483647
    %v1527 = vand.u32 %v1526, 65535
    %v1528 = vshra.s32 %v1526, 16
    %v1529 = vcvt.s32.f32 %v1527
    %v1530 = vcvt.s32.f32 %v1528
    %1531 = vmin.xlane.f32.xlu0 %v1530
    %v1532 = vpop.xlane.xlu0 %1531
    %vm1533 = vcmp.eq.f32.partialorder %v1530, %v1532
    %v1534 = vsel %vm1533, %v1529, inf
    %1535 = vmin.xlane.f32.xlu0 %v1534
    %v1536 = vpop.xlane.xlu0 %1535
    %v1537 = vcvt.f32.s32 %v1536
    %v1538 = vcvt.f32.s32 %v1532
    %v1539 = vshll.u32 %v1538, 16
    %v1540 = vadd.s32 %v1539, %v1537
    %v1541 = vsel %vm783, %v1071, 2147483647
    %v1542 = vand.u32 %v1541, 65535
    %v1543 = vshra.s32 %v1541, 16
    %v1544 = vcvt.s32.f32 %v1542
    %v1545 = vcvt.s32.f32 %v1543
    %1546 = vmin.xlane.f32.xlu0 %v1545
    %v1547 = vpop.xlane.xlu0 %1546
    %vm1548 = vcmp.eq.f32.partialorder %v1545, %v1547
    %v1549 = vsel %vm1548, %v1544, inf
    %1550 = vmin.xlane.f32.xlu0 %v1549
    %v1551 = vpop.xlane.xlu0 %1550
    %v1552 = vcvt.f32.s32 %v1551
    %v1553 = vcvt.f32.s32 %v1547
    %v1554 = vshll.u32 %v1553, 16
    %v1555 = vadd.s32 %v1554, %v1552
    %v1556 = vsel %vm783, %v1072, 2147483647
    %v1557 = vand.u32 %v1556, 65535
    %v1558 = vshra.s32 %v1556, 16
    %v1559 = vcvt.s32.f32 %v1557
    %v1560 = vcvt.s32.f32 %v1558
    %1561 = vmin.xlane.f32.xlu0 %v1560
    %v1562 = vpop.xlane.xlu0 %1561
    %vm1563 = vcmp.eq.f32.partialorder %v1560, %v1562
    %v1564 = vsel %vm1563, %v1559, inf
    %1565 = vmin.xlane.f32.xlu0 %v1564
    %v1566 = vpop.xlane.xlu0 %1565
    %v1567 = vcvt.f32.s32 %v1566
    %v1568 = vcvt.f32.s32 %v1562
    %v1569 = vshll.u32 %v1568, 16
    %v1570 = vadd.s32 %v1569, %v1567
    %v1571 = vsel %vm783, %v1073, 2147483647
    %v1572 = vand.u32 %v1571, 65535
    %v1573 = vshra.s32 %v1571, 16
    %v1574 = vcvt.s32.f32 %v1572
    %v1575 = vcvt.s32.f32 %v1573
    %1576 = vmin.xlane.f32.xlu0 %v1575
    %v1577 = vpop.xlane.xlu0 %1576
    %vm1578 = vcmp.eq.f32.partialorder %v1575, %v1577
    %v1579 = vsel %vm1578, %v1574, inf
    %1580 = vmin.xlane.f32.xlu0 %v1579
    %v1581 = vpop.xlane.xlu0 %1580
    %v1582 = vcvt.f32.s32 %v1581
    %v1583 = vcvt.f32.s32 %v1577
    %v1584 = vshll.u32 %v1583, 16
    %v1585 = vadd.s32 %v1584, %v1582
    %v1586 = vsel %vm783, %v1074, 2147483647
    %v1587 = vand.u32 %v1586, 65535
    %v1588 = vshra.s32 %v1586, 16
    %v1589 = vcvt.s32.f32 %v1587
    %v1590 = vcvt.s32.f32 %v1588
    %1591 = vmin.xlane.f32.xlu0 %v1590
    %v1592 = vpop.xlane.xlu0 %1591
    %vm1593 = vcmp.eq.f32.partialorder %v1590, %v1592
    %v1594 = vsel %vm1593, %v1589, inf
    %1595 = vmin.xlane.f32.xlu0 %v1594
    %v1596 = vpop.xlane.xlu0 %1595
    %v1597 = vcvt.f32.s32 %v1596
    %v1598 = vcvt.f32.s32 %v1592
    %v1599 = vshll.u32 %v1598, 16
    %v1600 = vadd.s32 %v1599, %v1597
    %v1601 = vsel %vm783, %v1075, 2147483647
    %v1602 = vand.u32 %v1601, 65535
    %v1603 = vshra.s32 %v1601, 16
    %v1604 = vcvt.s32.f32 %v1602
    %v1605 = vcvt.s32.f32 %v1603
    %1606 = vmin.xlane.f32.xlu0 %v1605
    %v1607 = vpop.xlane.xlu0 %1606
    %vm1608 = vcmp.eq.f32.partialorder %v1605, %v1607
    %v1609 = vsel %vm1608, %v1604, inf
    %1610 = vmin.xlane.f32.xlu0 %v1609
    %v1611 = vpop.xlane.xlu0 %1610
    %v1612 = vcvt.f32.s32 %v1611
    %v1613 = vcvt.f32.s32 %v1607
    %v1614 = vshll.u32 %v1613, 16
    %v1615 = vadd.s32 %v1614, %v1612
    %v1616 = vsel %vm783, %v1076, 2147483647
    %v1617 = vand.u32 %v1616, 65535
    %v1618 = vshra.s32 %v1616, 16
    %v1619 = vcvt.s32.f32 %v1617
    %v1620 = vcvt.s32.f32 %v1618
    %1621 = vmin.xlane.f32.xlu0 %v1620
    %v1622 = vpop.xlane.xlu0 %1621
    %vm1623 = vcmp.eq.f32.partialorder %v1620, %v1622
    %v1624 = vsel %vm1623, %v1619, inf
    %1625 = vmin.xlane.f32.xlu0 %v1624
    %v1626 = vpop.xlane.xlu0 %1625
    %v1627 = vcvt.f32.s32 %v1626
    %v1628 = vcvt.f32.s32 %v1622
    %v1629 = vshll.u32 %v1628, 16
    %v1630 = vadd.s32 %v1629, %v1627
    %v1631 = vsel %vm783, %v1077, 2147483647
    %v1632 = vand.u32 %v1631, 65535
    %v1633 = vshra.s32 %v1631, 16
    %v1634 = vcvt.s32.f32 %v1632
    %v1635 = vcvt.s32.f32 %v1633
    %1636 = vmin.xlane.f32.xlu0 %v1635
    %v1637 = vpop.xlane.xlu0 %1636
    %vm1638 = vcmp.eq.f32.partialorder %v1635, %v1637
    %v1639 = vsel %vm1638, %v1634, inf
    %1640 = vmin.xlane.f32.xlu0 %v1639
    %v1641 = vpop.xlane.xlu0 %1640
    %v1642 = vcvt.f32.s32 %v1641
    %v1643 = vcvt.f32.s32 %v1637
    %v1644 = vshll.u32 %v1643, 16
    %v1645 = vadd.s32 %v1644, %v1642
    %v1646 = vsel %vm783, %v1078, 2147483647
    %v1647 = vand.u32 %v1646, 65535
    %v1648 = vshra.s32 %v1646, 16
    %v1649 = vcvt.s32.f32 %v1647
    %v1650 = vcvt.s32.f32 %v1648
    %1651 = vmin.xlane.f32.xlu0 %v1650
    %v1652 = vpop.xlane.xlu0 %1651
    %vm1653 = vcmp.eq.f32.partialorder %v1650, %v1652
    %v1654 = vsel %vm1653, %v1649, inf
    %1655 = vmin.xlane.f32.xlu0 %v1654
    %v1656 = vpop.xlane.xlu0 %1655
    %v1657 = vcvt.f32.s32 %v1656
    %v1658 = vcvt.f32.s32 %v1652
    %v1659 = vshll.u32 %v1658, 16
    %v1660 = vadd.s32 %v1659, %v1657
    %v1661 = vsel %vm783, %v1079, 2147483647
    %v1662 = vand.u32 %v1661, 65535
    %v1663 = vshra.s32 %v1661, 16
    %v1664 = vcvt.s32.f32 %v1662
    %v1665 = vcvt.s32.f32 %v1663
    %1666 = vmin.xlane.f32.xlu0 %v1665
    %v1667 = vpop.xlane.xlu0 %1666
    %vm1668 = vcmp.eq.f32.partialorder %v1665, %v1667
    %v1669 = vsel %vm1668, %v1664, inf
    %1670 = vmin.xlane.f32.xlu0 %v1669
    %v1671 = vpop.xlane.xlu0 %1670
    %v1672 = vcvt.f32.s32 %v1671
    %v1673 = vcvt.f32.s32 %v1667
    %v1674 = vshll.u32 %v1673, 16
    %v1675 = vadd.s32 %v1674, %v1672
    %v1676 = vsel %vm783, %v1080, 2147483647
    %v1677 = vand.u32 %v1676, 65535
    %v1678 = vshra.s32 %v1676, 16
    %v1679 = vcvt.s32.f32 %v1677
    %v1680 = vcvt.s32.f32 %v1678
    %1681 = vmin.xlane.f32.xlu0 %v1680
    %v1682 = vpop.xlane.xlu0 %1681
    %vm1683 = vcmp.eq.f32.partialorder %v1680, %v1682
    %v1684 = vsel %vm1683, %v1679, inf
    %1685 = vmin.xlane.f32.xlu0 %v1684
    %v1686 = vpop.xlane.xlu0 %1685
    %v1687 = vcvt.f32.s32 %v1686
    %v1688 = vcvt.f32.s32 %v1682
    %v1689 = vshll.u32 %v1688, 16
    %v1690 = vadd.s32 %v1689, %v1687
    %v1691 = vsel %vm783, %v1081, 2147483647
    %v1692 = vand.u32 %v1691, 65535
    %v1693 = vshra.s32 %v1691, 16
    %v1694 = vcvt.s32.f32 %v1692
    %v1695 = vcvt.s32.f32 %v1693
    %1696 = vmin.xlane.f32.xlu0 %v1695
    %v1697 = vpop.xlane.xlu0 %1696
    %vm1698 = vcmp.eq.f32.partialorder %v1695, %v1697
    %v1699 = vsel %vm1698, %v1694, inf
    %1700 = vmin.xlane.f32.xlu0 %v1699
    %v1701 = vpop.xlane.xlu0 %1700
    %v1702 = vcvt.f32.s32 %v1701
    %v1703 = vcvt.f32.s32 %v1697
    %v1704 = vshll.u32 %v1703, 16
    %v1705 = vadd.s32 %v1704, %v1702
    %v1706 = vsel %vm783, %v1082, 2147483647
    %v1707 = vand.u32 %v1706, 65535
    %v1708 = vshra.s32 %v1706, 16
    %v1709 = vcvt.s32.f32 %v1707
    %v1710 = vcvt.s32.f32 %v1708
    %1711 = vmin.xlane.f32.xlu0 %v1710
    %v1712 = vpop.xlane.xlu0 %1711
    %vm1713 = vcmp.eq.f32.partialorder %v1710, %v1712
    %v1714 = vsel %vm1713, %v1709, inf
    %1715 = vmin.xlane.f32.xlu0 %v1714
    %v1716 = vpop.xlane.xlu0 %1715
    %v1717 = vcvt.f32.s32 %v1716
    %v1718 = vcvt.f32.s32 %v1712
    %v1719 = vshll.u32 %v1718, 16
    %v1720 = vadd.s32 %v1719, %v1717
    %v1721 = vsel %vm783, %v1083, 2147483647
    %v1722 = vand.u32 %v1721, 65535
    %v1723 = vshra.s32 %v1721, 16
    %v1724 = vcvt.s32.f32 %v1722
    %v1725 = vcvt.s32.f32 %v1723
    %1726 = vmin.xlane.f32.xlu0 %v1725
    %v1727 = vpop.xlane.xlu0 %1726
    %vm1728 = vcmp.eq.f32.partialorder %v1725, %v1727
    %v1729 = vsel %vm1728, %v1724, inf
    %1730 = vmin.xlane.f32.xlu0 %v1729
    %v1731 = vpop.xlane.xlu0 %1730
    %v1732 = vcvt.f32.s32 %v1731
    %v1733 = vcvt.f32.s32 %v1727
    %v1734 = vshll.u32 %v1733, 16
    %v1735 = vadd.s32 %v1734, %v1732
    %v1736 = vsel %vm783, %v1084, 2147483647
    %v1737 = vand.u32 %v1736, 65535
    %v1738 = vshra.s32 %v1736, 16
    %v1739 = vcvt.s32.f32 %v1737
    %v1740 = vcvt.s32.f32 %v1738
    %1741 = vmin.xlane.f32.xlu0 %v1740
    %v1742 = vpop.xlane.xlu0 %1741
    %vm1743 = vcmp.eq.f32.partialorder %v1740, %v1742
    %v1744 = vsel %vm1743, %v1739, inf
    %1745 = vmin.xlane.f32.xlu0 %v1744
    %v1746 = vpop.xlane.xlu0 %1745
    %v1747 = vcvt.f32.s32 %v1746
    %v1748 = vcvt.f32.s32 %v1742
    %v1749 = vshll.u32 %v1748, 16
    %v1750 = vadd.s32 %v1749, %v1747
    %v1751 = vsel %vm783, %v1085, 2147483647
    %v1752 = vand.u32 %v1751, 65535
    %v1753 = vshra.s32 %v1751, 16
    %v1754 = vcvt.s32.f32 %v1752
    %v1755 = vcvt.s32.f32 %v1753
    %1756 = vmin.xlane.f32.xlu0 %v1755
    %v1757 = vpop.xlane.xlu0 %1756
    %vm1758 = vcmp.eq.f32.partialorder %v1755, %v1757
    %v1759 = vsel %vm1758, %v1754, inf
    %1760 = vmin.xlane.f32.xlu0 %v1759
    %v1761 = vpop.xlane.xlu0 %1760
    %v1762 = vcvt.f32.s32 %v1761
    %v1763 = vcvt.f32.s32 %v1757
    %v1764 = vshll.u32 %v1763, 16
    %v1765 = vadd.s32 %v1764, %v1762
    %v1766 = vsel %vm783, %v1086, 2147483647
    %v1767 = vand.u32 %v1766, 65535
    %v1768 = vshra.s32 %v1766, 16
    %v1769 = vcvt.s32.f32 %v1767
    %v1770 = vcvt.s32.f32 %v1768
    %1771 = vmin.xlane.f32.xlu0 %v1770
    %v1772 = vpop.xlane.xlu0 %1771
    %vm1773 = vcmp.eq.f32.partialorder %v1770, %v1772
    %v1774 = vsel %vm1773, %v1769, inf
    %1775 = vmin.xlane.f32.xlu0 %v1774
    %v1776 = vpop.xlane.xlu0 %1775
    %v1777 = vcvt.f32.s32 %v1776
    %v1778 = vcvt.f32.s32 %v1772
    %v1779 = vshll.u32 %v1778, 16
    %v1780 = vadd.s32 %v1779, %v1777
    %v1781 = vsel %vm783, %v1087, 2147483647
    %v1782 = vand.u32 %v1781, 65535
    %v1783 = vshra.s32 %v1781, 16
    %v1784 = vcvt.s32.f32 %v1782
    %v1785 = vcvt.s32.f32 %v1783
    %1786 = vmin.xlane.f32.xlu0 %v1785
    %v1787 = vpop.xlane.xlu0 %1786
    %vm1788 = vcmp.eq.f32.partialorder %v1785, %v1787
    %v1789 = vsel %vm1788, %v1784, inf
    %1790 = vmin.xlane.f32.xlu0 %v1789
    %v1791 = vpop.xlane.xlu0 %1790
    %v1792 = vcvt.f32.s32 %v1791
    %v1793 = vcvt.f32.s32 %v1787
    %v1794 = vshll.u32 %v1793, 16
    %v1795 = vadd.s32 %v1794, %v1792
    %v1796 = vsel %vm783, %v1088, 2147483647
    %v1797 = vand.u32 %v1796, 65535
    %v1798 = vshra.s32 %v1796, 16
    %v1799 = vcvt.s32.f32 %v1797
    %v1800 = vcvt.s32.f32 %v1798
    %1801 = vmin.xlane.f32.xlu0 %v1800
    %v1802 = vpop.xlane.xlu0 %1801
    %vm1803 = vcmp.eq.f32.partialorder %v1800, %v1802
    %v1804 = vsel %vm1803, %v1799, inf
    %1805 = vmin.xlane.f32.xlu0 %v1804
    %v1806 = vpop.xlane.xlu0 %1805
    %v1807 = vcvt.f32.s32 %v1806
    %v1808 = vcvt.f32.s32 %v1802
    %v1809 = vshll.u32 %v1808, 16
    %v1810 = vadd.s32 %v1809, %v1807
    %v1811 = vsel %vm783, %v1089, 2147483647
    %v1812 = vand.u32 %v1811, 65535
    %v1813 = vshra.s32 %v1811, 16
    %v1814 = vcvt.s32.f32 %v1812
    %v1815 = vcvt.s32.f32 %v1813
    %1816 = vmin.xlane.f32.xlu0 %v1815
    %v1817 = vpop.xlane.xlu0 %1816
    %vm1818 = vcmp.eq.f32.partialorder %v1815, %v1817
    %v1819 = vsel %vm1818, %v1814, inf
    %1820 = vmin.xlane.f32.xlu0 %v1819
    %v1821 = vpop.xlane.xlu0 %1820
    %v1822 = vcvt.f32.s32 %v1821
    %v1823 = vcvt.f32.s32 %v1817
    %v1824 = vshll.u32 %v1823, 16
    %v1825 = vadd.s32 %v1824, %v1822
    %v1826 = vsel %vm783, %v1090, 2147483647
    %v1827 = vand.u32 %v1826, 65535
    %v1828 = vshra.s32 %v1826, 16
    %v1829 = vcvt.s32.f32 %v1827
    %v1830 = vcvt.s32.f32 %v1828
    %1831 = vmin.xlane.f32.xlu0 %v1830
    %v1832 = vpop.xlane.xlu0 %1831
    %vm1833 = vcmp.eq.f32.partialorder %v1830, %v1832
    %v1834 = vsel %vm1833, %v1829, inf
    %1835 = vmin.xlane.f32.xlu0 %v1834
    %v1836 = vpop.xlane.xlu0 %1835
    %v1837 = vcvt.f32.s32 %v1836
    %v1838 = vcvt.f32.s32 %v1832
    %v1839 = vshll.u32 %v1838, 16
    %v1840 = vadd.s32 %v1839, %v1837
    %v1841 = vsel %vm783, %v1091, 2147483647
    %v1842 = vand.u32 %v1841, 65535
    %v1843 = vshra.s32 %v1841, 16
    %v1844 = vcvt.s32.f32 %v1842
    %v1845 = vcvt.s32.f32 %v1843
    %1846 = vmin.xlane.f32.xlu0 %v1845
    %v1847 = vpop.xlane.xlu0 %1846
    %vm1848 = vcmp.eq.f32.partialorder %v1845, %v1847
    %v1849 = vsel %vm1848, %v1844, inf
    %1850 = vmin.xlane.f32.xlu0 %v1849
    %v1851 = vpop.xlane.xlu0 %1850
    %v1852 = vcvt.f32.s32 %v1851
    %v1853 = vcvt.f32.s32 %v1847
    %v1854 = vshll.u32 %v1853, 16
    %v1855 = vadd.s32 %v1854, %v1852
    %v1856 = vsel %vm783, %v1092, 2147483647
    %v1857 = vand.u32 %v1856, 65535
    %v1858 = vshra.s32 %v1856, 16
    %v1859 = vcvt.s32.f32 %v1857
    %v1860 = vcvt.s32.f32 %v1858
    %1861 = vmin.xlane.f32.xlu0 %v1860
    %v1862 = vpop.xlane.xlu0 %1861
    %vm1863 = vcmp.eq.f32.partialorder %v1860, %v1862
    %v1864 = vsel %vm1863, %v1859, inf
    %1865 = vmin.xlane.f32.xlu0 %v1864
    %v1866 = vpop.xlane.xlu0 %1865
    %v1867 = vcvt.f32.s32 %v1866
    %v1868 = vcvt.f32.s32 %v1862
    %v1869 = vshll.u32 %v1868, 16
    %v1870 = vadd.s32 %v1869, %v1867
    %v1871 = vsel %vm783, %v1093, 2147483647
    %v1872 = vand.u32 %v1871, 65535
    %v1873 = vshra.s32 %v1871, 16
    %v1874 = vcvt.s32.f32 %v1872
    %v1875 = vcvt.s32.f32 %v1873
    %1876 = vmin.xlane.f32.xlu0 %v1875
    %v1877 = vpop.xlane.xlu0 %1876
    %vm1878 = vcmp.eq.f32.partialorder %v1875, %v1877
    %v1879 = vsel %vm1878, %v1874, inf
    %1880 = vmin.xlane.f32.xlu0 %v1879
    %v1881 = vpop.xlane.xlu0 %1880
    %v1882 = vcvt.f32.s32 %v1881
    %v1883 = vcvt.f32.s32 %v1877
    %v1884 = vshll.u32 %v1883, 16
    %v1885 = vadd.s32 %v1884, %v1882
    %v1886 = vsel %vm783, %v1094, 2147483647
    %v1887 = vand.u32 %v1886, 65535
    %v1888 = vshra.s32 %v1886, 16
    %v1889 = vcvt.s32.f32 %v1887
    %v1890 = vcvt.s32.f32 %v1888
    %1891 = vmin.xlane.f32.xlu0 %v1890
    %v1892 = vpop.xlane.xlu0 %1891
    %vm1893 = vcmp.eq.f32.partialorder %v1890, %v1892
    %v1894 = vsel %vm1893, %v1889, inf
    %1895 = vmin.xlane.f32.xlu0 %v1894
    %v1896 = vpop.xlane.xlu0 %1895
    %v1897 = vcvt.f32.s32 %v1896
    %v1898 = vcvt.f32.s32 %v1892
    %v1899 = vshll.u32 %v1898, 16
    %v1900 = vadd.s32 %v1899, %v1897
    %v1901 = vsel %vm783, %v1095, 2147483647
    %v1902 = vand.u32 %v1901, 65535
    %v1903 = vshra.s32 %v1901, 16
    %v1904 = vcvt.s32.f32 %v1902
    %v1905 = vcvt.s32.f32 %v1903
    %1906 = vmin.xlane.f32.xlu0 %v1905
    %v1907 = vpop.xlane.xlu0 %1906
    %vm1908 = vcmp.eq.f32.partialorder %v1905, %v1907
    %v1909 = vsel %vm1908, %v1904, inf
    %1910 = vmin.xlane.f32.xlu0 %v1909
    %v1911 = vpop.xlane.xlu0 %1910
    %v1912 = vcvt.f32.s32 %v1911
    %v1913 = vcvt.f32.s32 %v1907
    %v1914 = vshll.u32 %v1913, 16
    %v1915 = vadd.s32 %v1914, %v1912
    %v1916 = vsel %vm783, %v1096, 2147483647
    %v1917 = vand.u32 %v1916, 65535
    %v1918 = vshra.s32 %v1916, 16
    %v1919 = vcvt.s32.f32 %v1917
    %v1920 = vcvt.s32.f32 %v1918
    %1921 = vmin.xlane.f32.xlu0 %v1920
    %v1922 = vpop.xlane.xlu0 %1921
    %vm1923 = vcmp.eq.f32.partialorder %v1920, %v1922
    %v1924 = vsel %vm1923, %v1919, inf
    %1925 = vmin.xlane.f32.xlu0 %v1924
    %v1926 = vpop.xlane.xlu0 %1925
    %v1927 = vcvt.f32.s32 %v1926
    %v1928 = vcvt.f32.s32 %v1922
    %v1929 = vshll.u32 %v1928, 16
    %v1930 = vadd.s32 %v1929, %v1927
    %v1931 = vsel %vm783, %v1097, 2147483647
    %v1932 = vand.u32 %v1931, 65535
    %v1933 = vshra.s32 %v1931, 16
    %v1934 = vcvt.s32.f32 %v1932
    %v1935 = vcvt.s32.f32 %v1933
    %1936 = vmin.xlane.f32.xlu0 %v1935
    %v1937 = vpop.xlane.xlu0 %1936
    %vm1938 = vcmp.eq.f32.partialorder %v1935, %v1937
    %v1939 = vsel %vm1938, %v1934, inf
    %1940 = vmin.xlane.f32.xlu0 %v1939
    %v1941 = vpop.xlane.xlu0 %1940
    %v1942 = vcvt.f32.s32 %v1941
    %v1943 = vcvt.f32.s32 %v1937
    %v1944 = vshll.u32 %v1943, 16
    %v1945 = vadd.s32 %v1944, %v1942
    %v1946 = vsel %vm783, %v1098, 2147483647
    %v1947 = vand.u32 %v1946, 65535
    %v1948 = vshra.s32 %v1946, 16
    %v1949 = vcvt.s32.f32 %v1947
    %v1950 = vcvt.s32.f32 %v1948
    %1951 = vmin.xlane.f32.xlu0 %v1950
    %v1952 = vpop.xlane.xlu0 %1951
    %vm1953 = vcmp.eq.f32.partialorder %v1950, %v1952
    %v1954 = vsel %vm1953, %v1949, inf
    %1955 = vmin.xlane.f32.xlu0 %v1954
    %v1956 = vpop.xlane.xlu0 %1955
    %v1957 = vcvt.f32.s32 %v1956
    %v1958 = vcvt.f32.s32 %v1952
    %v1959 = vshll.u32 %v1958, 16
    %v1960 = vadd.s32 %v1959, %v1957
    %v1961 = vsel %vm783, %v1099, 2147483647
    %v1962 = vand.u32 %v1961, 65535
    %v1963 = vshra.s32 %v1961, 16
    %v1964 = vcvt.s32.f32 %v1962
    %v1965 = vcvt.s32.f32 %v1963
    %1966 = vmin.xlane.f32.xlu0 %v1965
    %v1967 = vpop.xlane.xlu0 %1966
    %vm1968 = vcmp.eq.f32.partialorder %v1965, %v1967
    %v1969 = vsel %vm1968, %v1964, inf
    %1970 = vmin.xlane.f32.xlu0 %v1969
    %v1971 = vpop.xlane.xlu0 %1970
    %v1972 = vcvt.f32.s32 %v1971
    %v1973 = vcvt.f32.s32 %v1967
    %v1974 = vshll.u32 %v1973, 16
    %v1975 = vadd.s32 %v1974, %v1972
    %v1976 = vsel %vm783, %v1100, 2147483647
    %v1977 = vand.u32 %v1976, 65535
    %v1978 = vshra.s32 %v1976, 16
    %v1979 = vcvt.s32.f32 %v1977
    %v1980 = vcvt.s32.f32 %v1978
    %1981 = vmin.xlane.f32.xlu0 %v1980
    %v1982 = vpop.xlane.xlu0 %1981
    %vm1983 = vcmp.eq.f32.partialorder %v1980, %v1982
    %v1984 = vsel %vm1983, %v1979, inf
    %1985 = vmin.xlane.f32.xlu0 %v1984
    %v1986 = vpop.xlane.xlu0 %1985
    %v1987 = vcvt.f32.s32 %v1986
    %v1988 = vcvt.f32.s32 %v1982
    %v1989 = vshll.u32 %v1988, 16
    %v1990 = vadd.s32 %v1989, %v1987
    %v1991 = vsel %vm783, %v1101, 2147483647
    %v1992 = vand.u32 %v1991, 65535
    %v1993 = vshra.s32 %v1991, 16
    %v1994 = vcvt.s32.f32 %v1992
    %v1995 = vcvt.s32.f32 %v1993
    %1996 = vmin.xlane.f32.xlu0 %v1995
    %v1997 = vpop.xlane.xlu0 %1996
    %vm1998 = vcmp.eq.f32.partialorder %v1995, %v1997
    %v1999 = vsel %vm1998, %v1994, inf
    %2000 = vmin.xlane.f32.xlu0 %v1999
    %v2001 = vpop.xlane.xlu0 %2000
    %v2002 = vcvt.f32.s32 %v2001
    %v2003 = vcvt.f32.s32 %v1997
    %v2004 = vshll.u32 %v2003, 16
    %v2005 = vadd.s32 %v2004, %v2002
    %v2006 = vsel %vm783, %v1102, 2147483647
    %v2007 = vand.u32 %v2006, 65535
    %v2008 = vshra.s32 %v2006, 16
    %v2009 = vcvt.s32.f32 %v2007
    %v2010 = vcvt.s32.f32 %v2008
    %2011 = vmin.xlane.f32.xlu0 %v2010
    %v2012 = vpop.xlane.xlu0 %2011
    %vm2013 = vcmp.eq.f32.partialorder %v2010, %v2012
    %v2014 = vsel %vm2013, %v2009, inf
    %2015 = vmin.xlane.f32.xlu0 %v2014
    %v2016 = vpop.xlane.xlu0 %2015
    %v2017 = vcvt.f32.s32 %v2016
    %v2018 = vcvt.f32.s32 %v2012
    %v2019 = vshll.u32 %v2018, 16
    %v2020 = vadd.s32 %v2019, %v2017
    %v2021 = vsel %vm783, %v1103, 2147483647
    %v2022 = vand.u32 %v2021, 65535
    %v2023 = vshra.s32 %v2021, 16
    %v2024 = vcvt.s32.f32 %v2022
    %v2025 = vcvt.s32.f32 %v2023
    %2026 = vmin.xlane.f32.xlu0 %v2025
    %v2027 = vpop.xlane.xlu0 %2026
    %vm2028 = vcmp.eq.f32.partialorder %v2025, %v2027
    %v2029 = vsel %vm2028, %v2024, inf
    %2030 = vmin.xlane.f32.xlu0 %v2029
    %v2031 = vpop.xlane.xlu0 %2030
    %v2032 = vcvt.f32.s32 %v2031
    %v2033 = vcvt.f32.s32 %v2027
    %v2034 = vshll.u32 %v2033, 16
    %v2035 = vadd.s32 %v2034, %v2032
    %v2036 = vsel %vm783, %v1104, 2147483647
    %v2037 = vand.u32 %v2036, 65535
    %v2038 = vshra.s32 %v2036, 16
    %v2039 = vcvt.s32.f32 %v2037
    %v2040 = vcvt.s32.f32 %v2038
    %2041 = vmin.xlane.f32.xlu0 %v2040
    %v2042 = vpop.xlane.xlu0 %2041
    %vm2043 = vcmp.eq.f32.partialorder %v2040, %v2042
    %v2044 = vsel %vm2043, %v2039, inf
    %2045 = vmin.xlane.f32.xlu0 %v2044
    %v2046 = vpop.xlane.xlu0 %2045
    %v2047 = vcvt.f32.s32 %v2046
    %v2048 = vcvt.f32.s32 %v2042
    %v2049 = vshll.u32 %v2048, 16
    %v2050 = vadd.s32 %v2049, %v2047
    %v2051 = vsel %vm783, %v1105, 2147483647
    %v2052 = vand.u32 %v2051, 65535
    %v2053 = vshra.s32 %v2051, 16
    %v2054 = vcvt.s32.f32 %v2052
    %v2055 = vcvt.s32.f32 %v2053
    %2056 = vmin.xlane.f32.xlu0 %v2055
    %v2057 = vpop.xlane.xlu0 %2056
    %vm2058 = vcmp.eq.f32.partialorder %v2055, %v2057
    %v2059 = vsel %vm2058, %v2054, inf
    %2060 = vmin.xlane.f32.xlu0 %v2059
    %v2061 = vpop.xlane.xlu0 %2060
    %v2062 = vcvt.f32.s32 %v2061
    %v2063 = vcvt.f32.s32 %v2057
    %v2064 = vshll.u32 %v2063, 16
    %v2065 = vadd.s32 %v2064, %v2062
    %vm2066 = vcmp.eq.s32.totalorder %v977, %v1120
    %vm2067 = vcmp.eq.s32.totalorder %v977, %v1135
    %vm2068 = vcmp.eq.s32.totalorder %v977, %v1150
    %vm2069 = vcmp.eq.s32.totalorder %v977, %v1165
    %vm2070 = vcmp.eq.s32.totalorder %v977, %v1180
    %vm2071 = vcmp.eq.s32.totalorder %v977, %v1195
    %vm2072 = vcmp.eq.s32.totalorder %v977, %v1210
    %vm2073 = vcmp.eq.s32.totalorder %v977, %v1225
    %vm2074 = vcmp.eq.s32.totalorder %v977, %v1240
    %vm2075 = vcmp.eq.s32.totalorder %v977, %v1255
    %vm2076 = vcmp.eq.s32.totalorder %v977, %v1270
    %vm2077 = vcmp.eq.s32.totalorder %v977, %v1285
    %vm2078 = vcmp.eq.s32.totalorder %v977, %v1300
    %vm2079 = vcmp.eq.s32.totalorder %v977, %v1315
    %vm2080 = vcmp.eq.s32.totalorder %v977, %v1330
    %vm2081 = vcmp.eq.s32.totalorder %v977, %v1345
    %vm2082 = vcmp.eq.s32.totalorder %v977, %v1360
    %vm2083 = vcmp.eq.s32.totalorder %v977, %v1375
    %vm2084 = vcmp.eq.s32.totalorder %v977, %v1390
    %vm2085 = vcmp.eq.s32.totalorder %v977, %v1405
    %vm2086 = vcmp.eq.s32.totalorder %v977, %v1420
    %vm2087 = vcmp.eq.s32.totalorder %v977, %v1435
    %vm2088 = vcmp.eq.s32.totalorder %v977, %v1450
    %vm2089 = vcmp.eq.s32.totalorder %v977, %v1465
    %vm2090 = vcmp.eq.s32.totalorder %v977, %v1480
    %vm2091 = vcmp.eq.s32.totalorder %v977, %v1495
    %vm2092 = vcmp.eq.s32.totalorder %v977, %v1510
    %vm2093 = vcmp.eq.s32.totalorder %v977, %v1525
    %vm2094 = vcmp.eq.s32.totalorder %v977, %v1540
    %vm2095 = vcmp.eq.s32.totalorder %v977, %v1555
    %vm2096 = vcmp.eq.s32.totalorder %v977, %v1570
    %vm2097 = vcmp.eq.s32.totalorder %v977, %v1585
    %vm2098 = vcmp.eq.s32.totalorder %v977, %v1600
    %vm2099 = vcmp.eq.s32.totalorder %v977, %v1615
    %vm2100 = vcmp.eq.s32.totalorder %v977, %v1630
    %vm2101 = vcmp.eq.s32.totalorder %v977, %v1645
    %vm2102 = vcmp.eq.s32.totalorder %v977, %v1660
    %vm2103 = vcmp.eq.s32.totalorder %v977, %v1675
    %vm2104 = vcmp.eq.s32.totalorder %v977, %v1690
    %vm2105 = vcmp.eq.s32.totalorder %v977, %v1705
    %vm2106 = vcmp.eq.s32.totalorder %v977, %v1720
    %vm2107 = vcmp.eq.s32.totalorder %v977, %v1735
    %vm2108 = vcmp.eq.s32.totalorder %v977, %v1750
    %vm2109 = vcmp.eq.s32.totalorder %v977, %v1765
    %vm2110 = vcmp.eq.s32.totalorder %v977, %v1780
    %vm2111 = vcmp.eq.s32.totalorder %v977, %v1795
    %vm2112 = vcmp.eq.s32.totalorder %v977, %v1810
    %vm2113 = vcmp.eq.s32.totalorder %v977, %v1825
    %vm2114 = vcmp.eq.s32.totalorder %v977, %v1840
    %vm2115 = vcmp.eq.s32.totalorder %v977, %v1855
    %vm2116 = vcmp.eq.s32.totalorder %v977, %v1870
    %vm2117 = vcmp.eq.s32.totalorder %v977, %v1885
    %vm2118 = vcmp.eq.s32.totalorder %v977, %v1900
    %vm2119 = vcmp.eq.s32.totalorder %v977, %v1915
    %vm2120 = vcmp.eq.s32.totalorder %v977, %v1930
    %vm2121 = vcmp.eq.s32.totalorder %v977, %v1945
    %vm2122 = vcmp.eq.s32.totalorder %v977, %v1960
    %vm2123 = vcmp.eq.s32.totalorder %v977, %v1975
    %vm2124 = vcmp.eq.s32.totalorder %v977, %v1990
    %vm2125 = vcmp.eq.s32.totalorder %v977, %v2005
    %vm2126 = vcmp.eq.s32.totalorder %v977, %v2020
    %vm2127 = vcmp.eq.s32.totalorder %v977, %v2035
    %vm2128 = vcmp.eq.s32.totalorder %v977, %v2050
    %vm2129 = vcmp.eq.s32.totalorder %v977, %v2065
    %v2130 = vsel %vm2066, 1, 0
    %v2131 = vsel %vm2067, 1, 0
    %v2132 = vsel %vm2068, 1, 0
    %v2133 = vsel %vm2069, 1, 0
    %v2134 = vsel %vm2070, 1, 0
    %v2135 = vsel %vm2071, 1, 0
    %v2136 = vsel %vm2072, 1, 0
    %v2137 = vsel %vm2073, 1, 0
    %v2138 = vsel %vm2074, 1, 0
    %v2139 = vsel %vm2075, 1, 0
    %v2140 = vsel %vm2076, 1, 0
    %v2141 = vsel %vm2077, 1, 0
    %v2142 = vsel %vm2078, 1, 0
    %v2143 = vsel %vm2079, 1, 0
    %v2144 = vsel %vm2080, 1, 0
    %v2145 = vsel %vm2081, 1, 0
    %v2146 = vsel %vm2082, 1, 0
    %v2147 = vsel %vm2083, 1, 0
    %v2148 = vsel %vm2084, 1, 0
    %v2149 = vsel %vm2085, 1, 0
    %v2150 = vsel %vm2086, 1, 0
    %v2151 = vsel %vm2087, 1, 0
    %v2152 = vsel %vm2088, 1, 0
    %v2153 = vsel %vm2089, 1, 0
    %v2154 = vsel %vm2090, 1, 0
    %v2155 = vsel %vm2091, 1, 0
    %v2156 = vsel %vm2092, 1, 0
    %v2157 = vsel %vm2093, 1, 0
    %v2158 = vsel %vm2094, 1, 0
    %v2159 = vsel %vm2095, 1, 0
    %v2160 = vsel %vm2096, 1, 0
    %v2161 = vsel %vm2097, 1, 0
    %v2162 = vsel %vm2098, 1, 0
    %v2163 = vsel %vm2099, 1, 0
    %v2164 = vsel %vm2100, 1, 0
    %v2165 = vsel %vm2101, 1, 0
    %v2166 = vsel %vm2102, 1, 0
    %v2167 = vsel %vm2103, 1, 0
    %v2168 = vsel %vm2104, 1, 0
    %v2169 = vsel %vm2105, 1, 0
    %v2170 = vsel %vm2106, 1, 0
    %v2171 = vsel %vm2107, 1, 0
    %v2172 = vsel %vm2108, 1, 0
    %v2173 = vsel %vm2109, 1, 0
    %v2174 = vsel %vm2110, 1, 0
    %v2175 = vsel %vm2111, 1, 0
    %v2176 = vsel %vm2112, 1, 0
    %v2177 = vsel %vm2113, 1, 0
    %v2178 = vsel %vm2114, 1, 0
    %v2179 = vsel %vm2115, 1, 0
    %v2180 = vsel %vm2116, 1, 0
    %v2181 = vsel %vm2117, 1, 0
    %v2182 = vsel %vm2118, 1, 0
    %v2183 = vsel %vm2119, 1, 0
    %v2184 = vsel %vm2120, 1, 0
    %v2185 = vsel %vm2121, 1, 0
    %v2186 = vsel %vm2122, 1, 0
    %v2187 = vsel %vm2123, 1, 0
    %v2188 = vsel %vm2124, 1, 0
    %v2189 = vsel %vm2125, 1, 0
    %v2190 = vsel %vm2126, 1, 0
    %v2191 = vsel %vm2127, 1, 0
    %v2192 = vsel %vm2128, 1, 0
    %v2193 = vsel %vm2129, 1, 0
    %v2194 = vcvt.s32.f32 %v2130
    %v2195 = vcvt.s32.f32 %v2131
    %v2196 = vcvt.s32.f32 %v2132
    %v2197 = vcvt.s32.f32 %v2133
    %v2198 = vcvt.s32.f32 %v2134
    %v2199 = vcvt.s32.f32 %v2135
    %v2200 = vcvt.s32.f32 %v2136
    %v2201 = vcvt.s32.f32 %v2137
    %v2202 = vcvt.s32.f32 %v2138
    %v2203 = vcvt.s32.f32 %v2139
    %v2204 = vcvt.s32.f32 %v2140
    %v2205 = vcvt.s32.f32 %v2141
    %v2206 = vcvt.s32.f32 %v2142
    %v2207 = vcvt.s32.f32 %v2143
    %v2208 = vcvt.s32.f32 %v2144
    %v2209 = vcvt.s32.f32 %v2145
    %v2210 = vcvt.s32.f32 %v2146
    %v2211 = vcvt.s32.f32 %v2147
    %v2212 = vcvt.s32.f32 %v2148
    %v2213 = vcvt.s32.f32 %v2149
    %v2214 = vcvt.s32.f32 %v2150
    %v2215 = vcvt.s32.f32 %v2151
    %v2216 = vcvt.s32.f32 %v2152
    %v2217 = vcvt.s32.f32 %v2153
    %v2218 = vcvt.s32.f32 %v2154
    %v2219 = vcvt.s32.f32 %v2155
    %v2220 = vcvt.s32.f32 %v2156
    %v2221 = vcvt.s32.f32 %v2157
    %v2222 = vcvt.s32.f32 %v2158
    %v2223 = vcvt.s32.f32 %v2159
    %v2224 = vcvt.s32.f32 %v2160
    %v2225 = vcvt.s32.f32 %v2161
    %v2226 = vcvt.s32.f32 %v2162
    %v2227 = vcvt.s32.f32 %v2163
    %v2228 = vcvt.s32.f32 %v2164
    %v2229 = vcvt.s32.f32 %v2165
    %v2230 = vcvt.s32.f32 %v2166
    %v2231 = vcvt.s32.f32 %v2167
    %v2232 = vcvt.s32.f32 %v2168
    %v2233 = vcvt.s32.f32 %v2169
    %v2234 = vcvt.s32.f32 %v2170
    %v2235 = vcvt.s32.f32 %v2171
    %v2236 = vcvt.s32.f32 %v2172
    %v2237 = vcvt.s32.f32 %v2173
    %v2238 = vcvt.s32.f32 %v2174
    %v2239 = vcvt.s32.f32 %v2175
    %v2240 = vcvt.s32.f32 %v2176
    %v2241 = vcvt.s32.f32 %v2177
    %v2242 = vcvt.s32.f32 %v2178
    %v2243 = vcvt.s32.f32 %v2179
    %v2244 = vcvt.s32.f32 %v2180
    %v2245 = vcvt.s32.f32 %v2181
    %v2246 = vcvt.s32.f32 %v2182
    %v2247 = vcvt.s32.f32 %v2183
    %v2248 = vcvt.s32.f32 %v2184
    %v2249 = vcvt.s32.f32 %v2185
    %v2250 = vcvt.s32.f32 %v2186
    %v2251 = vcvt.s32.f32 %v2187
    %v2252 = vcvt.s32.f32 %v2188
    %v2253 = vcvt.s32.f32 %v2189
    %v2254 = vcvt.s32.f32 %v2190
    %v2255 = vcvt.s32.f32 %v2191
    %v2256 = vcvt.s32.f32 %v2192
    %v2257 = vcvt.s32.f32 %v2193
    %v2259 = vsel %vm783, %v2194, 0
    %v2262 = vsel %vm783, %v2195, 0
    %v2265 = vsel %vm783, %v2196, 0
    %v2268 = vsel %vm783, %v2197, 0
    %v2271 = vsel %vm783, %v2198, 0
    %v2274 = vsel %vm783, %v2199, 0
    %v2277 = vsel %vm783, %v2200, 0
    %v2280 = vsel %vm783, %v2201, 0
    %v2283 = vsel %vm783, %v2202, 0
    %v2286 = vsel %vm783, %v2203, 0
    %v2289 = vsel %vm783, %v2204, 0
    %v2292 = vsel %vm783, %v2205, 0
    %v2295 = vsel %vm783, %v2206, 0
    %v2298 = vsel %vm783, %v2207, 0
    %v2301 = vsel %vm783, %v2208, 0
    %v2304 = vsel %vm783, %v2209, 0
    %v2307 = vsel %vm783, %v2210, 0
    %v2310 = vsel %vm783, %v2211, 0
    %v2313 = vsel %vm783, %v2212, 0
    %v2316 = vsel %vm783, %v2213, 0
    %v2319 = vsel %vm783, %v2214, 0
    %v2322 = vsel %vm783, %v2215, 0
    %v2325 = vsel %vm783, %v2216, 0
    %v2328 = vsel %vm783, %v2217, 0
    %v2331 = vsel %vm783, %v2218, 0
    %v2334 = vsel %vm783, %v2219, 0
    %v2337 = vsel %vm783, %v2220, 0
    %v2340 = vsel %vm783, %v2221, 0
    %v2343 = vsel %vm783, %v2222, 0
    %v2346 = vsel %vm783, %v2223, 0
    %v2349 = vsel %vm783, %v2224, 0
    %v2352 = vsel %vm783, %v2225, 0
    %v2355 = vsel %vm783, %v2226, 0
    %v2358 = vsel %vm783, %v2227, 0
    %v2361 = vsel %vm783, %v2228, 0
    %v2364 = vsel %vm783, %v2229, 0
    %v2367 = vsel %vm783, %v2230, 0
    %v2370 = vsel %vm783, %v2231, 0
    %v2373 = vsel %vm783, %v2232, 0
    %v2376 = vsel %vm783, %v2233, 0
    %v2379 = vsel %vm783, %v2234, 0
    %v2382 = vsel %vm783, %v2235, 0
    %v2385 = vsel %vm783, %v2236, 0
    %v2388 = vsel %vm783, %v2237, 0
    %v2391 = vsel %vm783, %v2238, 0
    %v2394 = vsel %vm783, %v2239, 0
    %v2397 = vsel %vm783, %v2240, 0
    %v2400 = vsel %vm783, %v2241, 0
    %v2403 = vsel %vm783, %v2242, 0
    %v2406 = vsel %vm783, %v2243, 0
    %v2409 = vsel %vm783, %v2244, 0
    %v2412 = vsel %vm783, %v2245, 0
    %v2415 = vsel %vm783, %v2246, 0
    %v2418 = vsel %vm783, %v2247, 0
    %v2421 = vsel %vm783, %v2248, 0
    %v2424 = vsel %vm783, %v2249, 0
    %v2427 = vsel %vm783, %v2250, 0
    %v2430 = vsel %vm783, %v2251, 0
    %v2433 = vsel %vm783, %v2252, 0
    %v2436 = vsel %vm783, %v2253, 0
    %v2439 = vsel %vm783, %v2254, 0
    %v2442 = vsel %vm783, %v2255, 0
    %v2445 = vsel %vm783, %v2256, 0
    %v2448 = vsel %vm783, %v2257, 0
    %2450 = vmatprep.subr.mxu0 0.0
    %2451 = vmatpush1.msra.mxu0 %v126
    %2452 = vmatprep.subr.mxu0 0.0
    %2453 = vmatpush1.msra.mxu0 %v127
    %2454 = vmatprep.subr.mxu0 0.0
    %2455 = vmatpush1.msra.mxu0 0.0
    %2456 = vmatprep.subr.mxu0 0.0
    %2457 = vmatpush1.msra.mxu0 0.0
    %2458 = vmatprep.subr.mxu0 0.0
    %2459 = vmatpush1.msra.mxu0 0.0
    %2460 = vmatprep.subr.mxu0 0.0
    %2461 = vmatpush1.msra.mxu0 0.0
    %2462 = vmatprep.subr.mxu0 0.0
    %2463 = vmatpush1.msra.mxu0 0.0
    %2464 = vmatprep.subr.mxu0 0.0
    %2465 = vmatpush1.msra.mxu0 0.0
    %2466 = vmatprep.subr.mxu0 0.0
    %2467 = vmatpush1.msra.mxu0 0.0
    %2468 = vmatprep.subr.mxu0 0.0
    %2469 = vmatpush1.msra.mxu0 0.0
    %2470 = vmatprep.subr.mxu0 0.0
    %2471 = vmatpush1.msra.mxu0 0.0
    %2472 = vmatprep.subr.mxu0 0.0
    %2473 = vmatpush1.msra.mxu0 0.0
    %2474 = vmatprep.subr.mxu0 0.0
    %2475 = vmatpush1.msra.mxu0 0.0
    %2476 = vmatprep.subr.mxu0 0.0
    %2477 = vmatpush1.msra.mxu0 0.0
    %2478 = vmatprep.subr.mxu0 0.0
    %2479 = vmatpush1.msra.mxu0 0.0
    %2480 = vmatprep.subr.mxu0 0.0
    %2481 = vmatpush1.msra.mxu0 0.0
    %2482 = vmatprep.subr.mxu0 0.0
    %2483 = vmatpush1.msra.mxu0 0.0
    %2484 = vmatprep.subr.mxu0 0.0
    %2485 = vmatpush1.msra.mxu0 0.0
    %2486 = vmatprep.subr.mxu0 0.0
    %2487 = vmatpush1.msra.mxu0 0.0
    %2488 = vmatprep.subr.mxu0 0.0
    %2489 = vmatpush1.msra.mxu0 0.0
    %2490 = vmatprep.subr.mxu0 0.0
    %2491 = vmatpush1.msra.mxu0 0.0
    %2492 = vmatprep.subr.mxu0 0.0
    %2493 = vmatpush1.msra.mxu0 0.0
    %2494 = vmatprep.subr.mxu0 0.0
    %2495 = vmatpush1.msra.mxu0 0.0
    %2496 = vmatprep.subr.mxu0 0.0
    %2497 = vmatpush1.msra.mxu0 0.0
    %2498 = vmatprep.subr.mxu0 0.0
    %2499 = vmatpush1.msra.mxu0 0.0
    %2500 = vmatprep.subr.mxu0 0.0
    %2501 = vmatpush1.msra.mxu0 0.0
    %2502 = vmatprep.subr.mxu0 0.0
    %2503 = vmatpush1.msra.mxu0 0.0
    %2504 = vmatprep.subr.mxu0 0.0
    %2505 = vmatpush1.msra.mxu0 0.0
    %2506 = vmatprep.subr.mxu0 0.0
    %2507 = vmatpush1.msra.mxu0 0.0
    %2508 = vmatprep.subr.mxu0 0.0
    %2509 = vmatpush1.msra.mxu0 0.0
    %2510 = vmatprep.subr.mxu0 0.0
    %2511 = vmatpush1.msra.mxu0 0.0
    %2512 = vmatprep.subr.mxu0 0.0
    %2513 = vmatpush1.msra.mxu0 0.0
    %2514 = vmatprep.mubr.f32.mxu0 0.0
    %2515 = vmatmul.mubr.f32.gmra.mrb[0].mxu0 %v2259
    %v2516 = vpop.f32.mrb[0].mxu0
    %v2517 = vadd.f32 0.0, %v2516
    %v2518 = vpop.f32.mrb[0].mxu0
    %2519 = vmatprep.mubr.f32.mxu0 0.0
    %2520 = vmatmul.mubr.f32.gmra.mrb[0].mxu0 %v2262
    %v2521 = vpop.f32.mrb[0].mxu0
    %v2522 = vadd.f32 0.0, %v2521
    %v2523 = vpop.f32.mrb[0].mxu0
    %2524 = vmatprep.mubr.f32.mxu0 0.0
    %2525 = vmatmul.mubr.f32.gmra.mrb[0].mxu0 %v2265
    %v2526 = vpop.f32.mrb[0].mxu0
    %v2527 = vadd.f32 0.0, %v2526
    %v2528 = vpop.f32.mrb[0].mxu0
    %2529 = vmatprep.mubr.f32.mxu0 0.0
    %2530 = vmatmul.mubr.f32.gmra.mrb[0].mxu0 %v2268
    %v2531 = vpop.f32.mrb[0].mxu0
    %v2532 = vadd.f32 0.0, %v2531
    %v2533 = vpop.f32.mrb[0].mxu0
    %2534 = vmatprep.mubr.f32.mxu0 0.0
    %2535 = vmatmul.mubr.f32.gmra.mrb[0].mxu0 %v2271
    %v2536 = vpop.f32.mrb[0].mxu0
    %v2537 = vadd.f32 0.0, %v2536
    %v2538 = vpop.f32.mrb[0].mxu0
    %2539 = vmatprep.mubr.f32.mxu0 0.0
    %2540 = vmatmul.mubr.f32.gmra.mrb[0].mxu0 %v2274
    %v2541 = vpop.f32.mrb[0].mxu0
    %v2542 = vadd.f32 0.0, %v2541
    %v2543 = vpop.f32.mrb[0].mxu0
    %2544 = vmatprep.mubr.f32.mxu0 0.0
    %2545 = vmatmul.mubr.f32.gmra.mrb[0].mxu0 %v2277
    %v2546 = vpop.f32.mrb[0].mxu0
    %v2547 = vadd.f32 0.0, %v2546
    %v2548 = vpop.f32.mrb[0].mxu0
    %2549 = vmatprep.mubr.f32.mxu0 0.0
    %2550 = vmatmul.mubr.f32.gmra.mrb[0].mxu0 %v2280
    %v2551 = vpop.f32.mrb[0].mxu0
    %v2552 = vadd.f32 0.0, %v2551
    %v2553 = vpop.f32.mrb[0].mxu0
    %2554 = vmatprep.mubr.f32.mxu0 0.0
    %2555 = vmatmul.mubr.f32.gmra.mrb[0].mxu0 %v2283
    %v2556 = vpop.f32.mrb[0].mxu0
    %v2557 = vadd.f32 0.0, %v2556
    %v2558 = vpop.f32.mrb[0].mxu0
    %2559 = vmatprep.mubr.f32.mxu0 0.0
    %2560 = vmatmul.mubr.f32.gmra.mrb[0].mxu0 %v2286
    %v2561 = vpop.f32.mrb[0].mxu0
    %v2562 = vadd.f32 0.0, %v2561
    %v2563 = vpop.f32.mrb[0].mxu0
    %2564 = vmatprep.mubr.f32.mxu0 0.0
    %2565 = vmatmul.mubr.f32.gmra.mrb[0].mxu0 %v2289
    %v2566 = vpop.f32.mrb[0].mxu0
    %v2567 = vadd.f32 0.0, %v2566
    %v2568 = vpop.f32.mrb[0].mxu0
    %2569 = vmatprep.mubr.f32.mxu0 0.0
    %2570 = vmatmul.mubr.f32.gmra.mrb[0].mxu0 %v2292
    %v2571 = vpop.f32.mrb[0].mxu0
    %v2572 = vadd.f32 0.0, %v2571
    %v2573 = vpop.f32.mrb[0].mxu0
    %2574 = vmatprep.mubr.f32.mxu0 0.0
    %2575 = vmatmul.mubr.f32.gmra.mrb[0].mxu0 %v2295
    %v2576 = vpop.f32.mrb[0].mxu0
    %v2577 = vadd.f32 0.0, %v2576
    %v2578 = vpop.f32.mrb[0].mxu0
    %2579 = vmatprep.mubr.f32.mxu0 0.0
    %2580 = vmatmul.mubr.f32.gmra.mrb[0].mxu0 %v2298
    %v2581 = vpop.f32.mrb[0].mxu0
    %v2582 = vadd.f32 0.0, %v2581
    %v2583 = vpop.f32.mrb[0].mxu0
    %2584 = vmatprep.mubr.f32.mxu0 0.0
    %2585 = vmatmul.mubr.f32.gmra.mrb[0].mxu0 %v2301
    %v2586 = vpop.f32.mrb[0].mxu0
    %v2587 = vadd.f32 0.0, %v2586
    %v2588 = vpop.f32.mrb[0].mxu0
    %2589 = vmatprep.mubr.f32.mxu0 0.0
    %2590 = vmatmul.mubr.f32.gmra.mrb[0].mxu0 %v2304
    %v2591 = vpop.f32.mrb[0].mxu0
    %v2592 = vadd.f32 0.0, %v2591
    %v2593 = vpop.f32.mrb[0].mxu0
    %2594 = vmatprep.mubr.f32.mxu0 0.0
    %2595 = vmatmul.mubr.f32.gmra.mrb[0].mxu0 %v2307
    %v2596 = vpop.f32.mrb[0].mxu0
    %v2597 = vadd.f32 0.0, %v2596
    %v2598 = vpop.f32.mrb[0].mxu0
    %2599 = vmatprep.mubr.f32.mxu0 0.0
    %2600 = vmatmul.mubr.f32.gmra.mrb[0].mxu0 %v2310
    %v2601 = vpop.f32.mrb[0].mxu0
    %v2602 = vadd.f32 0.0, %v2601
    %v2603 = vpop.f32.mrb[0].mxu0
    %2604 = vmatprep.mubr.f32.mxu0 0.0
    %2605 = vmatmul.mubr.f32.gmra.mrb[0].mxu0 %v2313
    %v2606 = vpop.f32.mrb[0].mxu0
    %v2607 = vadd.f32 0.0, %v2606
    %v2608 = vpop.f32.mrb[0].mxu0
    %2609 = vmatprep.mubr.f32.mxu0 0.0
    %2610 = vmatmul.mubr.f32.gmra.mrb[0].mxu0 %v2316
    %v2611 = vpop.f32.mrb[0].mxu0
    %v2612 = vadd.f32 0.0, %v2611
    %v2613 = vpop.f32.mrb[0].mxu0
    %2614 = vmatprep.mubr.f32.mxu0 0.0
    %2615 = vmatmul.mubr.f32.gmra.mrb[0].mxu0 %v2319
    %v2616 = vpop.f32.mrb[0].mxu0
    %v2617 = vadd.f32 0.0, %v2616
    %v2618 = vpop.f32.mrb[0].mxu0
    %2619 = vmatprep.mubr.f32.mxu0 0.0
    %2620 = vmatmul.mubr.f32.gmra.mrb[0].mxu0 %v2322
    %v2621 = vpop.f32.mrb[0].mxu0
    %v2622 = vadd.f32 0.0, %v2621
    %v2623 = vpop.f32.mrb[0].mxu0
    %2624 = vmatprep.mubr.f32.mxu0 0.0
    %2625 = vmatmul.mubr.f32.gmra.mrb[0].mxu0 %v2325
    %v2626 = vpop.f32.mrb[0].mxu0
    %v2627 = vadd.f32 0.0, %v2626
    %v2628 = vpop.f32.mrb[0].mxu0
    %2629 = vmatprep.mubr.f32.mxu0 0.0
    %2630 = vmatmul.mubr.f32.gmra.mrb[0].mxu0 %v2328
    %v2631 = vpop.f32.mrb[0].mxu0
    %v2632 = vadd.f32 0.0, %v2631
    %v2633 = vpop.f32.mrb[0].mxu0
    %2634 = vmatprep.mubr.f32.mxu0 0.0
    %2635 = vmatmul.mubr.f32.gmra.mrb[0].mxu0 %v2331
    %v2636 = vpop.f32.mrb[0].mxu0
    %v2637 = vadd.f32 0.0, %v2636
    %v2638 = vpop.f32.mrb[0].mxu0
    %2639 = vmatprep.mubr.f32.mxu0 0.0
    %2640 = vmatmul.mubr.f32.gmra.mrb[0].mxu0 %v2334
    %v2641 = vpop.f32.mrb[0].mxu0
    %v2642 = vadd.f32 0.0, %v2641
    %v2643 = vpop.f32.mrb[0].mxu0
    %2644 = vmatprep.mubr.f32.mxu0 0.0
    %2645 = vmatmul.mubr.f32.gmra.mrb[0].mxu0 %v2337
    %v2646 = vpop.f32.mrb[0].mxu0
    %v2647 = vadd.f32 0.0, %v2646
    %v2648 = vpop.f32.mrb[0].mxu0
    %2649 = vmatprep.mubr.f32.mxu0 0.0
    %2650 = vmatmul.mubr.f32.gmra.mrb[0].mxu0 %v2340
    %v2651 = vpop.f32.mrb[0].mxu0
    %v2652 = vadd.f32 0.0, %v2651
    %v2653 = vpop.f32.mrb[0].mxu0
    %2654 = vmatprep.mubr.f32.mxu0 0.0
    %2655 = vmatmul.mubr.f32.gmra.mrb[0].mxu0 %v2343
    %v2656 = vpop.f32.mrb[0].mxu0
    %v2657 = vadd.f32 0.0, %v2656
    %v2658 = vpop.f32.mrb[0].mxu0
    %2659 = vmatprep.mubr.f32.mxu0 0.0
    %2660 = vmatmul.mubr.f32.gmra.mrb[0].mxu0 %v2346
    %v2661 = vpop.f32.mrb[0].mxu0
    %v2662 = vadd.f32 0.0, %v2661
    %v2663 = vpop.f32.mrb[0].mxu0
    %2664 = vmatprep.mubr.f32.mxu0 0.0
    %2665 = vmatmul.mubr.f32.gmra.mrb[0].mxu0 %v2349
    %v2666 = vpop.f32.mrb[0].mxu0
    %v2667 = vadd.f32 0.0, %v2666
    %v2668 = vpop.f32.mrb[0].mxu0
    %2669 = vmatprep.mubr.f32.mxu0 0.0
    %2670 = vmatmul.mubr.f32.gmra.mrb[0].mxu0 %v2352
    %v2671 = vpop.f32.mrb[0].mxu0
    %v2672 = vadd.f32 0.0, %v2671
    %v2673 = vpop.f32.mrb[0].mxu0
    %2674 = vmatprep.mubr.f32.mxu0 0.0
    %2675 = vmatmul.mubr.f32.gmra.mrb[0].mxu0 %v2355
    %v2676 = vpop.f32.mrb[0].mxu0
    %v2677 = vadd.f32 0.0, %v2676
    %v2678 = vpop.f32.mrb[0].mxu0
    %2679 = vmatprep.mubr.f32.mxu0 0.0
    %2680 = vmatmul.mubr.f32.gmra.mrb[0].mxu0 %v2358
    %v2681 = vpop.f32.mrb[0].mxu0
    %v2682 = vadd.f32 0.0, %v2681
    %v2683 = vpop.f32.mrb[0].mxu0
    %2684 = vmatprep.mubr.f32.mxu0 0.0
    %2685 = vmatmul.mubr.f32.gmra.mrb[0].mxu0 %v2361
    %v2686 = vpop.f32.mrb[0].mxu0
    %v2687 = vadd.f32 0.0, %v2686
    %v2688 = vpop.f32.mrb[0].mxu0
    %2689 = vmatprep.mubr.f32.mxu0 0.0
    %2690 = vmatmul.mubr.f32.gmra.mrb[0].mxu0 %v2364
    %v2691 = vpop.f32.mrb[0].mxu0
    %v2692 = vadd.f32 0.0, %v2691
    %v2693 = vpop.f32.mrb[0].mxu0
    %2694 = vmatprep.mubr.f32.mxu0 0.0
    %2695 = vmatmul.mubr.f32.gmra.mrb[0].mxu0 %v2367
    %v2696 = vpop.f32.mrb[0].mxu0
    %v2697 = vadd.f32 0.0, %v2696
    %v2698 = vpop.f32.mrb[0].mxu0
    %2699 = vmatprep.mubr.f32.mxu0 0.0
    %2700 = vmatmul.mubr.f32.gmra.mrb[0].mxu0 %v2370
    %v2701 = vpop.f32.mrb[0].mxu0
    %v2702 = vadd.f32 0.0, %v2701
    %v2703 = vpop.f32.mrb[0].mxu0
    %2704 = vmatprep.mubr.f32.mxu0 0.0
    %2705 = vmatmul.mubr.f32.gmra.mrb[0].mxu0 %v2373
    %v2706 = vpop.f32.mrb[0].mxu0
    %v2707 = vadd.f32 0.0, %v2706
    %v2708 = vpop.f32.mrb[0].mxu0
    %2709 = vmatprep.mubr.f32.mxu0 0.0
    %2710 = vmatmul.mubr.f32.gmra.mrb[0].mxu0 %v2376
    %v2711 = vpop.f32.mrb[0].mxu0
    %v2712 = vadd.f32 0.0, %v2711
    %v2713 = vpop.f32.mrb[0].mxu0
    %2714 = vmatprep.mubr.f32.mxu0 0.0
    %2715 = vmatmul.mubr.f32.gmra.mrb[0].mxu0 %v2379
    %v2716 = vpop.f32.mrb[0].mxu0
    %v2717 = vadd.f32 0.0, %v2716
    %v2718 = vpop.f32.mrb[0].mxu0
    %2719 = vmatprep.mubr.f32.mxu0 0.0
    %2720 = vmatmul.mubr.f32.gmra.mrb[0].mxu0 %v2382
    %v2721 = vpop.f32.mrb[0].mxu0
    %v2722 = vadd.f32 0.0, %v2721
    %v2723 = vpop.f32.mrb[0].mxu0
    %2724 = vmatprep.mubr.f32.mxu0 0.0
    %2725 = vmatmul.mubr.f32.gmra.mrb[0].mxu0 %v2385
    %v2726 = vpop.f32.mrb[0].mxu0
    %v2727 = vadd.f32 0.0, %v2726
    %v2728 = vpop.f32.mrb[0].mxu0
    %2729 = vmatprep.mubr.f32.mxu0 0.0
    %2730 = vmatmul.mubr.f32.gmra.mrb[0].mxu0 %v2388
    %v2731 = vpop.f32.mrb[0].mxu0
    %v2732 = vadd.f32 0.0, %v2731
    %v2733 = vpop.f32.mrb[0].mxu0
    %2734 = vmatprep.mubr.f32.mxu0 0.0
    %2735 = vmatmul.mubr.f32.gmra.mrb[0].mxu0 %v2391
    %v2736 = vpop.f32.mrb[0].mxu0
    %v2737 = vadd.f32 0.0, %v2736
    %v2738 = vpop.f32.mrb[0].mxu0
    %2739 = vmatprep.mubr.f32.mxu0 0.0
    %2740 = vmatmul.mubr.f32.gmra.mrb[0].mxu0 %v2394
    %v2741 = vpop.f32.mrb[0].mxu0
    %v2742 = vadd.f32 0.0, %v2741
    %v2743 = vpop.f32.mrb[0].mxu0
    %2744 = vmatprep.mubr.f32.mxu0 0.0
    %2745 = vmatmul.mubr.f32.gmra.mrb[0].mxu0 %v2397
    %v2746 = vpop.f32.mrb[0].mxu0
    %v2747 = vadd.f32 0.0, %v2746
    %v2748 = vpop.f32.mrb[0].mxu0
    %2749 = vmatprep.mubr.f32.mxu0 0.0
    %2750 = vmatmul.mubr.f32.gmra.mrb[0].mxu0 %v2400
    %v2751 = vpop.f32.mrb[0].mxu0
    %v2752 = vadd.f32 0.0, %v2751
    %v2753 = vpop.f32.mrb[0].mxu0
    %2754 = vmatprep.mubr.f32.mxu0 0.0
    %2755 = vmatmul.mubr.f32.gmra.mrb[0].mxu0 %v2403
    %v2756 = vpop.f32.mrb[0].mxu0
    %v2757 = vadd.f32 0.0, %v2756
    %v2758 = vpop.f32.mrb[0].mxu0
    %2759 = vmatprep.mubr.f32.mxu0 0.0
    %2760 = vmatmul.mubr.f32.gmra.mrb[0].mxu0 %v2406
    %v2761 = vpop.f32.mrb[0].mxu0
    %v2762 = vadd.f32 0.0, %v2761
    %v2763 = vpop.f32.mrb[0].mxu0
    %2764 = vmatprep.mubr.f32.mxu0 0.0
    %2765 = vmatmul.mubr.f32.gmra.mrb[0].mxu0 %v2409
    %v2766 = vpop.f32.mrb[0].mxu0
    %v2767 = vadd.f32 0.0, %v2766
    %v2768 = vpop.f32.mrb[0].mxu0
    %2769 = vmatprep.mubr.f32.mxu0 0.0
    %2770 = vmatmul.mubr.f32.gmra.mrb[0].mxu0 %v2412
    %v2771 = vpop.f32.mrb[0].mxu0
    %v2772 = vadd.f32 0.0, %v2771
    %v2773 = vpop.f32.mrb[0].mxu0
    %2774 = vmatprep.mubr.f32.mxu0 0.0
    %2775 = vmatmul.mubr.f32.gmra.mrb[0].mxu0 %v2415
    %v2776 = vpop.f32.mrb[0].mxu0
    %v2777 = vadd.f32 0.0, %v2776
    %v2778 = vpop.f32.mrb[0].mxu0
    %2779 = vmatprep.mubr.f32.mxu0 0.0
    %2780 = vmatmul.mubr.f32.gmra.mrb[0].mxu0 %v2418
    %v2781 = vpop.f32.mrb[0].mxu0
    %v2782 = vadd.f32 0.0, %v2781
    %v2783 = vpop.f32.mrb[0].mxu0
    %2784 = vmatprep.mubr.f32.mxu0 0.0
    %2785 = vmatmul.mubr.f32.gmra.mrb[0].mxu0 %v2421
    %v2786 = vpop.f32.mrb[0].mxu0
    %v2787 = vadd.f32 0.0, %v2786
    %v2788 = vpop.f32.mrb[0].mxu0
    %2789 = vmatprep.mubr.f32.mxu0 0.0
    %2790 = vmatmul.mubr.f32.gmra.mrb[0].mxu0 %v2424
    %v2791 = vpop.f32.mrb[0].mxu0
    %v2792 = vadd.f32 0.0, %v2791
    %v2793 = vpop.f32.mrb[0].mxu0
    %2794 = vmatprep.mubr.f32.mxu0 0.0
    %2795 = vmatmul.mubr.f32.gmra.mrb[0].mxu0 %v2427
    %v2796 = vpop.f32.mrb[0].mxu0
    %v2797 = vadd.f32 0.0, %v2796
    %v2798 = vpop.f32.mrb[0].mxu0
    %2799 = vmatprep.mubr.f32.mxu0 0.0
    %2800 = vmatmul.mubr.f32.gmra.mrb[0].mxu0 %v2430
    %v2801 = vpop.f32.mrb[0].mxu0
    %v2802 = vadd.f32 0.0, %v2801
    %v2803 = vpop.f32.mrb[0].mxu0
    %2804 = vmatprep.mubr.f32.mxu0 0.0
    %2805 = vmatmul.mubr.f32.gmra.mrb[0].mxu0 %v2433
    %v2806 = vpop.f32.mrb[0].mxu0
    %v2807 = vadd.f32 0.0, %v2806
    %v2808 = vpop.f32.mrb[0].mxu0
    %2809 = vmatprep.mubr.f32.mxu0 0.0
    %2810 = vmatmul.mubr.f32.gmra.mrb[0].mxu0 %v2436
    %v2811 = vpop.f32.mrb[0].mxu0
    %v2812 = vadd.f32 0.0, %v2811
    %v2813 = vpop.f32.mrb[0].mxu0
    %2814 = vmatprep.mubr.f32.mxu0 0.0
    %2815 = vmatmul.mubr.f32.gmra.mrb[0].mxu0 %v2439
    %v2816 = vpop.f32.mrb[0].mxu0
    %v2817 = vadd.f32 0.0, %v2816
    %v2818 = vpop.f32.mrb[0].mxu0
    %2819 = vmatprep.mubr.f32.mxu0 0.0
    %2820 = vmatmul.mubr.f32.gmra.mrb[0].mxu0 %v2442
    %v2821 = vpop.f32.mrb[0].mxu0
    %v2822 = vadd.f32 0.0, %v2821
    %v2823 = vpop.f32.mrb[0].mxu0
    %2824 = vmatprep.mubr.f32.mxu0 0.0
    %2825 = vmatmul.mubr.f32.gmra.mrb[0].mxu0 %v2445
    %v2826 = vpop.f32.mrb[0].mxu0
    %v2827 = vadd.f32 0.0, %v2826
    %v2828 = vpop.f32.mrb[0].mxu0
    %2829 = vmatprep.mubr.f32.mxu0 0.0
    %2830 = vmatmul.mubr.f32.gmra.mrb[0].mxu0 %v2448
    %v2831 = vpop.f32.mrb[0].mxu0
    %v2832 = vadd.f32 0.0, %v2831
    %v2833 = vpop.f32.mrb[0].mxu0
    %2834 = vdwg.mxu0
    %2835 = vst.msk [vmem:[%s51] sm:$0xff] %vm129, %v2517
    %2836 = vst.msk [vmem:[%s51 + $0x8] sm:$0xff] %vm129, %v2522
    %2837 = vst.msk [vmem:[%s51 + $0x10] sm:$0xff] %vm129, %v2527
    %2838 = vst.msk [vmem:[%s51 + $0x18] sm:$0xff] %vm129, %v2532
    %2839 = vst.msk [vmem:[%s51 + $0x20] sm:$0xff] %vm129, %v2537
    %2840 = vst.msk [vmem:[%s51 + $0x28] sm:$0xff] %vm129, %v2542
    %2841 = vst.msk [vmem:[%s51 + $0x30] sm:$0xff] %vm129, %v2547
    %2842 = vst.msk [vmem:[%s51 + $0x38] sm:$0xff] %vm129, %v2552
    %2843 = vst.msk [vmem:[%s51 + $0x40] sm:$0xff] %vm129, %v2557
    %2844 = vst.msk [vmem:[%s51 + $0x48] sm:$0xff] %vm129, %v2562
    %2845 = vst.msk [vmem:[%s51 + $0x50] sm:$0xff] %vm129, %v2567
    %2846 = vst.msk [vmem:[%s51 + $0x58] sm:$0xff] %vm129, %v2572
    %2847 = vst.msk [vmem:[%s51 + $0x60] sm:$0xff] %vm129, %v2577
    %2848 = vst.msk [vmem:[%s51 + $0x68] sm:$0xff] %vm129, %v2582
    %2849 = vst.msk [vmem:[%s51 + $0x70] sm:$0xff] %vm129, %v2587
    %2850 = vst.msk [vmem:[%s51 + $0x78] sm:$0xff] %vm129, %v2592
    %2851 = vst.msk [vmem:[%s51 + $0x80] sm:$0xff] %vm129, %v2597
    %2852 = vst.msk [vmem:[%s51 + $0x88] sm:$0xff] %vm129, %v2602
    %2853 = vst.msk [vmem:[%s51 + $0x90] sm:$0xff] %vm129, %v2607
    %2854 = vst.msk [vmem:[%s51 + $0x98] sm:$0xff] %vm129, %v2612
    %2855 = vst.msk [vmem:[%s51 + $0xa0] sm:$0xff] %vm129, %v2617
    %2856 = vst.msk [vmem:[%s51 + $0xa8] sm:$0xff] %vm129, %v2622
    %2857 = vst.msk [vmem:[%s51 + $0xb0] sm:$0xff] %vm129, %v2627
    %2858 = vst.msk [vmem:[%s51 + $0xb8] sm:$0xff] %vm129, %v2632
    %2859 = vst.msk [vmem:[%s51 + $0xc0] sm:$0xff] %vm129, %v2637
    %2860 = vst.msk [vmem:[%s51 + $0xc8] sm:$0xff] %vm129, %v2642
    %2861 = vst.msk [vmem:[%s51 + $0xd0] sm:$0xff] %vm129, %v2647
    %2862 = vst.msk [vmem:[%s51 + $0xd8] sm:$0xff] %vm129, %v2652
    %2863 = vst.msk [vmem:[%s51 + $0xe0] sm:$0xff] %vm129, %v2657
    %2864 = vst.msk [vmem:[%s51 + $0xe8] sm:$0xff] %vm129, %v2662
    %2865 = vst.msk [vmem:[%s51 + $0xf0] sm:$0xff] %vm129, %v2667
    %2866 = vst.msk [vmem:[%s51 + $0xf8] sm:$0xff] %vm129, %v2672
    %2867 = vst.msk [vmem:[%s51 + $0x100] sm:$0xff] %vm129, %v2677
    %2868 = vst.msk [vmem:[%s51 + $0x108] sm:$0xff] %vm129, %v2682
    %2869 = vst.msk [vmem:[%s51 + $0x110] sm:$0xff] %vm129, %v2687
    %2870 = vst.msk [vmem:[%s51 + $0x118] sm:$0xff] %vm129, %v2692
    %2871 = vst.msk [vmem:[%s51 + $0x120] sm:$0xff] %vm129, %v2697
    %2872 = vst.msk [vmem:[%s51 + $0x128] sm:$0xff] %vm129, %v2702
    %2873 = vst.msk [vmem:[%s51 + $0x130] sm:$0xff] %vm129, %v2707
    %2874 = vst.msk [vmem:[%s51 + $0x138] sm:$0xff] %vm129, %v2712
    %2875 = vst.msk [vmem:[%s51 + $0x140] sm:$0xff] %vm129, %v2717
    %2876 = vst.msk [vmem:[%s51 + $0x148] sm:$0xff] %vm129, %v2722
    %2877 = vst.msk [vmem:[%s51 + $0x150] sm:$0xff] %vm129, %v2727
    %2878 = vst.msk [vmem:[%s51 + $0x158] sm:$0xff] %vm129, %v2732
    %2879 = vst.msk [vmem:[%s51 + $0x160] sm:$0xff] %vm129, %v2737
    %2880 = vst.msk [vmem:[%s51 + $0x168] sm:$0xff] %vm129, %v2742
    %2881 = vst.msk [vmem:[%s51 + $0x170] sm:$0xff] %vm129, %v2747
    %2882 = vst.msk [vmem:[%s51 + $0x178] sm:$0xff] %vm129, %v2752
    %2883 = vst.msk [vmem:[%s51 + $0x180] sm:$0xff] %vm129, %v2757
    %2884 = vst.msk [vmem:[%s51 + $0x188] sm:$0xff] %vm129, %v2762
    %2885 = vst.msk [vmem:[%s51 + $0x190] sm:$0xff] %vm129, %v2767
    %2886 = vst.msk [vmem:[%s51 + $0x198] sm:$0xff] %vm129, %v2772
    %2887 = vst.msk [vmem:[%s51 + $0x1a0] sm:$0xff] %vm129, %v2777
    %2888 = vst.msk [vmem:[%s51 + $0x1a8] sm:$0xff] %vm129, %v2782
    %2889 = vst.msk [vmem:[%s51 + $0x1b0] sm:$0xff] %vm129, %v2787
    %2890 = vst.msk [vmem:[%s51 + $0x1b8] sm:$0xff] %vm129, %v2792
    %2891 = vst.msk [vmem:[%s51 + $0x1c0] sm:$0xff] %vm129, %v2797
    %2892 = vst.msk [vmem:[%s51 + $0x1c8] sm:$0xff] %vm129, %v2802
    %2893 = vst.msk [vmem:[%s51 + $0x1d0] sm:$0xff] %vm129, %v2807
    %2894 = vst.msk [vmem:[%s51 + $0x1d8] sm:$0xff] %vm129, %v2812
    %2895 = vst.msk [vmem:[%s51 + $0x1e0] sm:$0xff] %vm129, %v2817
    %2896 = vst.msk [vmem:[%s51 + $0x1e8] sm:$0xff] %vm129, %v2822
    %2897 = vst.msk [vmem:[%s51 + $0x1f0] sm:$0xff] %vm129, %v2827
    %2898 = vst.msk [vmem:[%s51 + $0x1f8] sm:$0xff] %vm129, %v2832
    %v2899 = vld [vmem:[%s4] sm:$0x1]
    %2900 = vmatprep.subr.mxu0 0.0
    %2901 = vmatpush1.msra.mxu0 %v2194
    %2902 = vmatprep.subr.mxu0 0.0
    %2903 = vmatpush1.msra.mxu0 %v2195
    %2904 = vmatprep.subr.mxu0 0.0
    %2905 = vmatpush1.msra.mxu0 %v2196
    %2906 = vmatprep.subr.mxu0 0.0
    %2907 = vmatpush1.msra.mxu0 %v2197
    %2908 = vmatprep.subr.mxu0 0.0
    %2909 = vmatpush1.msra.mxu0 %v2198
    %2910 = vmatprep.subr.mxu0 0.0
    %2911 = vmatpush1.msra.mxu0 %v2199
    %2912 = vmatprep.subr.mxu0 0.0
    %2913 = vmatpush1.msra.mxu0 %v2200
    %2914 = vmatprep.subr.mxu0 0.0
    %2915 = vmatpush1.msra.mxu0 %v2201
    %2916 = vmatprep.subr.mxu0 0.0
    %2917 = vmatpush1.msra.mxu0 %v2202
    %2918 = vmatprep.subr.mxu0 0.0
    %2919 = vmatpush1.msra.mxu0 %v2203
    %2920 = vmatprep.subr.mxu0 0.0
    %2921 = vmatpush1.msra.mxu0 %v2204
    %2922 = vmatprep.subr.mxu0 0.0
    %2923 = vmatpush1.msra.mxu0 %v2205
    %2924 = vmatprep.subr.mxu0 0.0
    %2925 = vmatpush1.msra.mxu0 %v2206
    %2926 = vmatprep.subr.mxu0 0.0
    %2927 = vmatpush1.msra.mxu0 %v2207
    %2928 = vmatprep.subr.mxu0 0.0
    %2929 = vmatpush1.msra.mxu0 %v2208
    %2930 = vmatprep.subr.mxu0 0.0
    %2931 = vmatpush1.msra.mxu0 %v2209
    %2932 = vmatprep.subr.mxu0 0.0
    %2933 = vmatpush1.msra.mxu0 %v2210
    %2934 = vmatprep.subr.mxu0 0.0
    %2935 = vmatpush1.msra.mxu0 %v2211
    %2936 = vmatprep.subr.mxu0 0.0
    %2937 = vmatpush1.msra.mxu0 %v2212
    %2938 = vmatprep.subr.mxu0 0.0
    %2939 = vmatpush1.msra.mxu0 %v2213
    %2940 = vmatprep.subr.mxu0 0.0
    %2941 = vmatpush1.msra.mxu0 %v2214
    %2942 = vmatprep.subr.mxu0 0.0
    %2943 = vmatpush1.msra.mxu0 %v2215
    %2944 = vmatprep.subr.mxu0 0.0
    %2945 = vmatpush1.msra.mxu0 %v2216
    %2946 = vmatprep.subr.mxu0 0.0
    %2947 = vmatpush1.msra.mxu0 %v2217
    %2948 = vmatprep.subr.mxu0 0.0
    %2949 = vmatpush1.msra.mxu0 %v2218
    %2950 = vmatprep.subr.mxu0 0.0
    %2951 = vmatpush1.msra.mxu0 %v2219
    %2952 = vmatprep.subr.mxu0 0.0
    %2953 = vmatpush1.msra.mxu0 %v2220
    %2954 = vmatprep.subr.mxu0 0.0
    %2955 = vmatpush1.msra.mxu0 %v2221
    %2956 = vmatprep.subr.mxu0 0.0
    %2957 = vmatpush1.msra.mxu0 %v2222
    %2958 = vmatprep.subr.mxu0 0.0
    %2959 = vmatpush1.msra.mxu0 %v2223
    %2960 = vmatprep.subr.mxu0 0.0
    %2961 = vmatpush1.msra.mxu0 %v2224
    %2962 = vmatprep.subr.mxu0 0.0
    %2963 = vmatpush1.msra.mxu0 %v2225
    %2964 = vmatprep.mubr.f32.mxu0 1.0
    %2965 = vmatmul.mubr.f32.gmra.mrb[0].mxu0 1.0
    %v2966 = vpop.f32.mrb[0].mxu0
    %v2967 = vadd.f32 0.0, %v2966
    %v2968 = vpop.f32.mrb[0].mxu0
    %2969 = vdwg.mxu0
    %2970 = vmatprep.subr.mxu0 0.0
    %2971 = vmatpush1.msra.mxu0 %v2226
    %2972 = vmatprep.subr.mxu0 0.0
    %2973 = vmatpush1.msra.mxu0 %v2227
    %2974 = vmatprep.subr.mxu0 0.0
    %2975 = vmatpush1.msra.mxu0 %v2228
    %2976 = vmatprep.subr.mxu0 0.0
    %2977 = vmatpush1.msra.mxu0 %v2229
    %2978 = vmatprep.subr.mxu0 0.0
    %2979 = vmatpush1.msra.mxu0 %v2230
    %2980 = vmatprep.subr.mxu0 0.0
    %2981 = vmatpush1.msra.mxu0 %v2231
    %2982 = vmatprep.subr.mxu0 0.0
    %2983 = vmatpush1.msra.mxu0 %v2232
    %2984 = vmatprep.subr.mxu0 0.0
    %2985 = vmatpush1.msra.mxu0 %v2233
    %2986 = vmatprep.subr.mxu0 0.0
    %2987 = vmatpush1.msra.mxu0 %v2234
    %2988 = vmatprep.subr.mxu0 0.0
    %2989 = vmatpush1.msra.mxu0 %v2235
    %2990 = vmatprep.subr.mxu0 0.0
    %2991 = vmatpush1.msra.mxu0 %v2236
    %2992 = vmatprep.subr.mxu0 0.0
    %2993 = vmatpush1.msra.mxu0 %v2237
    %2994 = vmatprep.subr.mxu0 0.0
    %2995 = vmatpush1.msra.mxu0 %v2238
    %2996 = vmatprep.subr.mxu0 0.0
    %2997 = vmatpush1.msra.mxu0 %v2239
    %2998 = vmatprep.subr.mxu0 0.0
    %2999 = vmatpush1.msra.mxu0 %v2240
    %3000 = vmatprep.subr.mxu0 0.0
    %3001 = vmatpush1.msra.mxu0 %v2241
    %3002 = vmatprep.subr.mxu0 0.0
    %3003 = vmatpush1.msra.mxu0 %v2242
    %3004 = vmatprep.subr.mxu0 0.0
    %3005 = vmatpush1.msra.mxu0 %v2243
    %3006 = vmatprep.subr.mxu0 0.0
    %3007 = vmatpush1.msra.mxu0 %v2244
    %3008 = vmatprep.subr.mxu0 0.0
    %3009 = vmatpush1.msra.mxu0 %v2245
    %3010 = vmatprep.subr.mxu0 0.0
    %3011 = vmatpush1.msra.mxu0 %v2246
    %3012 = vmatprep.subr.mxu0 0.0
    %3013 = vmatpush1.msra.mxu0 %v2247
    %3014 = vmatprep.subr.mxu0 0.0
    %3015 = vmatpush1.msra.mxu0 %v2248
    %3016 = vmatprep.subr.mxu0 0.0
    %3017 = vmatpush1.msra.mxu0 %v2249
    %3018 = vmatprep.subr.mxu0 0.0
    %3019 = vmatpush1.msra.mxu0 %v2250
    %3020 = vmatprep.subr.mxu0 0.0
    %3021 = vmatpush1.msra.mxu0 %v2251
    %3022 = vmatprep.subr.mxu0 0.0
    %3023 = vmatpush1.msra.mxu0 %v2252
    %3024 = vmatprep.subr.mxu0 0.0
    %3025 = vmatpush1.msra.mxu0 %v2253
    %3026 = vmatprep.subr.mxu0 0.0
    %3027 = vmatpush1.msra.mxu0 %v2254
    %3028 = vmatprep.subr.mxu0 0.0
    %3029 = vmatpush1.msra.mxu0 %v2255
    %3030 = vmatprep.subr.mxu0 0.0
    %3031 = vmatpush1.msra.mxu0 %v2256
    %3032 = vmatprep.subr.mxu0 0.0
    %3033 = vmatpush1.msra.mxu0 %v2257
    %3034 = vmatprep.mubr.f32.mxu0 1.0
    %3035 = vmatmul.mubr.f32.gmra.mrb[0].mxu0 1.0
    %v3036 = vpop.f32.mrb[0].mxu0
    %v3037 = vadd.f32 %v2967, %v3036
    %v3038 = vpop.f32.mrb[0].mxu0
    %3039 = vdwg.mxu0
    %v3040 = vadd.f32 %v2899, %v3037
    %vm3041 = vcmask 122880
    %3042 = vst.msk [vmem:[%s4] sm:$0x1] %vm3041, %v3040
    %v3043 = vld [vmem:[#allocation2] sm:$0x1]
    %v3044 = vmul.f32 %v62, %v62
    %v3045 = vmul.f32 %v63, %v63
    %v3046 = vmul.f32 %v64, %v64
    %v3047 = vmul.f32 %v65, %v65
    %v3048 = vmul.f32 %v66, %v66
    %v3049 = vmul.f32 %v67, %v67
    %v3050 = vmul.f32 %v68, %v68
    %v3051 = vmul.f32 %v69, %v69
    %v3052 = vmul.f32 %v70, %v70
    %v3053 = vmul.f32 %v71, %v71
    %v3054 = vmul.f32 %v72, %v72
    %v3055 = vmul.f32 %v73, %v73
    %v3056 = vmul.f32 %v74, %v74
    %v3057 = vmul.f32 %v75, %v75
    %v3058 = vmul.f32 %v76, %v76
    %v3059 = vmul.f32 %v77, %v77
    %v3060 = vmul.f32 %v78, %v78
    %v3061 = vmul.f32 %v79, %v79
    %v3062 = vmul.f32 %v80, %v80
    %v3063 = vmul.f32 %v81, %v81
    %v3064 = vmul.f32 %v82, %v82
    %v3065 = vmul.f32 %v83, %v83
    %v3066 = vmul.f32 %v84, %v84
    %v3067 = vmul.f32 %v85, %v85
    %v3068 = vmul.f32 %v86, %v86
    %v3069 = vmul.f32 %v87, %v87
    %v3070 = vmul.f32 %v88, %v88
    %v3071 = vmul.f32 %v89, %v89
    %v3072 = vmul.f32 %v90, %v90
    %v3073 = vmul.f32 %v91, %v91
    %v3074 = vmul.f32 %v92, %v92
    %v3075 = vmul.f32 %v93, %v93
    %v3076 = vmul.f32 %v94, %v94
    %v3077 = vmul.f32 %v95, %v95
    %v3078 = vmul.f32 %v96, %v96
    %v3079 = vmul.f32 %v97, %v97
    %v3080 = vmul.f32 %v98, %v98
    %v3081 = vmul.f32 %v99, %v99
    %v3082 = vmul.f32 %v100, %v100
    %v3083 = vmul.f32 %v101, %v101
    %v3084 = vmul.f32 %v102, %v102
    %v3085 = vmul.f32 %v103, %v103
    %v3086 = vmul.f32 %v104, %v104
    %v3087 = vmul.f32 %v105, %v105
    %v3088 = vmul.f32 %v106, %v106
    %v3089 = vmul.f32 %v107, %v107
    %v3090 = vmul.f32 %v108, %v108
    %v3091 = vmul.f32 %v109, %v109
    %v3092 = vmul.f32 %v110, %v110
    %v3093 = vmul.f32 %v111, %v111
    %v3094 = vmul.f32 %v112, %v112
    %v3095 = vmul.f32 %v113, %v113
    %v3096 = vmul.f32 %v114, %v114
    %v3097 = vmul.f32 %v115, %v115
    %v3098 = vmul.f32 %v116, %v116
    %v3099 = vmul.f32 %v117, %v117
    %v3100 = vmul.f32 %v118, %v118
    %v3101 = vmul.f32 %v119, %v119
    %v3102 = vmul.f32 %v120, %v120
    %v3103 = vmul.f32 %v121, %v121
    %v3104 = vmul.f32 %v122, %v122
    %v3105 = vmul.f32 %v123, %v123
    %v3106 = vmul.f32 %v124, %v124
    %v3107 = vmul.f32 %v125, %v125
    %v3108 = vsel %vm129, %v3044, 0.0
    %v3109 = vsel %vm129, %v3045, 0.0
    %v3110 = vadd.f32 %v3108, %v3109
    %v3111 = vsel %vm129, %v3046, 0.0
    %v3112 = vadd.f32 %v3110, %v3111
    %v3113 = vsel %vm129, %v3047, 0.0
    %v3114 = vadd.f32 %v3112, %v3113
    %v3115 = vsel %vm129, %v3048, 0.0
    %v3116 = vadd.f32 %v3114, %v3115
    %v3117 = vsel %vm129, %v3049, 0.0
    %v3118 = vadd.f32 %v3116, %v3117
    %v3119 = vsel %vm129, %v3050, 0.0
    %v3120 = vadd.f32 %v3118, %v3119
    %v3121 = vsel %vm129, %v3051, 0.0
    %v3122 = vadd.f32 %v3120, %v3121
    %v3123 = vsel %vm129, %v3052, 0.0
    %v3124 = vadd.f32 %v3122, %v3123
    %v3125 = vsel %vm129, %v3053, 0.0
    %v3126 = vadd.f32 %v3124, %v3125
    %v3127 = vsel %vm129, %v3054, 0.0
    %v3128 = vadd.f32 %v3126, %v3127
    %v3129 = vsel %vm129, %v3055, 0.0
    %v3130 = vadd.f32 %v3128, %v3129
    %v3131 = vsel %vm129, %v3056, 0.0
    %v3132 = vadd.f32 %v3130, %v3131
    %v3133 = vsel %vm129, %v3057, 0.0
    %v3134 = vadd.f32 %v3132, %v3133
    %v3135 = vsel %vm129, %v3058, 0.0
    %v3136 = vadd.f32 %v3134, %v3135
    %v3137 = vsel %vm129, %v3059, 0.0
    %v3138 = vadd.f32 %v3136, %v3137
    %v3139 = vsel %vm129, %v3060, 0.0
    %v3140 = vadd.f32 %v3138, %v3139
    %v3141 = vsel %vm129, %v3061, 0.0
    %v3142 = vadd.f32 %v3140, %v3141
    %v3143 = vsel %vm129, %v3062, 0.0
    %v3144 = vadd.f32 %v3142, %v3143
    %v3145 = vsel %vm129, %v3063, 0.0
    %v3146 = vadd.f32 %v3144, %v3145
    %v3147 = vsel %vm129, %v3064, 0.0
    %v3148 = vadd.f32 %v3146, %v3147
    %v3149 = vsel %vm129, %v3065, 0.0
    %v3150 = vadd.f32 %v3148, %v3149
    %v3151 = vsel %vm129, %v3066, 0.0
    %v3152 = vadd.f32 %v3150, %v3151
    %v3153 = vsel %vm129, %v3067, 0.0
    %v3154 = vadd.f32 %v3152, %v3153
    %v3155 = vsel %vm129, %v3068, 0.0
    %v3156 = vadd.f32 %v3154, %v3155
    %v3157 = vsel %vm129, %v3069, 0.0
    %v3158 = vadd.f32 %v3156, %v3157
    %v3159 = vsel %vm129, %v3070, 0.0
    %v3160 = vadd.f32 %v3158, %v3159
    %v3161 = vsel %vm129, %v3071, 0.0
    %v3162 = vadd.f32 %v3160, %v3161
    %v3163 = vsel %vm129, %v3072, 0.0
    %v3164 = vadd.f32 %v3162, %v3163
    %v3165 = vsel %vm129, %v3073, 0.0
    %v3166 = vadd.f32 %v3164, %v3165
    %v3167 = vsel %vm129, %v3074, 0.0
    %v3168 = vadd.f32 %v3166, %v3167
    %v3169 = vsel %vm129, %v3075, 0.0
    %v3170 = vadd.f32 %v3168, %v3169
    %v3171 = vsel %vm129, %v3076, 0.0
    %v3172 = vadd.f32 %v3170, %v3171
    %v3173 = vsel %vm129, %v3077, 0.0
    %v3174 = vadd.f32 %v3172, %v3173
    %v3175 = vsel %vm129, %v3078, 0.0
    %v3176 = vadd.f32 %v3174, %v3175
    %v3177 = vsel %vm129, %v3079, 0.0
    %v3178 = vadd.f32 %v3176, %v3177
    %v3179 = vsel %vm129, %v3080, 0.0
    %v3180 = vadd.f32 %v3178, %v3179
    %v3181 = vsel %vm129, %v3081, 0.0
    %v3182 = vadd.f32 %v3180, %v3181
    %v3183 = vsel %vm129, %v3082, 0.0
    %v3184 = vadd.f32 %v3182, %v3183
    %v3185 = vsel %vm129, %v3083, 0.0
    %v3186 = vadd.f32 %v3184, %v3185
    %v3187 = vsel %vm129, %v3084, 0.0
    %v3188 = vadd.f32 %v3186, %v3187
    %v3189 = vsel %vm129, %v3085, 0.0
    %v3190 = vadd.f32 %v3188, %v3189
    %v3191 = vsel %vm129, %v3086, 0.0
    %v3192 = vadd.f32 %v3190, %v3191
    %v3193 = vsel %vm129, %v3087, 0.0
    %v3194 = vadd.f32 %v3192, %v3193
    %v3195 = vsel %vm129, %v3088, 0.0
    %v3196 = vadd.f32 %v3194, %v3195
    %v3197 = vsel %vm129, %v3089, 0.0
    %v3198 = vadd.f32 %v3196, %v3197
    %v3199 = vsel %vm129, %v3090, 0.0
    %v3200 = vadd.f32 %v3198, %v3199
    %v3201 = vsel %vm129, %v3091, 0.0
    %v3202 = vadd.f32 %v3200, %v3201
    %v3203 = vsel %vm129, %v3092, 0.0
    %v3204 = vadd.f32 %v3202, %v3203
    %v3205 = vsel %vm129, %v3093, 0.0
    %v3206 = vadd.f32 %v3204, %v3205
    %v3207 = vsel %vm129, %v3094, 0.0
    %v3208 = vadd.f32 %v3206, %v3207
    %v3209 = vsel %vm129, %v3095, 0.0
    %v3210 = vadd.f32 %v3208, %v3209
    %v3211 = vsel %vm129, %v3096, 0.0
    %v3212 = vadd.f32 %v3210, %v3211
    %v3213 = vsel %vm129, %v3097, 0.0
    %v3214 = vadd.f32 %v3212, %v3213
    %v3215 = vsel %vm129, %v3098, 0.0
    %v3216 = vadd.f32 %v3214, %v3215
    %v3217 = vsel %vm129, %v3099, 0.0
    %v3218 = vadd.f32 %v3216, %v3217
    %v3219 = vsel %vm129, %v3100, 0.0
    %v3220 = vadd.f32 %v3218, %v3219
    %v3221 = vsel %vm129, %v3101, 0.0
    %v3222 = vadd.f32 %v3220, %v3221
    %v3223 = vsel %vm129, %v3102, 0.0
    %v3224 = vadd.f32 %v3222, %v3223
    %v3225 = vsel %vm129, %v3103, 0.0
    %v3226 = vadd.f32 %v3224, %v3225
    %v3227 = vsel %vm129, %v3104, 0.0
    %v3228 = vadd.f32 %v3226, %v3227
    %v3229 = vsel %vm129, %v3105, 0.0
    %v3230 = vadd.f32 %v3228, %v3229
    %v3231 = vsel %vm129, %v3106, 0.0
    %v3232 = vadd.f32 %v3230, %v3231
    %v3233 = vsel %vm129, %v3107, 0.0
    %v3234 = vadd.f32 %v3232, %v3233
    %3235 = vadd.xlane.f32.xlu0 %v3234
    %v3236 = vpop.xlane.xlu0 %3235
    %v3237 = vrot.slane %v3236, 4
    %v3238 = vadd.f32 %v3236, %v3237
    %v3239 = vrot.slane %v3238, 2
    %v3240 = vadd.f32 %v3238, %v3239
    %v3241 = vrot.slane %v3240, 1
    %v3242 = vadd.f32 %v3240, %v3241
    %s3243 = vtos %v3242
    %vm3244 = vcmask 7168
    %v3245 = vsel %vm3244, %v786, 0.0
    %v3246 = vsel %vm3244, %v789, 0.0
    %v3247 = vadd.f32 %v3245, %v3246
    %v3248 = vsel %vm3244, %v792, 0.0
    %v3249 = vadd.f32 %v3247, %v3248
    %v3250 = vsel %vm3244, %v795, 0.0
    %v3251 = vadd.f32 %v3249, %v3250
    %v3252 = vsel %vm3244, %v798, 0.0
    %v3253 = vadd.f32 %v3251, %v3252
    %v3254 = vsel %vm3244, %v801, 0.0
    %v3255 = vadd.f32 %v3253, %v3254
    %v3256 = vsel %vm3244, %v804, 0.0
    %v3257 = vadd.f32 %v3255, %v3256
    %v3258 = vsel %vm3244, %v807, 0.0
    %v3259 = vadd.f32 %v3257, %v3258
    %v3260 = vsel %vm3244, %v810, 0.0
    %v3261 = vadd.f32 %v3259, %v3260
    %v3262 = vsel %vm3244, %v813, 0.0
    %v3263 = vadd.f32 %v3261, %v3262
    %v3264 = vsel %vm3244, %v816, 0.0
    %v3265 = vadd.f32 %v3263, %v3264
    %v3266 = vsel %vm3244, %v819, 0.0
    %v3267 = vadd.f32 %v3265, %v3266
    %v3268 = vsel %vm3244, %v822, 0.0
    %v3269 = vadd.f32 %v3267, %v3268
    %v3270 = vsel %vm3244, %v825, 0.0
    %v3271 = vadd.f32 %v3269, %v3270
    %v3272 = vsel %vm3244, %v828, 0.0
    %v3273 = vadd.f32 %v3271, %v3272
    %v3274 = vsel %vm3244, %v831, 0.0
    %v3275 = vadd.f32 %v3273, %v3274
    %v3276 = vsel %vm3244, %v834, 0.0
    %v3277 = vadd.f32 %v3275, %v3276
    %v3278 = vsel %vm3244, %v837, 0.0
    %v3279 = vadd.f32 %v3277, %v3278
    %v3280 = vsel %vm3244, %v840, 0.0
    %v3281 = vadd.f32 %v3279, %v3280
    %v3282 = vsel %vm3244, %v843, 0.0
    %v3283 = vadd.f32 %v3281, %v3282
    %v3284 = vsel %vm3244, %v846, 0.0
    %v3285 = vadd.f32 %v3283, %v3284
    %v3286 = vsel %vm3244, %v849, 0.0
    %v3287 = vadd.f32 %v3285, %v3286
    %v3288 = vsel %vm3244, %v852, 0.0
    %v3289 = vadd.f32 %v3287, %v3288
    %v3290 = vsel %vm3244, %v855, 0.0
    %v3291 = vadd.f32 %v3289, %v3290
    %v3292 = vsel %vm3244, %v858, 0.0
    %v3293 = vadd.f32 %v3291, %v3292
    %v3294 = vsel %vm3244, %v861, 0.0
    %v3295 = vadd.f32 %v3293, %v3294
    %v3296 = vsel %vm3244, %v864, 0.0
    %v3297 = vadd.f32 %v3295, %v3296
    %v3298 = vsel %vm3244, %v867, 0.0
    %v3299 = vadd.f32 %v3297, %v3298
    %v3300 = vsel %vm3244, %v870, 0.0
    %v3301 = vadd.f32 %v3299, %v3300
    %v3302 = vsel %vm3244, %v873, 0.0
    %v3303 = vadd.f32 %v3301, %v3302
    %v3304 = vsel %vm3244, %v876, 0.0
    %v3305 = vadd.f32 %v3303, %v3304
    %v3306 = vsel %vm3244, %v879, 0.0
    %v3307 = vadd.f32 %v3305, %v3306
    %v3308 = vsel %vm3244, %v882, 0.0
    %v3309 = vadd.f32 %v3307, %v3308
    %v3310 = vsel %vm3244, %v885, 0.0
    %v3311 = vadd.f32 %v3309, %v3310
    %v3312 = vsel %vm3244, %v888, 0.0
    %v3313 = vadd.f32 %v3311, %v3312
    %v3314 = vsel %vm3244, %v891, 0.0
    %v3315 = vadd.f32 %v3313, %v3314
    %v3316 = vsel %vm3244, %v894, 0.0
    %v3317 = vadd.f32 %v3315, %v3316
    %v3318 = vsel %vm3244, %v897, 0.0
    %v3319 = vadd.f32 %v3317, %v3318
    %v3320 = vsel %vm3244, %v900, 0.0
    %v3321 = vadd.f32 %v3319, %v3320
    %v3322 = vsel %vm3244, %v903, 0.0
    %v3323 = vadd.f32 %v3321, %v3322
    %v3324 = vsel %vm3244, %v906, 0.0
    %v3325 = vadd.f32 %v3323, %v3324
    %v3326 = vsel %vm3244, %v909, 0.0
    %v3327 = vadd.f32 %v3325, %v3326
    %v3328 = vsel %vm3244, %v912, 0.0
    %v3329 = vadd.f32 %v3327, %v3328
    %v3330 = vsel %vm3244, %v915, 0.0
    %v3331 = vadd.f32 %v3329, %v3330
    %v3332 = vsel %vm3244, %v918, 0.0
    %v3333 = vadd.f32 %v3331, %v3332
    %v3334 = vsel %vm3244, %v921, 0.0
    %v3335 = vadd.f32 %v3333, %v3334
    %v3336 = vsel %vm3244, %v924, 0.0
    %v3337 = vadd.f32 %v3335, %v3336
    %v3338 = vsel %vm3244, %v927, 0.0
    %v3339 = vadd.f32 %v3337, %v3338
    %v3340 = vsel %vm3244, %v930, 0.0
    %v3341 = vadd.f32 %v3339, %v3340
    %v3342 = vsel %vm3244, %v933, 0.0
    %v3343 = vadd.f32 %v3341, %v3342
    %v3344 = vsel %vm3244, %v936, 0.0
    %v3345 = vadd.f32 %v3343, %v3344
    %v3346 = vsel %vm3244, %v939, 0.0
    %v3347 = vadd.f32 %v3345, %v3346
    %v3348 = vsel %vm3244, %v942, 0.0
    %v3349 = vadd.f32 %v3347, %v3348
    %v3350 = vsel %vm3244, %v945, 0.0
    %v3351 = vadd.f32 %v3349, %v3350
    %v3352 = vsel %vm3244, %v948, 0.0
    %v3353 = vadd.f32 %v3351, %v3352
    %v3354 = vsel %vm3244, %v951, 0.0
    %v3355 = vadd.f32 %v3353, %v3354
    %v3356 = vsel %vm3244, %v954, 0.0
    %v3357 = vadd.f32 %v3355, %v3356
    %v3358 = vsel %vm3244, %v957, 0.0
    %v3359 = vadd.f32 %v3357, %v3358
    %v3360 = vsel %vm3244, %v960, 0.0
    %v3361 = vadd.f32 %v3359, %v3360
    %v3362 = vsel %vm3244, %v963, 0.0
    %v3363 = vadd.f32 %v3361, %v3362
    %v3364 = vsel %vm3244, %v966, 0.0
    %v3365 = vadd.f32 %v3363, %v3364
    %v3366 = vsel %vm3244, %v969, 0.0
    %v3367 = vadd.f32 %v3365, %v3366
    %v3368 = vsel %vm3244, %v972, 0.0
    %v3369 = vadd.f32 %v3367, %v3368
    %v3370 = vsel %vm3244, %v975, 0.0
    %v3371 = vadd.f32 %v3369, %v3370
    %3372 = vadd.xlane.f32.xlu0 %v3371
    %v3373 = vpop.xlane.xlu0 %3372
    %v3374 = vrot.slane %v3373, 4
    %v3375 = vadd.f32 %v3373, %v3374
    %v3376 = vrot.slane %v3375, 2
    %v3377 = vadd.f32 %v3375, %v3376
    %v3378 = vrot.slane %v3377, 1
    %v3379 = vadd.f32 %v3377, %v3378
    %s3380 = vtos %v3379
    %s3381 = smul.f32 %s3380, 2.0
    %s3382 = sadd.f32 %s3243, %s3381
    %v3383 = vstv %s3382
    %v3384 = vadd.f32 %v3043, %v3383
    %vm3385 = vcmask 0
    %3386 = vst.msk [vmem:[#allocation2] sm:$0x1] %vm3385, %v3384
    %s3387 = sadd.s32 0, 0
    %s3388 = smul.u32 64, %s3387
    %p3389 = scmp.lt.s32.totalorder %s3388, 63
    %s3390 = scalar_select %p3389, %s3388, 63
    %s3391 = smul.addr %s3390, 8
    %s3392 = scalar_lea.vmem %s3, %s3391
    // Predicated region
    $region18: #{vector_quantizer_forward.1} parent=1 // pred_check
      _
    $region19: #{vector_quantizer_forward.1} parent=1 // pred_check_branch
      %3394 = sbr.rel (0) target = $region21
    $region20: #{vector_quantizer_forward.1} parent=1 // pred_region
      %s3395 = sadd.s32 0, 0
      %s3396 = smul.u32 64, %s3395
    $region21: #{vector_quantizer_forward.1} parent=1 // pred_fallthru
      _
    // Predicated region
    $region22: #{vector_quantizer_forward.1} parent=1 // pred_check
      _
    $region23: #{vector_quantizer_forward.1} parent=1 // pred_check_branch
      %3398 = sbr.rel (0) target = $region25
    $region24: #{vector_quantizer_forward.1} parent=1 // pred_region
      _
    $region25: #{vector_quantizer_forward.1} parent=1 // pred_fallthru
      _
    // Predicated region
    $region26: #{vector_quantizer_forward.1} parent=1 // pred_check
      _
    $region27: #{vector_quantizer_forward.1} parent=1 // pred_check_branch
      %3400 = sbr.rel (0) target = $region29
    $region28: #{vector_quantizer_forward.1} parent=1 // pred_region
      %s3402 = ssub.s32 16, 16
      %3403 = vsyncadd [#allocation3], %s3402
      %s3405 = sshll.u32 [#allocation2], 4
      %s3406 = int_to_ptr.vmem [resolvable:$true] %s3405
      %3408 = dma.vmem_to_hbm [thread:$0]  %s3406, 16, %s5, [#allocation3]
    $region29: #{vector_quantizer_forward.1} parent=1 // pred_fallthru
      _
    // Predicated region
    $region30: #{vector_quantizer_forward.1} parent=1 // pred_check
      _
    $region31: #{vector_quantizer_forward.1} parent=1 // pred_check_branch
      %3410 = sbr.rel (0) target = $region33
    $region32: #{vector_quantizer_forward.1} parent=1 // pred_region
      %s3411 = sadd.s32 0, 0
      %s3412 = smul.u32 64, %s3411
      %p3413 = scmp.lt.s32.totalorder %s3412, 63
      %s3414 = scalar_select %p3413, %s3412, 63
      %s3415 = smul.addr %s3414, 8
      %s3416 = scalar_lea.vmem %s3, %s3415
    $region33: #{vector_quantizer_forward.1} parent=1 // pred_fallthru
      _
    // Predicated region
    $region34: #{vector_quantizer_forward.1} parent=1 // pred_check
      _
    $region35: #{vector_quantizer_forward.1} parent=1 // pred_check_branch
      %3418 = sbr.rel (0) target = $region37
    $region36: #{vector_quantizer_forward.1} parent=1 // pred_region
      _
    $region37: #{vector_quantizer_forward.1} parent=1 // pred_fallthru
      _
    // Predicated region
    $region38: #{vector_quantizer_forward.1} parent=1 // pred_check
      _
    $region39: #{vector_quantizer_forward.1} parent=1 // pred_check_branch
      %3420 = sbr.rel (0) target = $region41
    $region40: #{vector_quantizer_forward.1} parent=1 // pred_region
      %3421 = dma.done [#allocation3], 16
    $region41: #{vector_quantizer_forward.1} parent=1 // pred_fallthru
      _
    %3422 = vsyncpa [#allocation3], 1

</llo_original>
